<compile_context>
chip_gen: v6e
topology: v6e:2x2x1
jax: 0.10.0
libtpu: 0.0.40
codegen_flags: <defaults>
</compile_context>

<pallas_src>
import jax
import jax.numpy as jnp
from jax.experimental import pallas as pl
from jax.experimental.pallas import tpu as pltpu


def _round_up(x, m):
    return ((x + m - 1) // m) * m


# ----------------------------------------------------------------------------
# Fused DAG kernel (built per static graph structure)
# ----------------------------------------------------------------------------
def _make_dag_kernel(node_ids, preds, edge_off, sinks, in_idx, mid_idx,
                     Pp, K_in_pad, Ho, Wo, bb):
    """Kernel refs:
      ew_ref   : (n_edges,)                 SMEM  sigmoid edge weights
      xin_ref  : (bb, Ho*Wo, K_in_pad) bf16 VMEM  shared input patch matrix
      bias_ref : (num_nodes, 1, Pp)    f32  VMEM  folded-BN shift per node
      w_in_ref : (n_in, K_in_pad, Pp) bf16  VMEM  input-node weights
      w_mid_ref: (n_mid, 9, Pp, Pp)  bf16   VMEM  internal-node per-tap weights
      o_ref    : (bb, Ho, Wo, Pp)      f32        mean over sink nodes
      pad_ref  : (bb, Ho+2, Wo+2, Pp)  f32  VMEM  persistent padded scratch
    """
    sink_set = set(sinks)
    inv_sinks = 1.0 / float(len(sinks))
    M = bb * Ho * Wo

    # last topological position at which each node's activation is consumed
    last_use = {}
    for i, m in enumerate(node_ids):
        for p in preds[m]:
            last_use[p] = max(last_use.get(p, -1), i)

    taps9 = [(dy, dx) for dy in range(3) for dx in range(3)]

    def kernel(ew_ref, xin_ref, bias_ref, w_in_ref, w_mid_ref, o_ref, pad_ref):
        # Zero the halo scratch once per grid step; only the interior is
        # rewritten per node, so the 1-px border stays zero (conv padding=1).
        pad_ref[...] = jnp.zeros_like(pad_ref)
        # Sink mean is accumulated directly into the output block.
        o_ref[...] = jnp.zeros_like(o_ref)

        # Shared lane-dense bf16 patch matrix for every in_degree==0 node
        # (ReLU + im2col + stride handling already done once in XLA).
        in_pm = xin_ref[...].reshape(M, K_in_pad)

        acts = {}
        for i, n in enumerate(node_ids):
            ps = preds[n]
            if len(ps) == 0:
                # Input node: one lane-dense K=K_in_pad matmul on the MXU.
                acc = jnp.dot(in_pm, w_in_ref[in_idx[n]],
                              preferred_element_type=jnp.float32)
            else:
                # Weighted fan-in aggregation (f32 on the VPU) + ReLU.
                off = edge_off[n]
                agg = ew_ref[off] * acts[ps[0]]
                for f in range(1, len(ps)):
                    agg = agg + ew_ref[off + f] * acts[ps[f]]
                agg = jnp.maximum(agg, 0.0)
                # Write the interior of the persistent padded scratch.
                pad_ref[:, 1:Ho + 1, 1:Wo + 1, :] = agg.reshape(bb, Ho, Wo, Pp)
                # 3x3 conv = 9 accumulating K=Pp matmuls (no lane-axis concat).
                acc = None
                for t, (dy, dx) in enumerate(taps9):
                    tap = pad_ref[:, dy:dy + Ho, dx:dx + Wo, :]
                    tap = tap.reshape(M, Pp).astype(jnp.bfloat16)
                    part = jnp.dot(tap, w_mid_ref[mid_idx[n], t],
                                   preferred_element_type=jnp.float32)
                    acc = part if acc is None else acc + part

            out = acc + bias_ref[i]            # folded-BN shift, (M,Pp)+(1,Pp)

            if n in sink_set:                  # incremental sink mean
                o_ref[...] += (out * inv_sinks).reshape(bb, Ho, Wo, Pp)
            if last_use.get(n, -1) > i:        # keep only if consumed later
                acts[n] = out
            for p in ps:                       # drop dead activations
                if last_use.get(p, -1) == i:
                    acts.pop(p, None)

    return kernel


# ----------------------------------------------------------------------------
# DAGNet wrapper (graph bookkeeping, deterministic parameter init)
# ----------------------------------------------------------------------------
class DAGNetPallas:
    """JAX/Pallas re-implementation of DAGNet.forward (inference, depthwise=False)."""

    def __init__(self, in_planes, planes, preds, key, downsample=True):
        self.in_planes = in_planes
        self.planes = planes
        self.preds = {n: list(ps) for n, ps in preds.items()}
        # Node ids are assumed to be topologically ordered when sorted
        # (mirrors the module's topological traversal / edge ordering).
        self.node_ids = sorted(self.preds.keys())
        for n in self.node_ids:
            assert all(p < n for p in self.preds[n]), "node ids must be topo-sorted"
        self.downsample = downsample

        succs = {n: [] for n in self.node_ids}
        for n, ps in self.preds.items():
            for p in ps:
                succs[p].append(n)
        self.sinks = [n for n in self.node_ids if len(succs[n]) == 0]

        # flat edge-weight table offsets (node order, pred-list order)
        self.edge_off, off = {}, 0
        for n in self.node_ids:
            self.edge_off[n] = off
            off += len(self.preds[n])
        self.n_edges = off

        # lane-dense padded channel dims
        self.Pp = _round_up(planes, 128)
        self.K_in_pad = _round_up(9 * in_planes, 128)

        in_nodes = [n for n in self.node_ids if len(self.preds[n]) == 0]
        mid_nodes = [n for n in self.node_ids if len(self.preds[n]) > 0]
        self.in_idx = {n: j for j, n in enumerate(in_nodes)}
        self.mid_idx = {n: j for j, n in enumerate(mid_nodes)}

        # ---- parameters: conv weights with BN scale folded in, BN shift,
        #      sigmoid edge weights --------------------------------------
        eps = 1e-5
        bn_scale = 1.0 / (1.0 + eps) ** 0.5   # gamma=1, var=1, mean=0, beta=0
        w_in_rows, w_mid_rows, ew_parts = [], [], []
        self.w_ref = {}                        # unpadded f32 weights (reference)
        for n in self.node_ids:
            fin = len(self.preds[n])
            cin = in_planes if fin == 0 else planes
            key, kw, ke = jax.random.split(key, 3)
            std = (2.0 / (9 * cin)) ** 0.5     # kaiming-normal style
            w = std * jax.random.normal(kw, (3, 3, cin, planes), jnp.float32)
            self.w_ref[n] = w
            wf = w * bn_scale                  # fold BN scale into conv
            if fin == 0:
                wm = wf.reshape(9 * cin, planes)          # (dy,dx,cin) rows
                wm = jnp.pad(wm, ((0, self.K_in_pad - 9 * cin),
                                  (0, self.Pp - planes)))
                w_in_rows.append(wm.astype(jnp.bfloat16))
            else:
                wm = jnp.pad(wf, ((0, 0), (0, 0),
                                  (0, self.Pp - cin), (0, self.Pp - planes)))
                w_mid_rows.append(wm.reshape(9, self.Pp, self.Pp)
                                  .astype(jnp.bfloat16))
                ew_parts.append(jax.nn.sigmoid(
                    jax.random.normal(ke, (fin,), jnp.float32)))

        self.w_in = (jnp.stack(w_in_rows) if w_in_rows
                     else jnp.zeros((1, self.K_in_pad, self.Pp), jnp.bfloat16))
        self.w_mid = (jnp.stack(w_mid_rows) if w_mid_rows
                      else jnp.zeros((1, 9, self.Pp, self.Pp), jnp.bfloat16))
        self.biases = jnp.zeros((len(self.node_ids), 1, self.Pp), jnp.float32)
        self.edge_w = (jnp.concatenate(ew_parts) if ew_parts
                       else jnp.zeros((1,), jnp.float32))

    # --- live-activation count (for the VMEM budget) ------------------------
    def _max_live(self):
        last_use = {}
        for i, m in enumerate(self.node_ids):
            for p in self.preds[m]:
                last_use[p] = max(last_use.get(p, -1), i)
        live = max_live = 0
        for i, n in enumerate(self.node_ids):
            if last_use.get(n, -1) > i:
                live += 1
                max_live = max(max_live, live)
            for p in self.preds[n]:
                if last_use.get(p) == i:
                    live -= 1
        return max(1, max_live)

    def __call__(self, x_nchw, batch_block=1):
        x = jnp.transpose(x_nchw, (0, 2, 3, 1)).astype(jnp.float32)  # NCHW->NHWC
        N, H, W, Cin = x.shape
        assert Cin == self.in_planes
        bb = batch_block
        assert N % bb == 0

        if self.downsample:
            assert H % 2 == 0 and W % 2 == 0, "stride-2 path assumes even H, W"
            Ho, Wo, stride = H // 2, W // 2, 2
        else:
            Ho, Wo, stride = H, W, 1

        # One-time XLA prep: ReLU + spatial pad=1 + 9 (strided) taps, channel-
        # padded to K_in_pad and cast to bf16 -> lane-dense DMA into the kernel.
        xr = jnp.maximum(x, 0.0)
        xp = jnp.pad(xr, ((0, 0), (1, 1), (1, 1), (0, 0)))
        taps = [xp[:, dy::stride, dx::stride, :][:, :Ho, :Wo, :]
                for dy in range(3) for dx in range(3)]
        patch = jnp.concatenate(taps, axis=-1).reshape(N, Ho * Wo, 9 * Cin)
        patch = jnp.pad(patch, ((0, 0), (0, 0),
                                (0, self.K_in_pad - 9 * Cin))).astype(jnp.bfloat16)

        kernel = _make_dag_kernel(self.node_ids, self.preds, self.edge_off,
                                  self.sinks, self.in_idx, self.mid_idx,
                                  self.Pp, self.K_in_pad, Ho, Wo, bb)

        # --- explicit VMEM budget (64 MiB parts) -----------------------------
        f32b, bf16b = 4, 2
        w_bytes = (self.w_in.size * bf16b + self.w_mid.size * bf16b
                   + self.biases.size * f32b)
        in_blk = bb * Ho * Wo * self.K_in_pad * bf16b
        out_blk = bb * Ho * Wo * self.Pp * f32b
        pad_scr = bb * (Ho + 2) * (Wo + 2) * self.Pp * f32b
        live = self._max_live() * bb * Ho * Wo * self.Pp * f32b
        est = w_bytes + 2 * in_blk + 2 * out_blk + pad_scr + live + (2 << 20)
        vmem_limit = int(min(64 << 20, max(32 << 20, 2 * est)))
        # TODO(synk): if est approaches the v7x 64 MiB budget (large planes /
        # spatial), tile the grid additionally over output rows with a 1-row halo.

        n_in = len(self.in_idx)
        n_mid = len(self.mid_idx)
        flops = 2 * N * Ho * Wo * (n_in * self.K_in_pad * self.Pp
                                   + n_mid * 9 * self.Pp * self.Pp)
        bytes_accessed = int(patch.size * bf16b + w_bytes
                             + self.edge_w.size * f32b
                             + N * Ho * Wo * self.Pp * f32b)
        cost = pl.CostEstimate(flops=int(flops), transcendentals=0,
                               bytes_accessed=bytes_accessed)

        out_nhwc = pl.pallas_call(
            kernel,
            out_shape=jax.ShapeDtypeStruct((N, Ho, Wo, self.Pp), jnp.float32),
            grid=(N // bb,),
            in_specs=[
                # sigmoid edge weights: tiny scalar table in SMEM
                pl.BlockSpec(memory_space=pltpu.MemorySpace.SMEM),
                # shared input patch matrix, blocked over batch only
                pl.BlockSpec((bb, Ho * Wo, self.K_in_pad), lambda b: (b, 0, 0)),
                # folded BN biases + stacked weights: whole arrays, VMEM resident
                pl.BlockSpec(memory_space=pltpu.MemorySpace.VMEM),
                pl.BlockSpec(memory_space=pltpu.MemorySpace.VMEM),
                pl.BlockSpec(memory_space=pltpu.MemorySpace.VMEM),
            ],
            out_specs=pl.BlockSpec((bb, Ho, Wo, self.Pp), lambda b: (b, 0, 0, 0)),
            scratch_shapes=[pltpu.VMEM((bb, Ho + 2, Wo + 2, self.Pp),
                                       jnp.float32)],
            compiler_params=pltpu.CompilerParams(
                dimension_semantics=("parallel",),   # shard batch over TCs
                vmem_limit_bytes=vmem_limit),
            cost_estimate=cost,
        )(self.edge_w, patch, self.biases, self.w_in, self.w_mid)

        out = out_nhwc[..., :self.planes]            # drop channel padding
        return jnp.transpose(out, (0, 3, 1, 2))      # NHWC -> NCHW

    # --- pure-JAX f32 reference (same math, no Pallas) -----------------------
    def reference(self, x_nchw):
        x = jnp.transpose(x_nchw, (0, 2, 3, 1)).astype(jnp.float32)
        bn_scale = 1.0 / (1.0 + 1e-5) ** 0.5
        acts = {}
        for n in self.node_ids:
            ps = self.preds[n]
            if len(ps) == 0:
                a = jnp.maximum(x, 0.0)
                stride = 2 if self.downsample else 1
            else:
                off = self.edge_off[n]
                agg = self.edge_w[off] * acts[ps[0]]
                for f in range(1, len(ps)):
                    agg = agg + self.edge_w[off + f] * acts[ps[f]]
                a = jnp.maximum(agg, 0.0)
                stride = 1
            y = jax.lax.conv_general_dilated(
                a, self.w_ref[n], (stride, stride), ((1, 1), (1, 1)),
                dimension_numbers=("NHWC", "HWIO", "NHWC"))
            acts[n] = y * bn_scale
        tot = acts[self.sinks[0]]
        for n in self.sinks[1:]:
            tot = tot + acts[n]
        out = tot / float(len(self.sinks))
        return jnp.transpose(out, (0, 3, 1, 2))


# ----------------------------------------------------------------------------
if __name__ == "__main__":
    key = jax.random.PRNGKey(0)

    # Small random DAG (node ids are topologically ordered); 0 and 1 are input
    # nodes (in_degree == 0), 3 and 4 are sinks (out_degree == 0).
    preds = {0: [], 1: [], 2: [0, 1], 3: [0, 2], 4: [1, 2]}

    in_planes, planes = 4, 8
    N, H, W = 2, 16, 16

    key, kx, kp = jax.random.split(key, 3)
    x = jax.random.normal(kx, (N, in_planes, H, W), jnp.float32)   # NCHW input

    net = DAGNetPallas(in_planes, planes, preds, kp, downsample=True)
    out = jax.block_until_ready(net(x, batch_block=1))

    assert out.shape == (N, planes, H // 2, W // 2), out.shape
    assert bool(jnp.all(jnp.isfinite(out)))

    # correctness vs. pure-JAX f32 reference (bf16 MXU operands -> loose tol)
    ref = jax.block_until_ready(net.reference(x))
    ok = bool(jnp.all(jnp.abs(out - ref) <= 0.05 + 0.05 * jnp.abs(ref)))
    assert ok, float(jnp.max(jnp.abs(out - ref)))

    print("KERNEL_OK")
</pallas_src>

<mosaic_0001>
module attributes {stable_mosaic.version = 11 : i64} {
  func.func @kernel(%arg0: i32, %arg1: memref<6xf32, #tpu.memory_space<smem>>, %arg2: memref<1x64x128xbf16, #tpu.memory_space<vmem>>, %arg3: memref<5x1x128xf32, #tpu.memory_space<vmem>>, %arg4: memref<2x128x128xbf16, #tpu.memory_space<vmem>>, %arg5: memref<3x9x128x128xbf16, #tpu.memory_space<vmem>>, %arg6: memref<1x8x8x128xf32, #tpu.memory_space<vmem>>, %arg7: memref<1x10x10x128xf32, #tpu.memory_space<vmem>>) attributes {dimension_semantics = [#tpu.dimension_semantics<parallel>], iteration_bounds = array<i64: 2>, scalar_prefetch = 0 : i64, scratch_operands = 1 : i64, tpu.core_type = #tpu.core_type<tc>, window_params = [{transform_indices = @transform_0, window_bounds = array<i64: 6>}, {transform_indices = @transform_1, window_bounds = array<i64: 1, 64, 128>}, {pipeline_mode = #tpu.pipeline_mode<synchronous>, transform_indices = @transform_2, window_bounds = array<i64: 5, 1, 128>}, {pipeline_mode = #tpu.pipeline_mode<synchronous>, transform_indices = @transform_3, window_bounds = array<i64: 2, 128, 128>}, {pipeline_mode = #tpu.pipeline_mode<synchronous>, transform_indices = @transform_4, window_bounds = array<i64: 3, 9, 128, 128>}, {transform_indices = @transform_5, window_bounds = array<i64: 1, 8, 8, 128>}]} {
    %cst = arith.constant 0.000000e+00 : f32
    %0 = vector.broadcast %cst : f32 to vector<1x10x10x128xf32>
    %c0 = arith.constant 0 : index
    %c0_0 = arith.constant 0 : index
    %c0_1 = arith.constant 0 : index
    %c0_2 = arith.constant 0 : index
    %1 = vector.load %arg7[%c0, %c0_0, %c0_1, %c0_2] : memref<1x10x10x128xf32, #tpu.memory_space<vmem>>, vector<1x10x10x128xf32>
    tpu.vector_store %arg7[%c0, %c0_0, %c0_1, %c0_2], %0 {strides = array<i32>} : memref<1x10x10x128xf32, #tpu.memory_space<vmem>>, vector<1x10x10x128xf32>,
    %cst_3 = arith.constant 0.000000e+00 : f32
    %2 = vector.broadcast %cst_3 : f32 to vector<1x8x8x128xf32>
    %c0_4 = arith.constant 0 : index
    %c0_5 = arith.constant 0 : index
    %c0_6 = arith.constant 0 : index
    %c0_7 = arith.constant 0 : index
    %3 = vector.load %arg6[%c0_4, %c0_5, %c0_6, %c0_7] : memref<1x8x8x128xf32, #tpu.memory_space<vmem>>, vector<1x8x8x128xf32>
    tpu.vector_store %arg6[%c0_4, %c0_5, %c0_6, %c0_7], %2 {strides = array<i32>} : memref<1x8x8x128xf32, #tpu.memory_space<vmem>>, vector<1x8x8x128xf32>,
    %c0_8 = arith.constant 0 : index
    %c0_9 = arith.constant 0 : index
    %c0_10 = arith.constant 0 : index
    %4 = vector.load %arg2[%c0_8, %c0_9, %c0_10] : memref<1x64x128xbf16, #tpu.memory_space<vmem>>, vector<1x64x128xbf16>
    %5 = vector.shape_cast %4 : vector<1x64x128xbf16> to vector<64x128xbf16>
    %c0_11 = arith.constant 0 : index
    %c0_12 = arith.constant 0 : index
    %c0_13 = arith.constant 0 : index
    %6 = vector.load %arg4[%c0_11, %c0_12, %c0_13] : memref<2x128x128xbf16, #tpu.memory_space<vmem>>, vector<1x128x128xbf16>
    %7 = vector.shape_cast %6 : vector<1x128x128xbf16> to vector<128x128xbf16>
    %cst_14 = arith.constant dense<0.000000e+00> : vector<64x128xf32>
    %8 = tpu.matmul %5, %7, %cst_14 {dimension_numbers = #tpu.dot_dimension_numbers<[1], [0], [0], [1], [0, 0, 1, 1], [], []>} : vector<64x128xbf16>, vector<128x128xbf16>, vector<64x128xf32> -> vector<64x128xf32>
    %c0_15 = arith.constant 0 : index
    %c0_16 = arith.constant 0 : index
    %c0_17 = arith.constant 0 : index
    %9 = vector.load %arg3[%c0_15, %c0_16, %c0_17] : memref<5x1x128xf32, #tpu.memory_space<vmem>>, vector<1x1x128xf32>
    %10 = vector.shape_cast %9 : vector<1x1x128xf32> to vector<1x128xf32>
    %11 = vector.broadcast %10 : vector<1x128xf32> to vector<64x128xf32>
    %12 = arith.addf %8, %11 : vector<64x128xf32>
    %c1 = arith.constant 1 : index
    %c0_18 = arith.constant 0 : index
    %c0_19 = arith.constant 0 : index
    %13 = vector.load %arg4[%c1, %c0_18, %c0_19] : memref<2x128x128xbf16, #tpu.memory_space<vmem>>, vector<1x128x128xbf16>
    %14 = vector.shape_cast %13 : vector<1x128x128xbf16> to vector<128x128xbf16>
    %cst_20 = arith.constant dense<0.000000e+00> : vector<64x128xf32>
    %15 = tpu.matmul %5, %14, %cst_20 {dimension_numbers = #tpu.dot_dimension_numbers<[1], [0], [0], [1], [0, 0, 1, 1], [], []>} : vector<64x128xbf16>, vector<128x128xbf16>, vector<64x128xf32> -> vector<64x128xf32>
    %c1_21 = arith.constant 1 : index
    %c0_22 = arith.constant 0 : index
    %c0_23 = arith.constant 0 : index
    %16 = vector.load %arg3[%c1_21, %c0_22, %c0_23] : memref<5x1x128xf32, #tpu.memory_space<vmem>>, vector<1x1x128xf32>
    %17 = vector.shape_cast %16 : vector<1x1x128xf32> to vector<1x128xf32>
    %18 = vector.broadcast %17 : vector<1x128xf32> to vector<64x128xf32>
    %19 = arith.addf %15, %18 : vector<64x128xf32>
    %c0_24 = arith.constant 0 : index
    %20 = memref.load %arg1[%c0_24] : memref<6xf32, #tpu.memory_space<smem>>
    %21 = vector.broadcast %20 : f32 to vector<64x128xf32>
    %22 = arith.mulf %21, %12 : vector<64x128xf32>
    %c1_25 = arith.constant 1 : index
    %23 = memref.load %arg1[%c1_25] : memref<6xf32, #tpu.memory_space<smem>>
    %24 = vector.broadcast %23 : f32 to vector<64x128xf32>
    %25 = arith.mulf %24, %19 : vector<64x128xf32>
    %26 = arith.addf %22, %25 : vector<64x128xf32>
    %cst_26 = arith.constant 0.000000e+00 : f32
    %27 = vector.broadcast %cst_26 : f32 to vector<64x128xf32>
    %28 = arith.maximumf %26, %27 : vector<64x128xf32>
    %29 = vector.shape_cast %28 : vector<64x128xf32> to vector<1x8x8x128xf32>
    %c0_27 = arith.constant 0 : index
    %c1_28 = arith.constant 1 : index
    %c1_29 = arith.constant 1 : index
    %c0_30 = arith.constant 0 : index
    %30 = vector.load %arg7[%c0_27, %c1_28, %c1_29, %c0_30] : memref<1x10x10x128xf32, #tpu.memory_space<vmem>>, vector<1x8x8x128xf32>
    tpu.vector_store %arg7[%c0_27, %c1_28, %c1_29, %c0_30], %29 {strides = array<i32>} : memref<1x10x10x128xf32, #tpu.memory_space<vmem>>, vector<1x8x8x128xf32>,
    %c0_31 = arith.constant 0 : index
    %c0_32 = arith.constant 0 : index
    %c0_33 = arith.constant 0 : index
    %c0_34 = arith.constant 0 : index
    %31 = vector.load %arg7[%c0_31, %c0_32, %c0_33, %c0_34] : memref<1x10x10x128xf32, #tpu.memory_space<vmem>>, vector<1x8x8x128xf32>
    %32 = vector.shape_cast %31 : vector<1x8x8x128xf32> to vector<64x128xf32>
    %33 = arith.truncf %32 : vector<64x128xf32> to vector<64x128xbf16>
    %c0_35 = arith.constant 0 : index
    %c0_36 = arith.constant 0 : index
    %c0_37 = arith.constant 0 : index
    %c0_38 = arith.constant 0 : index
    %34 = vector.load %arg5[%c0_35, %c0_36, %c0_37, %c0_38] : memref<3x9x128x128xbf16, #tpu.memory_space<vmem>>, vector<1x1x128x128xbf16>
    %35 = vector.shape_cast %34 : vector<1x1x128x128xbf16> to vector<128x128xbf16>
    %cst_39 = arith.constant dense<0.000000e+00> : vector<64x128xf32>
    %36 = tpu.matmul %33, %35, %cst_39 {dimension_numbers = #tpu.dot_dimension_numbers<[1], [0], [0], [1], [0, 0, 1, 1], [], []>} : vector<64x128xbf16>, vector<128x128xbf16>, vector<64x128xf32> -> vector<64x128xf32>
    %c0_40 = arith.constant 0 : index
    %c0_41 = arith.constant 0 : index
    %c1_42 = arith.constant 1 : index
    %c0_43 = arith.constant 0 : index
    %37 = vector.load %arg7[%c0_40, %c0_41, %c1_42, %c0_43] : memref<1x10x10x128xf32, #tpu.memory_space<vmem>>, vector<1x8x8x128xf32>
    %38 = vector.shape_cast %37 : vector<1x8x8x128xf32> to vector<64x128xf32>
    %39 = arith.truncf %38 : vector<64x128xf32> to vector<64x128xbf16>
    %c0_44 = arith.constant 0 : index
    %c1_45 = arith.constant 1 : index
    %c0_46 = arith.constant 0 : index
    %c0_47 = arith.constant 0 : index
    %40 = vector.load %arg5[%c0_44, %c1_45, %c0_46, %c0_47] : memref<3x9x128x128xbf16, #tpu.memory_space<vmem>>, vector<1x1x128x128xbf16>
    %41 = vector.shape_cast %40 : vector<1x1x128x128xbf16> to vector<128x128xbf16>
    %cst_48 = arith.constant dense<0.000000e+00> : vector<64x128xf32>
    %42 = tpu.matmul %39, %41, %cst_48 {dimension_numbers = #tpu.dot_dimension_numbers<[1], [0], [0], [1], [0, 0, 1, 1], [], []>} : vector<64x128xbf16>, vector<128x128xbf16>, vector<64x128xf32> -> vector<64x128xf32>
    %43 = arith.addf %36, %42 : vector<64x128xf32>
    %c0_49 = arith.constant 0 : index
    %c0_50 = arith.constant 0 : index
    %c2 = arith.constant 2 : index
    %c0_51 = arith.constant 0 : index
    %44 = vector.load %arg7[%c0_49, %c0_50, %c2, %c0_51] : memref<1x10x10x128xf32, #tpu.memory_space<vmem>>, vector<1x8x8x128xf32>
    %45 = vector.shape_cast %44 : vector<1x8x8x128xf32> to vector<64x128xf32>
    %46 = arith.truncf %45 : vector<64x128xf32> to vector<64x128xbf16>
    %c0_52 = arith.constant 0 : index
    %c2_53 = arith.constant 2 : index
    %c0_54 = arith.constant 0 : index
    %c0_55 = arith.constant 0 : index
    %47 = vector.load %arg5[%c0_52, %c2_53, %c0_54, %c0_55] : memref<3x9x128x128xbf16, #tpu.memory_space<vmem>>, vector<1x1x128x128xbf16>
    %48 = vector.shape_cast %47 : vector<1x1x128x128xbf16> to vector<128x128xbf16>
    %cst_56 = arith.constant dense<0.000000e+00> : vector<64x128xf32>
    %49 = tpu.matmul %46, %48, %cst_56 {dimension_numbers = #tpu.dot_dimension_numbers<[1], [0], [0], [1], [0, 0, 1, 1], [], []>} : vector<64x128xbf16>, vector<128x128xbf16>, vector<64x128xf32> -> vector<64x128xf32>
    %50 = arith.addf %43, %49 : vector<64x128xf32>
    %c0_57 = arith.constant 0 : index
    %c1_58 = arith.constant 1 : index
    %c0_59 = arith.constant 0 : index
    %c0_60 = arith.constant 0 : index
    %51 = vector.load %arg7[%c0_57, %c1_58, %c0_59, %c0_60] : memref<1x10x10x128xf32, #tpu.memory_space<vmem>>, vector<1x8x8x128xf32>
    %52 = vector.shape_cast %51 : vector<1x8x8x128xf32> to vector<64x128xf32>
    %53 = arith.truncf %52 : vector<64x128xf32> to vector<64x128xbf16>
    %c0_61 = arith.constant 0 : index
    %c3 = arith.constant 3 : index
    %c0_62 = arith.constant 0 : index
    %c0_63 = arith.constant 0 : index
    %54 = vector.load %arg5[%c0_61, %c3, %c0_62, %c0_63] : memref<3x9x128x128xbf16, #tpu.memory_space<vmem>>, vector<1x1x128x128xbf16>
    %55 = vector.shape_cast %54 : vector<1x1x128x128xbf16> to vector<128x128xbf16>
    %cst_64 = arith.constant dense<0.000000e+00> : vector<64x128xf32>
    %56 = tpu.matmul %53, %55, %cst_64 {dimension_numbers = #tpu.dot_dimension_numbers<[1], [0], [0], [1], [0, 0, 1, 1], [], []>} : vector<64x128xbf16>, vector<128x128xbf16>, vector<64x128xf32> -> vector<64x128xf32>
    %57 = arith.addf %50, %56 : vector<64x128xf32>
    %c0_65 = arith.constant 0 : index
    %c1_66 = arith.constant 1 : index
    %c1_67 = arith.constant 1 : index
    %c0_68 = arith.constant 0 : index
    %58 = vector.load %arg7[%c0_65, %c1_66, %c1_67, %c0_68] : memref<1x10x10x128xf32, #tpu.memory_space<vmem>>, vector<1x8x8x128xf32>
    %59 = vector.shape_cast %58 : vector<1x8x8x128xf32> to vector<64x128xf32>
    %60 = arith.truncf %59 : vector<64x128xf32> to vector<64x128xbf16>
    %c0_69 = arith.constant 0 : index
    %c4 = arith.constant 4 : index
    %c0_70 = arith.constant 0 : index
    %c0_71 = arith.constant 0 : index
    %61 = vector.load %arg5[%c0_69, %c4, %c0_70, %c0_71] : memref<3x9x128x128xbf16, #tpu.memory_space<vmem>>, vector<1x1x128x128xbf16>
    %62 = vector.shape_cast %61 : vector<1x1x128x128xbf16> to vector<128x128xbf16>
    %cst_72 = arith.constant dense<0.000000e+00> : vector<64x128xf32>
    %63 = tpu.matmul %60, %62, %cst_72 {dimension_numbers = #tpu.dot_dimension_numbers<[1], [0], [0], [1], [0, 0, 1, 1], [], []>} : vector<64x128xbf16>, vector<128x128xbf16>, vector<64x128xf32> -> vector<64x128xf32>
    %64 = arith.addf %57, %63 : vector<64x128xf32>
    %c0_73 = arith.constant 0 : index
    %c1_74 = arith.constant 1 : index
    %c2_75 = arith.constant 2 : index
    %c0_76 = arith.constant 0 : index
    %65 = vector.load %arg7[%c0_73, %c1_74, %c2_75, %c0_76] : memref<1x10x10x128xf32, #tpu.memory_space<vmem>>, vector<1x8x8x128xf32>
    %66 = vector.shape_cast %65 : vector<1x8x8x128xf32> to vector<64x128xf32>
    %67 = arith.truncf %66 : vector<64x128xf32> to vector<64x128xbf16>
    %c0_77 = arith.constant 0 : index
    %c5 = arith.constant 5 : index
    %c0_78 = arith.constant 0 : index
    %c0_79 = arith.constant 0 : index
    %68 = vector.load %arg5[%c0_77, %c5, %c0_78, %c0_79] : memref<3x9x128x128xbf16, #tpu.memory_space<vmem>>, vector<1x1x128x128xbf16>
    %69 = vector.shape_cast %68 : vector<1x1x128x128xbf16> to vector<128x128xbf16>
    %cst_80 = arith.constant dense<0.000000e+00> : vector<64x128xf32>
    %70 = tpu.matmul %67, %69, %cst_80 {dimension_numbers = #tpu.dot_dimension_numbers<[1], [0], [0], [1], [0, 0, 1, 1], [], []>} : vector<64x128xbf16>, vector<128x128xbf16>, vector<64x128xf32> -> vector<64x128xf32>
    %71 = arith.addf %64, %70 : vector<64x128xf32>
    %c0_81 = arith.constant 0 : index
    %c2_82 = arith.constant 2 : index
    %c0_83 = arith.constant 0 : index
    %c0_84 = arith.constant 0 : index
    %72 = vector.load %arg7[%c0_81, %c2_82, %c0_83, %c0_84] : memref<1x10x10x128xf32, #tpu.memory_space<vmem>>, vector<1x8x8x128xf32>
    %73 = vector.shape_cast %72 : vector<1x8x8x128xf32> to vector<64x128xf32>
    %74 = arith.truncf %73 : vector<64x128xf32> to vector<64x128xbf16>
    %c0_85 = arith.constant 0 : index
    %c6 = arith.constant 6 : index
    %c0_86 = arith.constant 0 : index
    %c0_87 = arith.constant 0 : index
    %75 = vector.load %arg5[%c0_85, %c6, %c0_86, %c0_87] : memref<3x9x128x128xbf16, #tpu.memory_space<vmem>>, vector<1x1x128x128xbf16>
    %76 = vector.shape_cast %75 : vector<1x1x128x128xbf16> to vector<128x128xbf16>
    %cst_88 = arith.constant dense<0.000000e+00> : vector<64x128xf32>
    %77 = tpu.matmul %74, %76, %cst_88 {dimension_numbers = #tpu.dot_dimension_numbers<[1], [0], [0], [1], [0, 0, 1, 1], [], []>} : vector<64x128xbf16>, vector<128x128xbf16>, vector<64x128xf32> -> vector<64x128xf32>
    %78 = arith.addf %71, %77 : vector<64x128xf32>
    %c0_89 = arith.constant 0 : index
    %c2_90 = arith.constant 2 : index
    %c1_91 = arith.constant 1 : index
    %c0_92 = arith.constant 0 : index
    %79 = vector.load %arg7[%c0_89, %c2_90, %c1_91, %c0_92] : memref<1x10x10x128xf32, #tpu.memory_space<vmem>>, vector<1x8x8x128xf32>
    %80 = vector.shape_cast %79 : vector<1x8x8x128xf32> to vector<64x128xf32>
    %81 = arith.truncf %80 : vector<64x128xf32> to vector<64x128xbf16>
    %c0_93 = arith.constant 0 : index
    %c7 = arith.constant 7 : index
    %c0_94 = arith.constant 0 : index
    %c0_95 = arith.constant 0 : index
    %82 = vector.load %arg5[%c0_93, %c7, %c0_94, %c0_95] : memref<3x9x128x128xbf16, #tpu.memory_space<vmem>>, vector<1x1x128x128xbf16>
    %83 = vector.shape_cast %82 : vector<1x1x128x128xbf16> to vector<128x128xbf16>
    %cst_96 = arith.constant dense<0.000000e+00> : vector<64x128xf32>
    %84 = tpu.matmul %81, %83, %cst_96 {dimension_numbers = #tpu.dot_dimension_numbers<[1], [0], [0], [1], [0, 0, 1, 1], [], []>} : vector<64x128xbf16>, vector<128x128xbf16>, vector<64x128xf32> -> vector<64x128xf32>
    %85 = arith.addf %78, %84 : vector<64x128xf32>
    %c0_97 = arith.constant 0 : index
    %c2_98 = arith.constant 2 : index
    %c2_99 = arith.constant 2 : index
    %c0_100 = arith.constant 0 : index
    %86 = vector.load %arg7[%c0_97, %c2_98, %c2_99, %c0_100] : memref<1x10x10x128xf32, #tpu.memory_space<vmem>>, vector<1x8x8x128xf32>
    %87 = vector.shape_cast %86 : vector<1x8x8x128xf32> to vector<64x128xf32>
    %88 = arith.truncf %87 : vector<64x128xf32> to vector<64x128xbf16>
    %c0_101 = arith.constant 0 : index
    %c8 = arith.constant 8 : index
    %c0_102 = arith.constant 0 : index
    %c0_103 = arith.constant 0 : index
    %89 = vector.load %arg5[%c0_101, %c8, %c0_102, %c0_103] : memref<3x9x128x128xbf16, #tpu.memory_space<vmem>>, vector<1x1x128x128xbf16>
    %90 = vector.shape_cast %89 : vector<1x1x128x128xbf16> to vector<128x128xbf16>
    %cst_104 = arith.constant dense<0.000000e+00> : vector<64x128xf32>
    %91 = tpu.matmul %88, %90, %cst_104 {dimension_numbers = #tpu.dot_dimension_numbers<[1], [0], [0], [1], [0, 0, 1, 1], [], []>} : vector<64x128xbf16>, vector<128x128xbf16>, vector<64x128xf32> -> vector<64x128xf32>
    %92 = arith.addf %85, %91 : vector<64x128xf32>
    %c2_105 = arith.constant 2 : index
    %c0_106 = arith.constant 0 : index
    %c0_107 = arith.constant 0 : index
    %93 = vector.load %arg3[%c2_105, %c0_106, %c0_107] : memref<5x1x128xf32, #tpu.memory_space<vmem>>, vector<1x1x128xf32>
    %94 = vector.shape_cast %93 : vector<1x1x128xf32> to vector<1x128xf32>
    %95 = vector.broadcast %94 : vector<1x128xf32> to vector<64x128xf32>
    %96 = arith.addf %92, %95 : vector<64x128xf32>
    %c2_108 = arith.constant 2 : index
    %97 = memref.load %arg1[%c2_108] : memref<6xf32, #tpu.memory_space<smem>>
    %98 = vector.broadcast %97 : f32 to vector<64x128xf32>
    %99 = arith.mulf %98, %12 : vector<64x128xf32>
    %c3_109 = arith.constant 3 : index
    %100 = memref.load %arg1[%c3_109] : memref<6xf32, #tpu.memory_space<smem>>
    %101 = vector.broadcast %100 : f32 to vector<64x128xf32>
    %102 = arith.mulf %101, %96 : vector<64x128xf32>
    %103 = arith.addf %99, %102 : vector<64x128xf32>
    %cst_110 = arith.constant 0.000000e+00 : f32
    %104 = vector.broadcast %cst_110 : f32 to vector<64x128xf32>
    %105 = arith.maximumf %103, %104 : vector<64x128xf32>
    %106 = vector.shape_cast %105 : vector<64x128xf32> to vector<1x8x8x128xf32>
    %c0_111 = arith.constant 0 : index
    %c1_112 = arith.constant 1 : index
    %c1_113 = arith.constant 1 : index
    %c0_114 = arith.constant 0 : index
    %107 = vector.load %arg7[%c0_111, %c1_112, %c1_113, %c0_114] : memref<1x10x10x128xf32, #tpu.memory_space<vmem>>, vector<1x8x8x128xf32>
    tpu.vector_store %arg7[%c0_111, %c1_112, %c1_113, %c0_114], %106 {strides = array<i32>} : memref<1x10x10x128xf32, #tpu.memory_space<vmem>>, vector<1x8x8x128xf32>,
    %c0_115 = arith.constant 0 : index
    %c0_116 = arith.constant 0 : index
    %c0_117 = arith.constant 0 : index
    %c0_118 = arith.constant 0 : index
    %108 = vector.load %arg7[%c0_115, %c0_116, %c0_117, %c0_118] : memref<1x10x10x128xf32, #tpu.memory_space<vmem>>, vector<1x8x8x128xf32>
    %109 = vector.shape_cast %108 : vector<1x8x8x128xf32> to vector<64x128xf32>
    %110 = arith.truncf %109 : vector<64x128xf32> to vector<64x128xbf16>
    %c1_119 = arith.constant 1 : index
    %c0_120 = arith.constant 0 : index
    %c0_121 = arith.constant 0 : index
    %c0_122 = arith.constant 0 : index
    %111 = vector.load %arg5[%c1_119, %c0_120, %c0_121, %c0_122] : memref<3x9x128x128xbf16, #tpu.memory_space<vmem>>, vector<1x1x128x128xbf16>
    %112 = vector.shape_cast %111 : vector<1x1x128x128xbf16> to vector<128x128xbf16>
    %cst_123 = arith.constant dense<0.000000e+00> : vector<64x128xf32>
    %113 = tpu.matmul %110, %112, %cst_123 {dimension_numbers = #tpu.dot_dimension_numbers<[1], [0], [0], [1], [0, 0, 1, 1], [], []>} : vector<64x128xbf16>, vector<128x128xbf16>, vector<64x128xf32> -> vector<64x128xf32>
    %c0_124 = arith.constant 0 : index
    %c0_125 = arith.constant 0 : index
    %c1_126 = arith.constant 1 : index
    %c0_127 = arith.constant 0 : index
    %114 = vector.load %arg7[%c0_124, %c0_125, %c1_126, %c0_127] : memref<1x10x10x128xf32, #tpu.memory_space<vmem>>, vector<1x8x8x128xf32>
    %115 = vector.shape_cast %114 : vector<1x8x8x128xf32> to vector<64x128xf32>
    %116 = arith.truncf %115 : vector<64x128xf32> to vector<64x128xbf16>
    %c1_128 = arith.constant 1 : index
    %c1_129 = arith.constant 1 : index
    %c0_130 = arith.constant 0 : index
    %c0_131 = arith.constant 0 : index
    %117 = vector.load %arg5[%c1_128, %c1_129, %c0_130, %c0_131] : memref<3x9x128x128xbf16, #tpu.memory_space<vmem>>, vector<1x1x128x128xbf16>
    %118 = vector.shape_cast %117 : vector<1x1x128x128xbf16> to vector<128x128xbf16>
    %cst_132 = arith.constant dense<0.000000e+00> : vector<64x128xf32>
    %119 = tpu.matmul %116, %118, %cst_132 {dimension_numbers = #tpu.dot_dimension_numbers<[1], [0], [0], [1], [0, 0, 1, 1], [], []>} : vector<64x128xbf16>, vector<128x128xbf16>, vector<64x128xf32> -> vector<64x128xf32>
    %120 = arith.addf %113, %119 : vector<64x128xf32>
    %c0_133 = arith.constant 0 : index
    %c0_134 = arith.constant 0 : index
    %c2_135 = arith.constant 2 : index
    %c0_136 = arith.constant 0 : index
    %121 = vector.load %arg7[%c0_133, %c0_134, %c2_135, %c0_136] : memref<1x10x10x128xf32, #tpu.memory_space<vmem>>, vector<1x8x8x128xf32>
    %122 = vector.shape_cast %121 : vector<1x8x8x128xf32> to vector<64x128xf32>
    %123 = arith.truncf %122 : vector<64x128xf32> to vector<64x128xbf16>
    %c1_137 = arith.constant 1 : index
    %c2_138 = arith.constant 2 : index
    %c0_139 = arith.constant 0 : index
    %c0_140 = arith.constant 0 : index
    %124 = vector.load %arg5[%c1_137, %c2_138, %c0_139, %c0_140] : memref<3x9x128x128xbf16, #tpu.memory_space<vmem>>, vector<1x1x128x128xbf16>
    %125 = vector.shape_cast %124 : vector<1x1x128x128xbf16> to vector<128x128xbf16>
    %cst_141 = arith.constant dense<0.000000e+00> : vector<64x128xf32>
    %126 = tpu.matmul %123, %125, %cst_141 {dimension_numbers = #tpu.dot_dimension_numbers<[1], [0], [0], [1], [0, 0, 1, 1], [], []>} : vector<64x128xbf16>, vector<128x128xbf16>, vector<64x128xf32> -> vector<64x128xf32>
    %127 = arith.addf %120, %126 : vector<64x128xf32>
    %c0_142 = arith.constant 0 : index
    %c1_143 = arith.constant 1 : index
    %c0_144 = arith.constant 0 : index
    %c0_145 = arith.constant 0 : index
    %128 = vector.load %arg7[%c0_142, %c1_143, %c0_144, %c0_145] : memref<1x10x10x128xf32, #tpu.memory_space<vmem>>, vector<1x8x8x128xf32>
    %129 = vector.shape_cast %128 : vector<1x8x8x128xf32> to vector<64x128xf32>
    %130 = arith.truncf %129 : vector<64x128xf32> to vector<64x128xbf16>
    %c1_146 = arith.constant 1 : index
    %c3_147 = arith.constant 3 : index
    %c0_148 = arith.constant 0 : index
    %c0_149 = arith.constant 0 : index
    %131 = vector.load %arg5[%c1_146, %c3_147, %c0_148, %c0_149] : memref<3x9x128x128xbf16, #tpu.memory_space<vmem>>, vector<1x1x128x128xbf16>
    %132 = vector.shape_cast %131 : vector<1x1x128x128xbf16> to vector<128x128xbf16>
    %cst_150 = arith.constant dense<0.000000e+00> : vector<64x128xf32>
    %133 = tpu.matmul %130, %132, %cst_150 {dimension_numbers = #tpu.dot_dimension_numbers<[1], [0], [0], [1], [0, 0, 1, 1], [], []>} : vector<64x128xbf16>, vector<128x128xbf16>, vector<64x128xf32> -> vector<64x128xf32>
    %134 = arith.addf %127, %133 : vector<64x128xf32>
    %c0_151 = arith.constant 0 : index
    %c1_152 = arith.constant 1 : index
    %c1_153 = arith.constant 1 : index
    %c0_154 = arith.constant 0 : index
    %135 = vector.load %arg7[%c0_151, %c1_152, %c1_153, %c0_154] : memref<1x10x10x128xf32, #tpu.memory_space<vmem>>, vector<1x8x8x128xf32>
    %136 = vector.shape_cast %135 : vector<1x8x8x128xf32> to vector<64x128xf32>
    %137 = arith.truncf %136 : vector<64x128xf32> to vector<64x128xbf16>
    %c1_155 = arith.constant 1 : index
    %c4_156 = arith.constant 4 : index
    %c0_157 = arith.constant 0 : index
    %c0_158 = arith.constant 0 : index
    %138 = vector.load %arg5[%c1_155, %c4_156, %c0_157, %c0_158] : memref<3x9x128x128xbf16, #tpu.memory_space<vmem>>, vector<1x1x128x128xbf16>
    %139 = vector.shape_cast %138 : vector<1x1x128x128xbf16> to vector<128x128xbf16>
    %cst_159 = arith.constant dense<0.000000e+00> : vector<64x128xf32>
    %140 = tpu.matmul %137, %139, %cst_159 {dimension_numbers = #tpu.dot_dimension_numbers<[1], [0], [0], [1], [0, 0, 1, 1], [], []>} : vector<64x128xbf16>, vector<128x128xbf16>, vector<64x128xf32> -> vector<64x128xf32>
    %141 = arith.addf %134, %140 : vector<64x128xf32>
    %c0_160 = arith.constant 0 : index
    %c1_161 = arith.constant 1 : index
    %c2_162 = arith.constant 2 : index
    %c0_163 = arith.constant 0 : index
    %142 = vector.load %arg7[%c0_160, %c1_161, %c2_162, %c0_163] : memref<1x10x10x128xf32, #tpu.memory_space<vmem>>, vector<1x8x8x128xf32>
    %143 = vector.shape_cast %142 : vector<1x8x8x128xf32> to vector<64x128xf32>
    %144 = arith.truncf %143 : vector<64x128xf32> to vector<64x128xbf16>
    %c1_164 = arith.constant 1 : index
    %c5_165 = arith.constant 5 : index
    %c0_166 = arith.constant 0 : index
    %c0_167 = arith.constant 0 : index
    %145 = vector.load %arg5[%c1_164, %c5_165, %c0_166, %c0_167] : memref<3x9x128x128xbf16, #tpu.memory_space<vmem>>, vector<1x1x128x128xbf16>
    %146 = vector.shape_cast %145 : vector<1x1x128x128xbf16> to vector<128x128xbf16>
    %cst_168 = arith.constant dense<0.000000e+00> : vector<64x128xf32>
    %147 = tpu.matmul %144, %146, %cst_168 {dimension_numbers = #tpu.dot_dimension_numbers<[1], [0], [0], [1], [0, 0, 1, 1], [], []>} : vector<64x128xbf16>, vector<128x128xbf16>, vector<64x128xf32> -> vector<64x128xf32>
    %148 = arith.addf %141, %147 : vector<64x128xf32>
    %c0_169 = arith.constant 0 : index
    %c2_170 = arith.constant 2 : index
    %c0_171 = arith.constant 0 : index
    %c0_172 = arith.constant 0 : index
    %149 = vector.load %arg7[%c0_169, %c2_170, %c0_171, %c0_172] : memref<1x10x10x128xf32, #tpu.memory_space<vmem>>, vector<1x8x8x128xf32>
    %150 = vector.shape_cast %149 : vector<1x8x8x128xf32> to vector<64x128xf32>
    %151 = arith.truncf %150 : vector<64x128xf32> to vector<64x128xbf16>
    %c1_173 = arith.constant 1 : index
    %c6_174 = arith.constant 6 : index
    %c0_175 = arith.constant 0 : index
    %c0_176 = arith.constant 0 : index
    %152 = vector.load %arg5[%c1_173, %c6_174, %c0_175, %c0_176] : memref<3x9x128x128xbf16, #tpu.memory_space<vmem>>, vector<1x1x128x128xbf16>
    %153 = vector.shape_cast %152 : vector<1x1x128x128xbf16> to vector<128x128xbf16>
    %cst_177 = arith.constant dense<0.000000e+00> : vector<64x128xf32>
    %154 = tpu.matmul %151, %153, %cst_177 {dimension_numbers = #tpu.dot_dimension_numbers<[1], [0], [0], [1], [0, 0, 1, 1], [], []>} : vector<64x128xbf16>, vector<128x128xbf16>, vector<64x128xf32> -> vector<64x128xf32>
    %155 = arith.addf %148, %154 : vector<64x128xf32>
    %c0_178 = arith.constant 0 : index
    %c2_179 = arith.constant 2 : index
    %c1_180 = arith.constant 1 : index
    %c0_181 = arith.constant 0 : index
    %156 = vector.load %arg7[%c0_178, %c2_179, %c1_180, %c0_181] : memref<1x10x10x128xf32, #tpu.memory_space<vmem>>, vector<1x8x8x128xf32>
    %157 = vector.shape_cast %156 : vector<1x8x8x128xf32> to vector<64x128xf32>
    %158 = arith.truncf %157 : vector<64x128xf32> to vector<64x128xbf16>
    %c1_182 = arith.constant 1 : index
    %c7_183 = arith.constant 7 : index
    %c0_184 = arith.constant 0 : index
    %c0_185 = arith.constant 0 : index
    %159 = vector.load %arg5[%c1_182, %c7_183, %c0_184, %c0_185] : memref<3x9x128x128xbf16, #tpu.memory_space<vmem>>, vector<1x1x128x128xbf16>
    %160 = vector.shape_cast %159 : vector<1x1x128x128xbf16> to vector<128x128xbf16>
    %cst_186 = arith.constant dense<0.000000e+00> : vector<64x128xf32>
    %161 = tpu.matmul %158, %160, %cst_186 {dimension_numbers = #tpu.dot_dimension_numbers<[1], [0], [0], [1], [0, 0, 1, 1], [], []>} : vector<64x128xbf16>, vector<128x128xbf16>, vector<64x128xf32> -> vector<64x128xf32>
    %162 = arith.addf %155, %161 : vector<64x128xf32>
    %c0_187 = arith.constant 0 : index
    %c2_188 = arith.constant 2 : index
    %c2_189 = arith.constant 2 : index
    %c0_190 = arith.constant 0 : index
    %163 = vector.load %arg7[%c0_187, %c2_188, %c2_189, %c0_190] : memref<1x10x10x128xf32, #tpu.memory_space<vmem>>, vector<1x8x8x128xf32>
    %164 = vector.shape_cast %163 : vector<1x8x8x128xf32> to vector<64x128xf32>
    %165 = arith.truncf %164 : vector<64x128xf32> to vector<64x128xbf16>
    %c1_191 = arith.constant 1 : index
    %c8_192 = arith.constant 8 : index
    %c0_193 = arith.constant 0 : index
    %c0_194 = arith.constant 0 : index
    %166 = vector.load %arg5[%c1_191, %c8_192, %c0_193, %c0_194] : memref<3x9x128x128xbf16, #tpu.memory_space<vmem>>, vector<1x1x128x128xbf16>
    %167 = vector.shape_cast %166 : vector<1x1x128x128xbf16> to vector<128x128xbf16>
    %cst_195 = arith.constant dense<0.000000e+00> : vector<64x128xf32>
    %168 = tpu.matmul %165, %167, %cst_195 {dimension_numbers = #tpu.dot_dimension_numbers<[1], [0], [0], [1], [0, 0, 1, 1], [], []>} : vector<64x128xbf16>, vector<128x128xbf16>, vector<64x128xf32> -> vector<64x128xf32>
    %169 = arith.addf %162, %168 : vector<64x128xf32>
    %c3_196 = arith.constant 3 : index
    %c0_197 = arith.constant 0 : index
    %c0_198 = arith.constant 0 : index
    %170 = vector.load %arg3[%c3_196, %c0_197, %c0_198] : memref<5x1x128xf32, #tpu.memory_space<vmem>>, vector<1x1x128xf32>
    %171 = vector.shape_cast %170 : vector<1x1x128xf32> to vector<1x128xf32>
    %172 = vector.broadcast %171 : vector<1x128xf32> to vector<64x128xf32>
    %173 = arith.addf %169, %172 : vector<64x128xf32>
    %c0_199 = arith.constant 0 : index
    %c0_200 = arith.constant 0 : index
    %c0_201 = arith.constant 0 : index
    %c0_202 = arith.constant 0 : index
    %174 = vector.load %arg6[%c0_199, %c0_200, %c0_201, %c0_202] : memref<1x8x8x128xf32, #tpu.memory_space<vmem>>, vector<1x8x8x128xf32>
    %cst_203 = arith.constant 5.000000e-01 : f32
    %175 = vector.broadcast %cst_203 : f32 to vector<64x128xf32>
    %176 = arith.mulf %173, %175 : vector<64x128xf32>
    %177 = vector.shape_cast %176 : vector<64x128xf32> to vector<1x8x8x128xf32>
    %178 = arith.addf %174, %177 : vector<1x8x8x128xf32>
    %c0_204 = arith.constant 0 : index
    %c0_205 = arith.constant 0 : index
    %c0_206 = arith.constant 0 : index
    %c0_207 = arith.constant 0 : index
    %179 = vector.load %arg6[%c0_204, %c0_205, %c0_206, %c0_207] : memref<1x8x8x128xf32, #tpu.memory_space<vmem>>, vector<1x8x8x128xf32>
    tpu.vector_store %arg6[%c0_204, %c0_205, %c0_206, %c0_207], %178 {strides = array<i32>} : memref<1x8x8x128xf32, #tpu.memory_space<vmem>>, vector<1x8x8x128xf32>,
    %c4_208 = arith.constant 4 : index
    %180 = memref.load %arg1[%c4_208] : memref<6xf32, #tpu.memory_space<smem>>
    %181 = vector.broadcast %180 : f32 to vector<64x128xf32>
    %182 = arith.mulf %181, %19 : vector<64x128xf32>
    %c5_209 = arith.constant 5 : index
    %183 = memref.load %arg1[%c5_209] : memref<6xf32, #tpu.memory_space<smem>>
    %184 = vector.broadcast %183 : f32 to vector<64x128xf32>
    %185 = arith.mulf %184, %96 : vector<64x128xf32>
    %186 = arith.addf %182, %185 : vector<64x128xf32>
    %cst_210 = arith.constant 0.000000e+00 : f32
    %187 = vector.broadcast %cst_210 : f32 to vector<64x128xf32>
    %188 = arith.maximumf %186, %187 : vector<64x128xf32>
    %189 = vector.shape_cast %188 : vector<64x128xf32> to vector<1x8x8x128xf32>
    %c0_211 = arith.constant 0 : index
    %c1_212 = arith.constant 1 : index
    %c1_213 = arith.constant 1 : index
    %c0_214 = arith.constant 0 : index
    %190 = vector.load %arg7[%c0_211, %c1_212, %c1_213, %c0_214] : memref<1x10x10x128xf32, #tpu.memory_space<vmem>>, vector<1x8x8x128xf32>
    tpu.vector_store %arg7[%c0_211, %c1_212, %c1_213, %c0_214], %189 {strides = array<i32>} : memref<1x10x10x128xf32, #tpu.memory_space<vmem>>, vector<1x8x8x128xf32>,
    %c0_215 = arith.constant 0 : index
    %c0_216 = arith.constant 0 : index
    %c0_217 = arith.constant 0 : index
    %c0_218 = arith.constant 0 : index
    %191 = vector.load %arg7[%c0_215, %c0_216, %c0_217, %c0_218] : memref<1x10x10x128xf32, #tpu.memory_space<vmem>>, vector<1x8x8x128xf32>
    %192 = vector.shape_cast %191 : vector<1x8x8x128xf32> to vector<64x128xf32>
    %193 = arith.truncf %192 : vector<64x128xf32> to vector<64x128xbf16>
    %c2_219 = arith.constant 2 : index
    %c0_220 = arith.constant 0 : index
    %c0_221 = arith.constant 0 : index
    %c0_222 = arith.constant 0 : index
    %194 = vector.load %arg5[%c2_219, %c0_220, %c0_221, %c0_222] : memref<3x9x128x128xbf16, #tpu.memory_space<vmem>>, vector<1x1x128x128xbf16>
    %195 = vector.shape_cast %194 : vector<1x1x128x128xbf16> to vector<128x128xbf16>
    %cst_223 = arith.constant dense<0.000000e+00> : vector<64x128xf32>
    %196 = tpu.matmul %193, %195, %cst_223 {dimension_numbers = #tpu.dot_dimension_numbers<[1], [0], [0], [1], [0, 0, 1, 1], [], []>} : vector<64x128xbf16>, vector<128x128xbf16>, vector<64x128xf32> -> vector<64x128xf32>
    %c0_224 = arith.constant 0 : index
    %c0_225 = arith.constant 0 : index
    %c1_226 = arith.constant 1 : index
    %c0_227 = arith.constant 0 : index
    %197 = vector.load %arg7[%c0_224, %c0_225, %c1_226, %c0_227] : memref<1x10x10x128xf32, #tpu.memory_space<vmem>>, vector<1x8x8x128xf32>
    %198 = vector.shape_cast %197 : vector<1x8x8x128xf32> to vector<64x128xf32>
    %199 = arith.truncf %198 : vector<64x128xf32> to vector<64x128xbf16>
    %c2_228 = arith.constant 2 : index
    %c1_229 = arith.constant 1 : index
    %c0_230 = arith.constant 0 : index
    %c0_231 = arith.constant 0 : index
    %200 = vector.load %arg5[%c2_228, %c1_229, %c0_230, %c0_231] : memref<3x9x128x128xbf16, #tpu.memory_space<vmem>>, vector<1x1x128x128xbf16>
    %201 = vector.shape_cast %200 : vector<1x1x128x128xbf16> to vector<128x128xbf16>
    %cst_232 = arith.constant dense<0.000000e+00> : vector<64x128xf32>
    %202 = tpu.matmul %199, %201, %cst_232 {dimension_numbers = #tpu.dot_dimension_numbers<[1], [0], [0], [1], [0, 0, 1, 1], [], []>} : vector<64x128xbf16>, vector<128x128xbf16>, vector<64x128xf32> -> vector<64x128xf32>
    %203 = arith.addf %196, %202 : vector<64x128xf32>
    %c0_233 = arith.constant 0 : index
    %c0_234 = arith.constant 0 : index
    %c2_235 = arith.constant 2 : index
    %c0_236 = arith.constant 0 : index
    %204 = vector.load %arg7[%c0_233, %c0_234, %c2_235, %c0_236] : memref<1x10x10x128xf32, #tpu.memory_space<vmem>>, vector<1x8x8x128xf32>
    %205 = vector.shape_cast %204 : vector<1x8x8x128xf32> to vector<64x128xf32>
    %206 = arith.truncf %205 : vector<64x128xf32> to vector<64x128xbf16>
    %c2_237 = arith.constant 2 : index
    %c2_238 = arith.constant 2 : index
    %c0_239 = arith.constant 0 : index
    %c0_240 = arith.constant 0 : index
    %207 = vector.load %arg5[%c2_237, %c2_238, %c0_239, %c0_240] : memref<3x9x128x128xbf16, #tpu.memory_space<vmem>>, vector<1x1x128x128xbf16>
    %208 = vector.shape_cast %207 : vector<1x1x128x128xbf16> to vector<128x128xbf16>
    %cst_241 = arith.constant dense<0.000000e+00> : vector<64x128xf32>
    %209 = tpu.matmul %206, %208, %cst_241 {dimension_numbers = #tpu.dot_dimension_numbers<[1], [0], [0], [1], [0, 0, 1, 1], [], []>} : vector<64x128xbf16>, vector<128x128xbf16>, vector<64x128xf32> -> vector<64x128xf32>
    %210 = arith.addf %203, %209 : vector<64x128xf32>
    %c0_242 = arith.constant 0 : index
    %c1_243 = arith.constant 1 : index
    %c0_244 = arith.constant 0 : index
    %c0_245 = arith.constant 0 : index
    %211 = vector.load %arg7[%c0_242, %c1_243, %c0_244, %c0_245] : memref<1x10x10x128xf32, #tpu.memory_space<vmem>>, vector<1x8x8x128xf32>
    %212 = vector.shape_cast %211 : vector<1x8x8x128xf32> to vector<64x128xf32>
    %213 = arith.truncf %212 : vector<64x128xf32> to vector<64x128xbf16>
    %c2_246 = arith.constant 2 : index
    %c3_247 = arith.constant 3 : index
    %c0_248 = arith.constant 0 : index
    %c0_249 = arith.constant 0 : index
    %214 = vector.load %arg5[%c2_246, %c3_247, %c0_248, %c0_249] : memref<3x9x128x128xbf16, #tpu.memory_space<vmem>>, vector<1x1x128x128xbf16>
    %215 = vector.shape_cast %214 : vector<1x1x128x128xbf16> to vector<128x128xbf16>
    %cst_250 = arith.constant dense<0.000000e+00> : vector<64x128xf32>
    %216 = tpu.matmul %213, %215, %cst_250 {dimension_numbers = #tpu.dot_dimension_numbers<[1], [0], [0], [1], [0, 0, 1, 1], [], []>} : vector<64x128xbf16>, vector<128x128xbf16>, vector<64x128xf32> -> vector<64x128xf32>
    %217 = arith.addf %210, %216 : vector<64x128xf32>
    %c0_251 = arith.constant 0 : index
    %c1_252 = arith.constant 1 : index
    %c1_253 = arith.constant 1 : index
    %c0_254 = arith.constant 0 : index
    %218 = vector.load %arg7[%c0_251, %c1_252, %c1_253, %c0_254] : memref<1x10x10x128xf32, #tpu.memory_space<vmem>>, vector<1x8x8x128xf32>
    %219 = vector.shape_cast %218 : vector<1x8x8x128xf32> to vector<64x128xf32>
    %220 = arith.truncf %219 : vector<64x128xf32> to vector<64x128xbf16>
    %c2_255 = arith.constant 2 : index
    %c4_256 = arith.constant 4 : index
    %c0_257 = arith.constant 0 : index
    %c0_258 = arith.constant 0 : index
    %221 = vector.load %arg5[%c2_255, %c4_256, %c0_257, %c0_258] : memref<3x9x128x128xbf16, #tpu.memory_space<vmem>>, vector<1x1x128x128xbf16>
    %222 = vector.shape_cast %221 : vector<1x1x128x128xbf16> to vector<128x128xbf16>
    %cst_259 = arith.constant dense<0.000000e+00> : vector<64x128xf32>
    %223 = tpu.matmul %220, %222, %cst_259 {dimension_numbers = #tpu.dot_dimension_numbers<[1], [0], [0], [1], [0, 0, 1, 1], [], []>} : vector<64x128xbf16>, vector<128x128xbf16>, vector<64x128xf32> -> vector<64x128xf32>
    %224 = arith.addf %217, %223 : vector<64x128xf32>
    %c0_260 = arith.constant 0 : index
    %c1_261 = arith.constant 1 : index
    %c2_262 = arith.constant 2 : index
    %c0_263 = arith.constant 0 : index
    %225 = vector.load %arg7[%c0_260, %c1_261, %c2_262, %c0_263] : memref<1x10x10x128xf32, #tpu.memory_space<vmem>>, vector<1x8x8x128xf32>
    %226 = vector.shape_cast %225 : vector<1x8x8x128xf32> to vector<64x128xf32>
    %227 = arith.truncf %226 : vector<64x128xf32> to vector<64x128xbf16>
    %c2_264 = arith.constant 2 : index
    %c5_265 = arith.constant 5 : index
    %c0_266 = arith.constant 0 : index
    %c0_267 = arith.constant 0 : index
    %228 = vector.load %arg5[%c2_264, %c5_265, %c0_266, %c0_267] : memref<3x9x128x128xbf16, #tpu.memory_space<vmem>>, vector<1x1x128x128xbf16>
    %229 = vector.shape_cast %228 : vector<1x1x128x128xbf16> to vector<128x128xbf16>
    %cst_268 = arith.constant dense<0.000000e+00> : vector<64x128xf32>
    %230 = tpu.matmul %227, %229, %cst_268 {dimension_numbers = #tpu.dot_dimension_numbers<[1], [0], [0], [1], [0, 0, 1, 1], [], []>} : vector<64x128xbf16>, vector<128x128xbf16>, vector<64x128xf32> -> vector<64x128xf32>
    %231 = arith.addf %224, %230 : vector<64x128xf32>
    %c0_269 = arith.constant 0 : index
    %c2_270 = arith.constant 2 : index
    %c0_271 = arith.constant 0 : index
    %c0_272 = arith.constant 0 : index
    %232 = vector.load %arg7[%c0_269, %c2_270, %c0_271, %c0_272] : memref<1x10x10x128xf32, #tpu.memory_space<vmem>>, vector<1x8x8x128xf32>
    %233 = vector.shape_cast %232 : vector<1x8x8x128xf32> to vector<64x128xf32>
    %234 = arith.truncf %233 : vector<64x128xf32> to vector<64x128xbf16>
    %c2_273 = arith.constant 2 : index
    %c6_274 = arith.constant 6 : index
    %c0_275 = arith.constant 0 : index
    %c0_276 = arith.constant 0 : index
    %235 = vector.load %arg5[%c2_273, %c6_274, %c0_275, %c0_276] : memref<3x9x128x128xbf16, #tpu.memory_space<vmem>>, vector<1x1x128x128xbf16>
    %236 = vector.shape_cast %235 : vector<1x1x128x128xbf16> to vector<128x128xbf16>
    %cst_277 = arith.constant dense<0.000000e+00> : vector<64x128xf32>
    %237 = tpu.matmul %234, %236, %cst_277 {dimension_numbers = #tpu.dot_dimension_numbers<[1], [0], [0], [1], [0, 0, 1, 1], [], []>} : vector<64x128xbf16>, vector<128x128xbf16>, vector<64x128xf32> -> vector<64x128xf32>
    %238 = arith.addf %231, %237 : vector<64x128xf32>
    %c0_278 = arith.constant 0 : index
    %c2_279 = arith.constant 2 : index
    %c1_280 = arith.constant 1 : index
    %c0_281 = arith.constant 0 : index
    %239 = vector.load %arg7[%c0_278, %c2_279, %c1_280, %c0_281] : memref<1x10x10x128xf32, #tpu.memory_space<vmem>>, vector<1x8x8x128xf32>
    %240 = vector.shape_cast %239 : vector<1x8x8x128xf32> to vector<64x128xf32>
    %241 = arith.truncf %240 : vector<64x128xf32> to vector<64x128xbf16>
    %c2_282 = arith.constant 2 : index
    %c7_283 = arith.constant 7 : index
    %c0_284 = arith.constant 0 : index
    %c0_285 = arith.constant 0 : index
    %242 = vector.load %arg5[%c2_282, %c7_283, %c0_284, %c0_285] : memref<3x9x128x128xbf16, #tpu.memory_space<vmem>>, vector<1x1x128x128xbf16>
    %243 = vector.shape_cast %242 : vector<1x1x128x128xbf16> to vector<128x128xbf16>
    %cst_286 = arith.constant dense<0.000000e+00> : vector<64x128xf32>
    %244 = tpu.matmul %241, %243, %cst_286 {dimension_numbers = #tpu.dot_dimension_numbers<[1], [0], [0], [1], [0, 0, 1, 1], [], []>} : vector<64x128xbf16>, vector<128x128xbf16>, vector<64x128xf32> -> vector<64x128xf32>
    %245 = arith.addf %238, %244 : vector<64x128xf32>
    %c0_287 = arith.constant 0 : index
    %c2_288 = arith.constant 2 : index
    %c2_289 = arith.constant 2 : index
    %c0_290 = arith.constant 0 : index
    %246 = vector.load %arg7[%c0_287, %c2_288, %c2_289, %c0_290] : memref<1x10x10x128xf32, #tpu.memory_space<vmem>>, vector<1x8x8x128xf32>
    %247 = vector.shape_cast %246 : vector<1x8x8x128xf32> to vector<64x128xf32>
    %248 = arith.truncf %247 : vector<64x128xf32> to vector<64x128xbf16>
    %c2_291 = arith.constant 2 : index
    %c8_292 = arith.constant 8 : index
    %c0_293 = arith.constant 0 : index
    %c0_294 = arith.constant 0 : index
    %249 = vector.load %arg5[%c2_291, %c8_292, %c0_293, %c0_294] : memref<3x9x128x128xbf16, #tpu.memory_space<vmem>>, vector<1x1x128x128xbf16>
    %250 = vector.shape_cast %249 : vector<1x1x128x128xbf16> to vector<128x128xbf16>
    %cst_295 = arith.constant dense<0.000000e+00> : vector<64x128xf32>
    %251 = tpu.matmul %248, %250, %cst_295 {dimension_numbers = #tpu.dot_dimension_numbers<[1], [0], [0], [1], [0, 0, 1, 1], [], []>} : vector<64x128xbf16>, vector<128x128xbf16>, vector<64x128xf32> -> vector<64x128xf32>
    %252 = arith.addf %245, %251 : vector<64x128xf32>
    %c4_296 = arith.constant 4 : index
    %c0_297 = arith.constant 0 : index
    %c0_298 = arith.constant 0 : index
    %253 = vector.load %arg3[%c4_296, %c0_297, %c0_298] : memref<5x1x128xf32, #tpu.memory_space<vmem>>, vector<1x1x128xf32>
    %254 = vector.shape_cast %253 : vector<1x1x128xf32> to vector<1x128xf32>
    %255 = vector.broadcast %254 : vector<1x128xf32> to vector<64x128xf32>
    %256 = arith.addf %252, %255 : vector<64x128xf32>
    %c0_299 = arith.constant 0 : index
    %c0_300 = arith.constant 0 : index
    %c0_301 = arith.constant 0 : index
    %c0_302 = arith.constant 0 : index
    %257 = vector.load %arg6[%c0_299, %c0_300, %c0_301, %c0_302] : memref<1x8x8x128xf32, #tpu.memory_space<vmem>>, vector<1x8x8x128xf32>
    %cst_303 = arith.constant 5.000000e-01 : f32
    %258 = vector.broadcast %cst_303 : f32 to vector<64x128xf32>
    %259 = arith.mulf %256, %258 : vector<64x128xf32>
    %260 = vector.shape_cast %259 : vector<64x128xf32> to vector<1x8x8x128xf32>
    %261 = arith.addf %257, %260 : vector<1x8x8x128xf32>
    %c0_304 = arith.constant 0 : index
    %c0_305 = arith.constant 0 : index
    %c0_306 = arith.constant 0 : index
    %c0_307 = arith.constant 0 : index
    %262 = vector.load %arg6[%c0_304, %c0_305, %c0_306, %c0_307] : memref<1x8x8x128xf32, #tpu.memory_space<vmem>>, vector<1x8x8x128xf32>
    tpu.vector_store %arg6[%c0_304, %c0_305, %c0_306, %c0_307], %261 {strides = array<i32>} : memref<1x8x8x128xf32, #tpu.memory_space<vmem>>, vector<1x8x8x128xf32>,
    return
  }
  func.func @transform_0(%arg0: i32) -> i32 {
    %c0_i32 = arith.constant 0 : i32
    %c0_i32_0 = arith.constant 0 : i32
    return %c0_i32 : i32
  }
  func.func @transform_1(%arg0: i32) -> (i32, i32, i32) {
    %c0_i32 = arith.constant 0 : i32
    %c0_i32_0 = arith.constant 0 : i32
    %c0_i32_1 = arith.constant 0 : i32
    return %arg0, %c0_i32, %c0_i32_0 : i32, i32, i32
  }
  func.func @transform_2(%arg0: i32) -> (i32, i32, i32) {
    %c0_i32 = arith.constant 0 : i32
    %c0_i32_0 = arith.constant 0 : i32
    %c0_i32_1 = arith.constant 0 : i32
    %c0_i32_2 = arith.constant 0 : i32
    return %c0_i32, %c0_i32_0, %c0_i32_1 : i32, i32, i32
  }
  func.func @transform_3(%arg0: i32) -> (i32, i32, i32) {
    %c0_i32 = arith.constant 0 : i32
    %c0_i32_0 = arith.constant 0 : i32
    %c0_i32_1 = arith.constant 0 : i32
    %c0_i32_2 = arith.constant 0 : i32
    return %c0_i32, %c0_i32_0, %c0_i32_1 : i32, i32, i32
  }
  func.func @transform_4(%arg0: i32) -> (i32, i32, i32, i32) {
    %c0_i32 = arith.constant 0 : i32
    %c0_i32_0 = arith.constant 0 : i32
    %c0_i32_1 = arith.constant 0 : i32
    %c0_i32_2 = arith.constant 0 : i32
    %c0_i32_3 = arith.constant 0 : i32
    return %c0_i32, %c0_i32_0, %c0_i32_1, %c0_i32_2 : i32, i32, i32, i32
  }
  func.func @transform_5(%arg0: i32) -> (i32, i32, i32, i32) {
    %c0_i32 = arith.constant 0 : i32
    %c0_i32_0 = arith.constant 0 : i32
    %c0_i32_1 = arith.constant 0 : i32
    %c0_i32_2 = arith.constant 0 : i32
    return %arg0, %c0_i32, %c0_i32_0, %c0_i32_1 : i32, i32, i32, i32
  }
}

</mosaic_0001>

<llo_original>
// kernel: tpu_custom_call.1
$region0: #{tpu_custom_call.1}
  #allocation0 [shape = 'u32[]', space=smem, size = 0x4, offset = 0x4, fixed_abs, tag = 'smem constant byte address 0x4 - core index']
  #allocation1 [shape = 'u32[144,128]{1,0:T(1,128)}', space=vmem, size = 0x12000, scoped, tag = 'internal scratch']
  #allocation2 [shape = 'f32[1,10,10,128]{3,2,1,0:T(8,128)}', space=vmem, size = 0x14000, scoped, tag = 'scratch operand']
  %s0 = inlined_call_operand.hbm [shape: f32[6], index: 0, kind: input, shape index: {}]
  %s1 = inlined_call_operand.hbm [shape: bf16[2,64,128], index: 1, kind: input, shape index: {}]
  %s2 = inlined_call_operand.hbm [shape: f32[5,1,128], index: 2, kind: input, shape index: {}]
  %s3 = inlined_call_operand.hbm [shape: bf16[2,128,128], index: 3, kind: input, shape index: {}]
  %s4 = inlined_call_operand.hbm [shape: bf16[3,9,128,128], index: 4, kind: input, shape index: {}]
  %s5 = inlined_call_operand.hbm [shape: f32[2,8,8,128], index: 5, kind: output, shape index: {}]
  %s6 = sld [smem:[#allocation0]]
  $region73: #{tpu_custom_call.1} parent=0
    _
  %s8 = ssub.s32 1, %s6
  %s9 = scalar_select 0, %s8, %s6
  $region1: #{tpu_custom_call.1} parent=0
    #allocation3 [shape = 'u8[512]{0}', space=smem, size = 0x200, scoped, tag = 'input window, operand 0, single buffered']
    #allocation4 [shape = 's32[2]{0}', space=sflag, size = 0x8, scoped, tag = 'scoped memory for tpu_custom_call.1']
    #allocation5 [shape = 's32[2]{0}', space=sflag, size = 0x8, scoped, tag = 'scoped memory for tpu_custom_call.1']
    #allocation6 [shape = 's32[2]{0}', space=sflag, size = 0x8, scoped, tag = 'scoped memory for tpu_custom_call.1']
    #allocation7 [shape = 'u8[32768]{0}', space=vmem, size = 0x8000, scoped, tag = 'input window, operand 1']
    #allocation8 [shape = 'u8[2560]{0}', space=vmem, size = 0xc00, scoped, tag = 'input window, operand 2, single buffered']
    #allocation9 [shape = 's32[1]{0}', space=sflag, size = 0x4, scoped, tag = 'scoped memory for tpu_custom_call.1']
    #allocation10 [shape = 'u8[65536]{0}', space=vmem, size = 0x10000, scoped, tag = 'input window, operand 3, single buffered']
    #allocation11 [shape = 'u8[884736]{0}', space=vmem, size = 0xd8000, scoped, tag = 'input window, operand 4, single buffered']
    #allocation12 [shape = 's32[1]{0}', space=sflag, size = 0x4, scoped, tag = 'scoped memory for tpu_custom_call.1']
    #allocation13 [shape = 'u8[65536]{0}', space=vmem, size = 0x10000, scoped, tag = 'output window, operand 0']
    %10 = vsyncpa [#allocation6], 0
    %11 = vsyncpa [#allocation4], 0
    %s12 = scalar_lea.sflag [#allocation4], 1
    %13 = vsyncpa %s12, 0
    %14 = vsyncpa [#allocation9], 0
    %15 = vsyncpa [#allocation12], 0
    %16 = vsyncpa [#allocation5], 0
    %s17 = scalar_lea.sflag [#allocation5], 1
    %18 = vsyncpa %s17, 0
    loop: start=0, step=1, limit=4
    $region2: #{tpu_custom_call.1} parent=1 // loop_pre_header
      _
    $region3: #{tpu_custom_call.1} parent=1 // loop_header
      %s20 = sphi 0, %s24
      %p21 = scmp.ge.s32.totalorder %s20, 4
      %s28 = sphi 0, %s28
      %s30 = sphi 0, %s28
      %s31 = sphi 0, %s30
      %s45 = sphi 0, %s31
      %s51 = sphi 0, %s53
      %s54 = sphi 0, %s51
      %s55 = sphi 0, %s54
      %s71 = sphi 0, %s55
      %s75 = sphi 0, %s75
      %s77 = sphi 0, %s75
      %s78 = sphi 0, %s77
      %s92 = sphi 0, %s78
      %s96 = sphi 0, %s96
      %s98 = sphi 0, %s96
      %s99 = sphi 0, %s98
      %s113 = sphi 0, %s99
      %s117 = sphi 0, %s117
      %s119 = sphi 0, %s117
      %s120 = sphi 0, %s119
      %s134 = sphi 0, %s120
      %s140 = sphi 0, %s142
      %s143 = sphi 0, %s140
      %s144 = sphi 0, %s143
      %s160 = sphi 0, %s144
    $region4: #{tpu_custom_call.1} parent=1 // loop_header_branch
      %23 = sbr.rel (%p21) target = $region8
    $region5: #{tpu_custom_call.1} parent=1 // loop_body
      %s25 = ssub.s32 %s20, 1
      %s26 = ssub.s32 %s20, 2
      %s27 = sadd.s32 %s20, 1
      %s29 = sadd.s32 %s28, 1
      %p32 = scmp.eq.s32.totalorder %s20, 1
      %p33 = scmp.ne.s32.totalorder %s28, %s30
      %p34 = scmp.eq.s32.totalorder %s20, 0
      %p35 = por %p33, %p34
      %p36 = scmp.ne.s32.totalorder %s28, %s30
      %p37 = scmp.eq.s32.totalorder %s25, 1
      %p38 = por %p36, %p37
      %p39 = scmp.ne.s32.totalorder %s30, %s31
      %p40 = scmp.eq.s32.totalorder %s25, 0
      %p41 = por %p39, %p40
      %p42 = scmp.ne.s32.totalorder %s30, %s31
      %p43 = scmp.eq.s32.totalorder %s26, 1
      %p44 = por %p42, %p43
      %p46 = scmp.ne.s32.totalorder %s31, %s45
      %p47 = scmp.eq.s32.totalorder %s26, 0
      %p48 = por %p46, %p47
      %s49 = ssub.s32 %s20, %s27
      %p50 = scmp.eq.s32.totalorder %s49, 0
      %s52 = sadd.s32 %s51, 1
      %s53 = scalar_select %p50, %s51, %s52
      %p56 = pneg %p50
      %p57 = scmp.eq.s32.totalorder %s20, 1
      %p58 = por %p56, %p57
      %p59 = scmp.ne.s32.totalorder %s51, %s54
      %p60 = scmp.eq.s32.totalorder %s20, 0
      %p61 = por %p59, %p60
      %p62 = scmp.ne.s32.totalorder %s51, %s54
      %p63 = scmp.eq.s32.totalorder %s25, 1
      %p64 = por %p62, %p63
      %p65 = scmp.ne.s32.totalorder %s54, %s55
      %p66 = scmp.eq.s32.totalorder %s25, 0
      %p67 = por %p65, %p66
      %p68 = scmp.ne.s32.totalorder %s54, %s55
      %p69 = scmp.eq.s32.totalorder %s26, 1
      %p70 = por %p68, %p69
      %p72 = scmp.ne.s32.totalorder %s55, %s71
      %p73 = scmp.eq.s32.totalorder %s26, 0
      %p74 = por %p72, %p73
      %s76 = sadd.s32 %s75, 1
      %p79 = scmp.eq.s32.totalorder %s20, 1
      %p80 = scmp.ne.s32.totalorder %s75, %s77
      %p81 = scmp.eq.s32.totalorder %s20, 0
      %p82 = por %p80, %p81
      %p83 = scmp.ne.s32.totalorder %s75, %s77
      %p84 = scmp.eq.s32.totalorder %s25, 1
      %p85 = por %p83, %p84
      %p86 = scmp.ne.s32.totalorder %s77, %s78
      %p87 = scmp.eq.s32.totalorder %s25, 0
      %p88 = por %p86, %p87
      %p89 = scmp.ne.s32.totalorder %s77, %s78
      %p90 = scmp.eq.s32.totalorder %s26, 1
      %p91 = por %p89, %p90
      %p93 = scmp.ne.s32.totalorder %s78, %s92
      %p94 = scmp.eq.s32.totalorder %s26, 0
      %p95 = por %p93, %p94
      %s97 = sadd.s32 %s96, 1
      %p100 = scmp.eq.s32.totalorder %s20, 1
      %p101 = scmp.ne.s32.totalorder %s96, %s98
      %p102 = scmp.eq.s32.totalorder %s20, 0
      %p103 = por %p101, %p102
      %p104 = scmp.ne.s32.totalorder %s96, %s98
      %p105 = scmp.eq.s32.totalorder %s25, 1
      %p106 = por %p104, %p105
      %p107 = scmp.ne.s32.totalorder %s98, %s99
      %p108 = scmp.eq.s32.totalorder %s25, 0
      %p109 = por %p107, %p108
      %p110 = scmp.ne.s32.totalorder %s98, %s99
      %p111 = scmp.eq.s32.totalorder %s26, 1
      %p112 = por %p110, %p111
      %p114 = scmp.ne.s32.totalorder %s99, %s113
      %p115 = scmp.eq.s32.totalorder %s26, 0
      %p116 = por %p114, %p115
      %s118 = sadd.s32 %s117, 1
      %p121 = scmp.eq.s32.totalorder %s20, 1
      %p122 = scmp.ne.s32.totalorder %s117, %s119
      %p123 = scmp.eq.s32.totalorder %s20, 0
      %p124 = por %p122, %p123
      %p125 = scmp.ne.s32.totalorder %s117, %s119
      %p126 = scmp.eq.s32.totalorder %s25, 1
      %p127 = por %p125, %p126
      %p128 = scmp.ne.s32.totalorder %s119, %s120
      %p129 = scmp.eq.s32.totalorder %s25, 0
      %p130 = por %p128, %p129
      %p131 = scmp.ne.s32.totalorder %s119, %s120
      %p132 = scmp.eq.s32.totalorder %s26, 1
      %p133 = por %p131, %p132
      %p135 = scmp.ne.s32.totalorder %s120, %s134
      %p136 = scmp.eq.s32.totalorder %s26, 0
      %p137 = por %p135, %p136
      %s138 = ssub.s32 %s20, %s27
      %p139 = scmp.eq.s32.totalorder %s138, 0
      %s141 = sadd.s32 %s140, 1
      %s142 = scalar_select %p139, %s140, %s141
      %p145 = pneg %p139
      %p146 = scmp.eq.s32.totalorder %s20, 1
      %p147 = por %p145, %p146
      %p148 = scmp.ne.s32.totalorder %s140, %s143
      %p149 = scmp.eq.s32.totalorder %s20, 0
      %p150 = por %p148, %p149
      %p151 = scmp.ne.s32.totalorder %s140, %s143
      %p152 = scmp.eq.s32.totalorder %s25, 1
      %p153 = por %p151, %p152
      %p154 = scmp.ne.s32.totalorder %s143, %s144
      %p155 = scmp.eq.s32.totalorder %s25, 0
      %p156 = por %p154, %p155
      %p157 = scmp.ne.s32.totalorder %s143, %s144
      %p158 = scmp.eq.s32.totalorder %s26, 1
      %p159 = por %p157, %p158
      %p161 = scmp.ne.s32.totalorder %s144, %s160
      %p162 = scmp.eq.s32.totalorder %s26, 0
      %p163 = por %p161, %p162
      %p164 = scmp.le.s32.totalorder 1, %s20
      %p165 = scmp.lt.s32.totalorder %s20, 3
      %p166 = pnand %p164, %p165
      %p167 = pneg %p166
      // Predicated region
      $region9: #{tpu_custom_call.1} parent=5 // pred_check
        _
      $region10: #{tpu_custom_call.1} parent=5 // pred_check_branch
        %169 = sbr.rel (%p166) target = $region12
      $region11: #{tpu_custom_call.1} parent=5 // pred_region
        %s170 = ssub.s32 %s20, 1
        // Predicated region
        $region13: #{tpu_custom_call.1} parent=11 // pred_check
          %p171 = pneg %p41
        $region14: #{tpu_custom_call.1} parent=11 // pred_check_branch
          %173 = sbr.rel (%p171) target = $region16
        $region15: #{tpu_custom_call.1} parent=11 // pred_region
          %s175 = ssub.s32 16, 16
          %176 = vsyncadd [#allocation6], %s175
          %179 = dma.hbm_to_smem %s0, 16, [#allocation3], [#allocation6]
        $region16: #{tpu_custom_call.1} parent=11 // pred_fallthru
          _
        // Predicated region
        $region17: #{tpu_custom_call.1} parent=11 // pred_check
          %p180 = pneg %p88
        $region18: #{tpu_custom_call.1} parent=11 // pred_check_branch
          %182 = sbr.rel (%p180) target = $region20
        $region19: #{tpu_custom_call.1} parent=11 // pred_region
          %s184 = ssub.s32 80, 80
          %185 = vsyncadd [#allocation9], %s184
          %s186 = sshll.u32 [#allocation8], 4
          %s187 = int_to_ptr.vmem [resolvable:$true] %s186
          %192 = dma.hbm_to_vmem [thread:$0]  %s2, 80, %s187, [#allocation9], 16, 16, 1
        $region20: #{tpu_custom_call.1} parent=11 // pred_fallthru
          _
        // Predicated region
        $region21: #{tpu_custom_call.1} parent=11 // pred_check
          %p193 = pneg %p109
        $region22: #{tpu_custom_call.1} parent=11 // pred_check_branch
          %195 = sbr.rel (%p193) target = $region24
        $region23: #{tpu_custom_call.1} parent=11 // pred_region
          %s197 = ssub.s32 2048, 2048
          %198 = vsyncadd [#allocation9], %s197
          %s199 = sshll.u32 [#allocation10], 4
          %s200 = int_to_ptr.vmem [resolvable:$true] %s199
          %205 = dma.hbm_to_vmem [thread:$0]  %s3, 2048, %s200, [#allocation9], 64, 64, 4
        $region24: #{tpu_custom_call.1} parent=11 // pred_fallthru
          _
        // Predicated region
        $region25: #{tpu_custom_call.1} parent=11 // pred_check
          %p206 = pneg %p130
        $region26: #{tpu_custom_call.1} parent=11 // pred_check_branch
          %208 = sbr.rel (%p206) target = $region28
        $region27: #{tpu_custom_call.1} parent=11 // pred_region
          %s210 = ssub.s32 27648, 27648
          %211 = vsyncadd [#allocation12], %s210
          %s212 = sshll.u32 [#allocation11], 4
          %s213 = int_to_ptr.vmem [resolvable:$true] %s212
          %218 = dma.hbm_to_vmem [thread:$0]  %s4, 27648, %s213, [#allocation12], 64, 64, 4
        $region28: #{tpu_custom_call.1} parent=11 // pred_fallthru
          _
      $region12: #{tpu_custom_call.1} parent=5 // pred_fallthru
        _
      %p219 = scmp.lt.s32.totalorder %s20, 2
      // Predicated region
      $region29: #{tpu_custom_call.1} parent=5 // pred_check
        %p220 = pneg %p219
      $region30: #{tpu_custom_call.1} parent=5 // pred_check_branch
        %222 = sbr.rel (%p220) target = $region32
      $region31: #{tpu_custom_call.1} parent=5 // pred_region
        // Predicated region
        $region33: #{tpu_custom_call.1} parent=31 // pred_check
          %p223 = pneg %p61
        $region34: #{tpu_custom_call.1} parent=31 // pred_check_branch
          %225 = sbr.rel (%p223) target = $region36
        $region35: #{tpu_custom_call.1} parent=31 // pred_region
          %s226 = sand.u32 %s51, 1
          %s227 = scalar_lea.sflag [#allocation4], %s226
          %s228 = sand.u32 %s51, 1
          %s229 = smul.addr %s228, 32
          %s230 = scalar_lea.vmem [#allocation7], %s229
          %s232 = ssub.s32 512, 512
          %233 = vsyncadd %s227, %s232
          %s234 = smul.addr %s20, 8
          %s235 = smul.addr %s234, 64
          %s236 = scalar_lea.hbm %s1, %s235
          %s237 = sshll.u32 %s230, 4
          %s238 = int_to_ptr.vmem [resolvable:$true] %s237
          %243 = dma.hbm_to_vmem [thread:$0]  %s236, 512, %s238, %s227, 64, 64, 4
        $region36: #{tpu_custom_call.1} parent=31 // pred_fallthru
          _
      $region32: #{tpu_custom_call.1} parent=5 // pred_fallthru
        _
      %p244 = scmp.le.s32.totalorder 1, %s20
      %p245 = scmp.lt.s32.totalorder %s20, 3
      %p246 = pnand %p244, %p245
      %p247 = pneg %p246
      // Predicated region
      $region37: #{tpu_custom_call.1} parent=5 // pred_check
        _
      $region38: #{tpu_custom_call.1} parent=5 // pred_check_branch
        %249 = sbr.rel (%p246) target = $region40
      $region39: #{tpu_custom_call.1} parent=5 // pred_region
        %s250 = ssub.s32 %s20, 1
        // Predicated region
        $region41: #{tpu_custom_call.1} parent=39 // pred_check
          %p251 = pneg %p41
        $region42: #{tpu_custom_call.1} parent=39 // pred_check_branch
          %253 = sbr.rel (%p251) target = $region44
        $region43: #{tpu_custom_call.1} parent=39 // pred_region
          %254 = dma.done [#allocation6], 16
        $region44: #{tpu_custom_call.1} parent=39 // pred_fallthru
          _
        %s255 = sand.u32 %s54, 1
        %s256 = scalar_lea.sflag [#allocation4], %s255
        %s257 = sand.u32 %s54, 1
        %s258 = smul.addr %s257, 32
        %s259 = scalar_lea.vmem [#allocation7], %s258
        // Predicated region
        $region45: #{tpu_custom_call.1} parent=39 // pred_check
          %p260 = pneg %p67
        $region46: #{tpu_custom_call.1} parent=39 // pred_check_branch
          %262 = sbr.rel (%p260) target = $region48
        $region47: #{tpu_custom_call.1} parent=39 // pred_region
          %263 = dma.done %s256, 512
        $region48: #{tpu_custom_call.1} parent=39 // pred_fallthru
          _
        // Predicated region
        $region49: #{tpu_custom_call.1} parent=39 // pred_check
          %p264 = pneg %p88
        $region50: #{tpu_custom_call.1} parent=39 // pred_check_branch
          %266 = sbr.rel (%p264) target = $region52
        $region51: #{tpu_custom_call.1} parent=39 // pred_region
          %267 = dma.done [#allocation9], 80
        $region52: #{tpu_custom_call.1} parent=39 // pred_fallthru
          _
        // Predicated region
        $region53: #{tpu_custom_call.1} parent=39 // pred_check
          %p268 = pneg %p109
        $region54: #{tpu_custom_call.1} parent=39 // pred_check_branch
          %270 = sbr.rel (%p268) target = $region56
        $region55: #{tpu_custom_call.1} parent=39 // pred_region
          %271 = dma.done [#allocation9], 2048
        $region56: #{tpu_custom_call.1} parent=39 // pred_fallthru
          _
        // Predicated region
        $region57: #{tpu_custom_call.1} parent=39 // pred_check
          %p272 = pneg %p130
        $region58: #{tpu_custom_call.1} parent=39 // pred_check_branch
          %274 = sbr.rel (%p272) target = $region60
        $region59: #{tpu_custom_call.1} parent=39 // pred_region
          %275 = dma.done [#allocation12], 27648
        $region60: #{tpu_custom_call.1} parent=39 // pred_fallthru
          _
        %276 = sfence
        %p277 = pneg %p41
        %p278 = pneg %p38
        %s279 = sand.u32 %s54, 1
        %s280 = scalar_lea.sflag [#allocation4], %s279
        %s281 = sand.u32 %s54, 1
        %s282 = smul.addr %s281, 32
        %s283 = scalar_lea.vmem [#allocation7], %s282
        %p284 = pneg %p67
        %p285 = pneg %p64
        %p286 = pneg %p88
        %p287 = pneg %p85
        %p288 = pneg %p109
        %p289 = pneg %p106
        %p290 = pneg %p130
        %p291 = pneg %p127
        %p292 = pneg %p156
        %p293 = pneg %p153
        %s294 = sand.u32 %s143, 1
        %s295 = scalar_lea.sflag [#allocation5], %s294
        %s296 = sand.u32 %s143, 1
        %s297 = smul.addr %s296, 64
        %s298 = scalar_lea.vmem [#allocation13], %s297
        %300 = vst [vmem:[#allocation2] sm:$0xff] 0.0
        %301 = vst [vmem:[#allocation2 + $0x8] sm:$0x3] 0.0
        %302 = vst [vmem:[#allocation2 + $0x10] sm:$0xff] 0.0
        %303 = vst [vmem:[#allocation2 + $0x18] sm:$0x3] 0.0
        %304 = vst [vmem:[#allocation2 + $0x20] sm:$0xff] 0.0
        %305 = vst [vmem:[#allocation2 + $0x28] sm:$0x3] 0.0
        %306 = vst [vmem:[#allocation2 + $0x30] sm:$0xff] 0.0
        %307 = vst [vmem:[#allocation2 + $0x38] sm:$0x3] 0.0
        %308 = vst [vmem:[#allocation2 + $0x40] sm:$0xff] 0.0
        %309 = vst [vmem:[#allocation2 + $0x48] sm:$0x3] 0.0
        %310 = vst [vmem:[#allocation2 + $0x50] sm:$0xff] 0.0
        %311 = vst [vmem:[#allocation2 + $0x58] sm:$0x3] 0.0
        %312 = vst [vmem:[#allocation2 + $0x60] sm:$0xff] 0.0
        %313 = vst [vmem:[#allocation2 + $0x68] sm:$0x3] 0.0
        %314 = vst [vmem:[#allocation2 + $0x70] sm:$0xff] 0.0
        %315 = vst [vmem:[#allocation2 + $0x78] sm:$0x3] 0.0
        %316 = vst [vmem:[#allocation2 + $0x80] sm:$0xff] 0.0
        %317 = vst [vmem:[#allocation2 + $0x88] sm:$0x3] 0.0
        %318 = vst [vmem:[#allocation2 + $0x90] sm:$0xff] 0.0
        %319 = vst [vmem:[#allocation2 + $0x98] sm:$0x3] 0.0
        %320 = vst [vmem:[%s298] sm:$0xff] 0.0
        %321 = vst [vmem:[%s298 + $0x8] sm:$0xff] 0.0
        %322 = vst [vmem:[%s298 + $0x10] sm:$0xff] 0.0
        %323 = vst [vmem:[%s298 + $0x18] sm:$0xff] 0.0
        %324 = vst [vmem:[%s298 + $0x20] sm:$0xff] 0.0
        %325 = vst [vmem:[%s298 + $0x28] sm:$0xff] 0.0
        %326 = vst [vmem:[%s298 + $0x30] sm:$0xff] 0.0
        %327 = vst [vmem:[%s298 + $0x38] sm:$0xff] 0.0
        %v328 = vld [vmem:[%s259] sm:$0xf]
        %v329 = vld [vmem:[%s259 + $0x4] sm:$0xf]
        %v330 = vld [vmem:[%s259 + $0x8] sm:$0xf]
        %v331 = vld [vmem:[%s259 + $0xc] sm:$0xf]
        %v332 = vld [vmem:[%s259 + $0x10] sm:$0xf]
        %v333 = vld [vmem:[%s259 + $0x14] sm:$0xf]
        %v334 = vld [vmem:[%s259 + $0x18] sm:$0xf]
        %v335 = vld [vmem:[%s259 + $0x1c] sm:$0xf]
        %v336 = vld [vmem:[#allocation10] sm:$0xf]
        %v337 = vld [vmem:[#allocation10 + $0x4] sm:$0xf]
        %v338 = vld [vmem:[#allocation10 + $0x8] sm:$0xf]
        %v339 = vld [vmem:[#allocation10 + $0xc] sm:$0xf]
        %v340 = vld [vmem:[#allocation10 + $0x10] sm:$0xf]
        %v341 = vld [vmem:[#allocation10 + $0x14] sm:$0xf]
        %v342 = vld [vmem:[#allocation10 + $0x18] sm:$0xf]
        %v343 = vld [vmem:[#allocation10 + $0x1c] sm:$0xf]
        %v344 = vld [vmem:[#allocation10 + $0x20] sm:$0xf]
        %v345 = vld [vmem:[#allocation10 + $0x24] sm:$0xf]
        %v346 = vld [vmem:[#allocation10 + $0x28] sm:$0xf]
        %v347 = vld [vmem:[#allocation10 + $0x2c] sm:$0xf]
        %v348 = vld [vmem:[#allocation10 + $0x30] sm:$0xf]
        %v349 = vld [vmem:[#allocation10 + $0x34] sm:$0xf]
        %v350 = vld [vmem:[#allocation10 + $0x38] sm:$0xf]
        %v351 = vld [vmem:[#allocation10 + $0x3c] sm:$0xf]
        %v352 = vld [vmem:[#allocation8] sm:$0x1]
        %v354 = vlaneseq
        %v355 = vshrl.u32 %v354, 7
        %v356 = vsub.s32 0, %v355
        %v357 = vrot.slane %v352, %v356
        %v367 = vunpack.c.l.b16 %v328
        %v368 = vunpack.c.l.b16 %v329
        %v369 = vunpack.c.l.b16 %v330
        %v370 = vunpack.c.l.b16 %v331
        %v371 = vunpack.c.l.b16 %v332
        %v372 = vunpack.c.l.b16 %v333
        %v373 = vunpack.c.l.b16 %v334
        %v374 = vunpack.c.l.b16 %v335
        %v375 = vpack.c.b16 %v368, %v367
        %v376 = vpack.c.b16 %v370, %v369
        %v377 = vpack.c.b16 %v372, %v371
        %v378 = vpack.c.b16 %v374, %v373
        %v399 = vunpack.c.l.b16 %v336
        %v400 = vunpack.c.l.b16 %v337
        %v401 = vunpack.c.l.b16 %v338
        %v402 = vunpack.c.l.b16 %v339
        %v403 = vunpack.c.l.b16 %v340
        %v404 = vunpack.c.l.b16 %v341
        %v405 = vunpack.c.l.b16 %v342
        %v406 = vunpack.c.l.b16 %v343
        %v407 = vunpack.c.l.b16 %v344
        %v408 = vunpack.c.l.b16 %v345
        %v409 = vunpack.c.l.b16 %v346
        %v410 = vunpack.c.l.b16 %v347
        %v411 = vunpack.c.l.b16 %v348
        %v412 = vunpack.c.l.b16 %v349
        %v413 = vunpack.c.l.b16 %v350
        %v414 = vunpack.c.l.b16 %v351
        %v415 = vpack.c.b16 %v400, %v399
        %v416 = vpack.c.b16 %v402, %v401
        %v417 = vpack.c.b16 %v404, %v403
        %v418 = vpack.c.b16 %v406, %v405
        %v419 = vpack.c.b16 %v408, %v407
        %v420 = vpack.c.b16 %v410, %v409
        %v421 = vpack.c.b16 %v412, %v411
        %v422 = vpack.c.b16 %v414, %v413
        %431 = vmatprep.subr.bf16.mxu0 0
        %432 = vmatpush1.bf16.msra.mxu0 %v422
        %433 = vmatprep.subr.bf16.mxu0 0
        %434 = vmatpush1.bf16.msra.mxu0 %v421
        %435 = vmatprep.subr.bf16.mxu0 0
        %436 = vmatpush1.bf16.msra.mxu0 %v420
        %437 = vmatprep.subr.bf16.mxu0 0
        %438 = vmatpush1.bf16.msra.mxu0 %v419
        %439 = vmatprep.subr.bf16.mxu0 0
        %440 = vmatpush1.bf16.msra.mxu0 %v418
        %441 = vmatprep.subr.bf16.mxu0 0
        %442 = vmatpush1.bf16.msra.mxu0 %v417
        %443 = vmatprep.subr.bf16.mxu0 0
        %444 = vmatpush1.bf16.msra.mxu0 %v416
        %445 = vmatprep.subr.bf16.mxu0 0
        %446 = vmatpush1.bf16.msra.mxu0 %v415
        %447 = vmatprep.subr.bf16.mxu0 0
        %448 = vmatpush2.bf16.msra.mxu0 0
        %449 = vmatprep.subr.bf16.mxu0 0
        %450 = vmatpush2.bf16.msra.mxu0 0
        %451 = vmatprep.subr.bf16.mxu0 0
        %452 = vmatpush2.bf16.msra.mxu0 0
        %453 = vmatprep.subr.bf16.mxu0 0
        %454 = vmatpush2.bf16.msra.mxu0 0
        %455 = vmatprep.subr.bf16.mxu0 0
        %456 = vmatpush2.bf16.msra.mxu0 0
        %457 = vmatprep.subr.bf16.mxu0 0
        %458 = vmatpush2.bf16.msra.mxu0 0
        %459 = vmatprep.subr.bf16.mxu0 0
        %460 = vmatpush2.bf16.msra.mxu0 0
        %461 = vmatprep.subr.bf16.mxu0 0
        %462 = vmatpush2.bf16.msra.mxu0 0
        %463 = vmatprep.mubr.bf16.mxu0 0
        %464 = vmatmul.mubr.bf16.gmra.mxu0 %v375
        %v465 = vpop.f32.mrf.mxu0
        %v466 = vadd.f32 %v357, %v465
        %v467 = vpop.f32.mrf.mxu0
        %v468 = vpop.f32.mrf.mxu0
        %v469 = vadd.f32 %v357, %v468
        %v470 = vpop.f32.mrf.mxu0
        %471 = vmatprep.mubr.bf16.mxu0 0
        %472 = vmatmul.mubr.bf16.gmra.mxu0 %v376
        %v473 = vpop.f32.mrf.mxu0
        %v474 = vadd.f32 %v357, %v473
        %v475 = vpop.f32.mrf.mxu0
        %v476 = vpop.f32.mrf.mxu0
        %v477 = vadd.f32 %v357, %v476
        %v478 = vpop.f32.mrf.mxu0
        %479 = vmatprep.mubr.bf16.mxu0 0
        %480 = vmatmul.mubr.bf16.gmra.mxu0 %v377
        %v481 = vpop.f32.mrf.mxu0
        %v482 = vadd.f32 %v357, %v481
        %v483 = vpop.f32.mrf.mxu0
        %v484 = vpop.f32.mrf.mxu0
        %v485 = vadd.f32 %v357, %v484
        %v486 = vpop.f32.mrf.mxu0
        %487 = vmatprep.mubr.bf16.mxu0 0
        %488 = vmatmul.mubr.bf16.gmra.mxu0 %v378
        %v489 = vpop.f32.mrf.mxu0
        %v490 = vadd.f32 %v357, %v489
        %v491 = vpop.f32.mrf.mxu0
        %v492 = vpop.f32.mrf.mxu0
        %v493 = vadd.f32 %v357, %v492
        %v494 = vpop.f32.mrf.mxu0
        %495 = vdwg.mxu0
        %s496 = scalar_lea.vmem [#allocation10], 64
        %v497 = vld [vmem:[%s496] sm:$0xf]
        %v498 = vld [vmem:[%s496 + $0x4] sm:$0xf]
        %v499 = vld [vmem:[%s496 + $0x8] sm:$0xf]
        %v500 = vld [vmem:[%s496 + $0xc] sm:$0xf]
        %v501 = vld [vmem:[%s496 + $0x10] sm:$0xf]
        %v502 = vld [vmem:[%s496 + $0x14] sm:$0xf]
        %v503 = vld [vmem:[%s496 + $0x18] sm:$0xf]
        %v504 = vld [vmem:[%s496 + $0x1c] sm:$0xf]
        %v505 = vld [vmem:[%s496 + $0x20] sm:$0xf]
        %v506 = vld [vmem:[%s496 + $0x24] sm:$0xf]
        %v507 = vld [vmem:[%s496 + $0x28] sm:$0xf]
        %v508 = vld [vmem:[%s496 + $0x2c] sm:$0xf]
        %v509 = vld [vmem:[%s496 + $0x30] sm:$0xf]
        %v510 = vld [vmem:[%s496 + $0x34] sm:$0xf]
        %v511 = vld [vmem:[%s496 + $0x38] sm:$0xf]
        %v512 = vld [vmem:[%s496 + $0x3c] sm:$0xf]
        %s513 = scalar_lea.vmem [#allocation8], 1
        %v514 = vld [vmem:[%s513] sm:$0x1]
        %v516 = vlaneseq
        %v517 = vshrl.u32 %v516, 7
        %v518 = vsub.s32 0, %v517
        %v519 = vrot.slane %v514, %v518
        %v537 = vunpack.c.l.b16 %v497
        %v538 = vunpack.c.l.b16 %v498
        %v539 = vunpack.c.l.b16 %v499
        %v540 = vunpack.c.l.b16 %v500
        %v541 = vunpack.c.l.b16 %v501
        %v542 = vunpack.c.l.b16 %v502
        %v543 = vunpack.c.l.b16 %v503
        %v544 = vunpack.c.l.b16 %v504
        %v545 = vunpack.c.l.b16 %v505
        %v546 = vunpack.c.l.b16 %v506
        %v547 = vunpack.c.l.b16 %v507
        %v548 = vunpack.c.l.b16 %v508
        %v549 = vunpack.c.l.b16 %v509
        %v550 = vunpack.c.l.b16 %v510
        %v551 = vunpack.c.l.b16 %v511
        %v552 = vunpack.c.l.b16 %v512
        %v553 = vpack.c.b16 %v538, %v537
        %v554 = vpack.c.b16 %v540, %v539
        %v555 = vpack.c.b16 %v542, %v541
        %v556 = vpack.c.b16 %v544, %v543
        %v557 = vpack.c.b16 %v546, %v545
        %v558 = vpack.c.b16 %v548, %v547
        %v559 = vpack.c.b16 %v550, %v549
        %v560 = vpack.c.b16 %v552, %v551
        %569 = vmatprep.subr.bf16.mxu0 0
        %570 = vmatpush1.bf16.msra.mxu0 %v560
        %571 = vmatprep.subr.bf16.mxu0 0
        %572 = vmatpush1.bf16.msra.mxu0 %v559
        %573 = vmatprep.subr.bf16.mxu0 0
        %574 = vmatpush1.bf16.msra.mxu0 %v558
        %575 = vmatprep.subr.bf16.mxu0 0
        %576 = vmatpush1.bf16.msra.mxu0 %v557
        %577 = vmatprep.subr.bf16.mxu0 0
        %578 = vmatpush1.bf16.msra.mxu0 %v556
        %579 = vmatprep.subr.bf16.mxu0 0
        %580 = vmatpush1.bf16.msra.mxu0 %v555
        %581 = vmatprep.subr.bf16.mxu0 0
        %582 = vmatpush1.bf16.msra.mxu0 %v554
        %583 = vmatprep.subr.bf16.mxu0 0
        %584 = vmatpush1.bf16.msra.mxu0 %v553
        %585 = vmatprep.subr.bf16.mxu0 0
        %586 = vmatpush2.bf16.msra.mxu0 0
        %587 = vmatprep.subr.bf16.mxu0 0
        %588 = vmatpush2.bf16.msra.mxu0 0
        %589 = vmatprep.subr.bf16.mxu0 0
        %590 = vmatpush2.bf16.msra.mxu0 0
        %591 = vmatprep.subr.bf16.mxu0 0
        %592 = vmatpush2.bf16.msra.mxu0 0
        %593 = vmatprep.subr.bf16.mxu0 0
        %594 = vmatpush2.bf16.msra.mxu0 0
        %595 = vmatprep.subr.bf16.mxu0 0
        %596 = vmatpush2.bf16.msra.mxu0 0
        %597 = vmatprep.subr.bf16.mxu0 0
        %598 = vmatpush2.bf16.msra.mxu0 0
        %599 = vmatprep.subr.bf16.mxu0 0
        %600 = vmatpush2.bf16.msra.mxu0 0
        %601 = vmatprep.mubr.bf16.mxu0 0
        %602 = vmatmul.mubr.bf16.gmra.mxu0 %v375
        %v603 = vpop.f32.mrf.mxu0
        %v604 = vadd.f32 %v519, %v603
        %v605 = vpop.f32.mrf.mxu0
        %v606 = vpop.f32.mrf.mxu0
        %v607 = vadd.f32 %v519, %v606
        %v608 = vpop.f32.mrf.mxu0
        %609 = vmatprep.mubr.bf16.mxu0 0
        %610 = vmatmul.mubr.bf16.gmra.mxu0 %v376
        %v611 = vpop.f32.mrf.mxu0
        %v612 = vadd.f32 %v519, %v611
        %v613 = vpop.f32.mrf.mxu0
        %v614 = vpop.f32.mrf.mxu0
        %v615 = vadd.f32 %v519, %v614
        %v616 = vpop.f32.mrf.mxu0
        %617 = vmatprep.mubr.bf16.mxu0 0
        %618 = vmatmul.mubr.bf16.gmra.mxu0 %v377
        %v619 = vpop.f32.mrf.mxu0
        %v620 = vadd.f32 %v519, %v619
        %v621 = vpop.f32.mrf.mxu0
        %v622 = vpop.f32.mrf.mxu0
        %v623 = vadd.f32 %v519, %v622
        %v624 = vpop.f32.mrf.mxu0
        %625 = vmatprep.mubr.bf16.mxu0 0
        %626 = vmatmul.mubr.bf16.gmra.mxu0 %v378
        %v627 = vpop.f32.mrf.mxu0
        %v628 = vadd.f32 %v519, %v627
        %v629 = vpop.f32.mrf.mxu0
        %v630 = vpop.f32.mrf.mxu0
        %v631 = vadd.f32 %v519, %v630
        %v632 = vpop.f32.mrf.mxu0
        %633 = vdwg.mxu0
        %s634 = sld [smem:[#allocation3]]
        %v635 = vstv %s634
        %v636 = vmul.f32 %v635, %v466
        %v637 = vmul.f32 %v635, %v469
        %v638 = vmul.f32 %v635, %v474
        %v639 = vmul.f32 %v635, %v477
        %v640 = vmul.f32 %v635, %v482
        %v641 = vmul.f32 %v635, %v485
        %v642 = vmul.f32 %v635, %v490
        %v643 = vmul.f32 %v635, %v493
        %s644 = sld [smem:[#allocation3 + $0x1]]
        %v645 = vstv %s644
        %v646 = vmul.f32 %v645, %v604
        %v647 = vmul.f32 %v645, %v607
        %v648 = vmul.f32 %v645, %v612
        %v649 = vmul.f32 %v645, %v615
        %v650 = vmul.f32 %v645, %v620
        %v651 = vmul.f32 %v645, %v623
        %v652 = vmul.f32 %v645, %v628
        %v653 = vmul.f32 %v645, %v631
        %v654 = vadd.f32 %v636, %v646
        %v655 = vadd.f32 %v637, %v647
        %v656 = vadd.f32 %v638, %v648
        %v657 = vadd.f32 %v639, %v649
        %v658 = vadd.f32 %v640, %v650
        %v659 = vadd.f32 %v641, %v651
        %v660 = vadd.f32 %v642, %v652
        %v661 = vadd.f32 %v643, %v653
        %v662 = vmax.f32 %v654, 0.0
        %v663 = vmax.f32 %v655, 0.0
        %v664 = vmax.f32 %v656, 0.0
        %v665 = vmax.f32 %v657, 0.0
        %v666 = vmax.f32 %v658, 0.0
        %v667 = vmax.f32 %v659, 0.0
        %v668 = vmax.f32 %v660, 0.0
        %v669 = vmax.f32 %v661, 0.0
        %s670 = scalar_lea.vmem [#allocation2], 16
        %671 = vst [vmem:[%s670 + $0x1] sm:$0xff] %v662
        %672 = vst [vmem:[%s670 + $0x11] sm:$0xff] %v663
        %673 = vst [vmem:[%s670 + $0x21] sm:$0xff] %v664
        %674 = vst [vmem:[%s670 + $0x31] sm:$0xff] %v665
        %675 = vst [vmem:[%s670 + $0x41] sm:$0xff] %v666
        %676 = vst [vmem:[%s670 + $0x51] sm:$0xff] %v667
        %677 = vst [vmem:[%s670 + $0x61] sm:$0xff] %v668
        %678 = vst [vmem:[%s670 + $0x71] sm:$0xff] %v669
        %v679 = vld [vmem:[#allocation2] sm:$0xff]
        %v680 = vld [vmem:[#allocation2 + $0x10] sm:$0xff]
        %v681 = vld [vmem:[#allocation2 + $0x20] sm:$0xff]
        %v682 = vld [vmem:[#allocation2 + $0x30] sm:$0xff]
        %v683 = vld [vmem:[#allocation2 + $0x40] sm:$0xff]
        %v684 = vld [vmem:[#allocation2 + $0x50] sm:$0xff]
        %v685 = vld [vmem:[#allocation2 + $0x60] sm:$0xff]
        %v686 = vld [vmem:[#allocation2 + $0x70] sm:$0xff]
        %v687 = vpack.c.bf16 %v680, %v679
        %v688 = vpack.c.bf16 %v682, %v681
        %v689 = vpack.c.bf16 %v684, %v683
        %v690 = vpack.c.bf16 %v686, %v685
        %v691 = vld [vmem:[#allocation11] sm:$0xf]
        %v692 = vld [vmem:[#allocation11 + $0x4] sm:$0xf]
        %v693 = vld [vmem:[#allocation11 + $0x8] sm:$0xf]
        %v694 = vld [vmem:[#allocation11 + $0xc] sm:$0xf]
        %v695 = vld [vmem:[#allocation11 + $0x10] sm:$0xf]
        %v696 = vld [vmem:[#allocation11 + $0x14] sm:$0xf]
        %v697 = vld [vmem:[#allocation11 + $0x18] sm:$0xf]
        %v698 = vld [vmem:[#allocation11 + $0x1c] sm:$0xf]
        %v699 = vld [vmem:[#allocation11 + $0x20] sm:$0xf]
        %v700 = vld [vmem:[#allocation11 + $0x24] sm:$0xf]
        %v701 = vld [vmem:[#allocation11 + $0x28] sm:$0xf]
        %v702 = vld [vmem:[#allocation11 + $0x2c] sm:$0xf]
        %v703 = vld [vmem:[#allocation11 + $0x30] sm:$0xf]
        %v704 = vld [vmem:[#allocation11 + $0x34] sm:$0xf]
        %v705 = vld [vmem:[#allocation11 + $0x38] sm:$0xf]
        %v706 = vld [vmem:[#allocation11 + $0x3c] sm:$0xf]
        %v707 = vld [vmem:[#allocation2 + $0x1] sm:$0xff]
        %v708 = vld [vmem:[#allocation2 + $0x11] sm:$0xff]
        %v709 = vld [vmem:[#allocation2 + $0x21] sm:$0xff]
        %v710 = vld [vmem:[#allocation2 + $0x31] sm:$0xff]
        %v711 = vld [vmem:[#allocation2 + $0x41] sm:$0xff]
        %v712 = vld [vmem:[#allocation2 + $0x51] sm:$0xff]
        %v713 = vld [vmem:[#allocation2 + $0x61] sm:$0xff]
        %v714 = vld [vmem:[#allocation2 + $0x71] sm:$0xff]
        %v715 = vpack.c.bf16 %v708, %v707
        %v716 = vpack.c.bf16 %v710, %v709
        %v717 = vpack.c.bf16 %v712, %v711
        %v718 = vpack.c.bf16 %v714, %v713
        %s719 = scalar_lea.vmem [#allocation11], 64
        %v720 = vld [vmem:[%s719] sm:$0xf]
        %v721 = vld [vmem:[%s719 + $0x4] sm:$0xf]
        %v722 = vld [vmem:[%s719 + $0x8] sm:$0xf]
        %v723 = vld [vmem:[%s719 + $0xc] sm:$0xf]
        %v724 = vld [vmem:[%s719 + $0x10] sm:$0xf]
        %v725 = vld [vmem:[%s719 + $0x14] sm:$0xf]
        %v726 = vld [vmem:[%s719 + $0x18] sm:$0xf]
        %v727 = vld [vmem:[%s719 + $0x1c] sm:$0xf]
        %v728 = vld [vmem:[%s719 + $0x20] sm:$0xf]
        %v729 = vld [vmem:[%s719 + $0x24] sm:$0xf]
        %v730 = vld [vmem:[%s719 + $0x28] sm:$0xf]
        %v731 = vld [vmem:[%s719 + $0x2c] sm:$0xf]
        %v732 = vld [vmem:[%s719 + $0x30] sm:$0xf]
        %v733 = vld [vmem:[%s719 + $0x34] sm:$0xf]
        %v734 = vld [vmem:[%s719 + $0x38] sm:$0xf]
        %v735 = vld [vmem:[%s719 + $0x3c] sm:$0xf]
        %v752 = vunpack.c.l.b16 %v720
        %v753 = vunpack.c.l.b16 %v721
        %v754 = vunpack.c.l.b16 %v722
        %v755 = vunpack.c.l.b16 %v723
        %v756 = vunpack.c.l.b16 %v724
        %v757 = vunpack.c.l.b16 %v725
        %v758 = vunpack.c.l.b16 %v726
        %v759 = vunpack.c.l.b16 %v727
        %v760 = vunpack.c.l.b16 %v728
        %v761 = vunpack.c.l.b16 %v729
        %v762 = vunpack.c.l.b16 %v730
        %v763 = vunpack.c.l.b16 %v731
        %v764 = vunpack.c.l.b16 %v732
        %v765 = vunpack.c.l.b16 %v733
        %v766 = vunpack.c.l.b16 %v734
        %v767 = vunpack.c.l.b16 %v735
        %v768 = vpack.c.b16 %v753, %v752
        %v769 = vpack.c.b16 %v755, %v754
        %v770 = vpack.c.b16 %v757, %v756
        %v771 = vpack.c.b16 %v759, %v758
        %v772 = vpack.c.b16 %v761, %v760
        %v773 = vpack.c.b16 %v763, %v762
        %v774 = vpack.c.b16 %v765, %v764
        %v775 = vpack.c.b16 %v767, %v766
        %784 = vmatprep.subr.bf16.mxu0 0
        %785 = vmatpush1.bf16.msra.mxu0 %v775
        %786 = vmatprep.subr.bf16.mxu0 0
        %787 = vmatpush1.bf16.msra.mxu0 %v774
        %788 = vmatprep.subr.bf16.mxu0 0
        %789 = vmatpush1.bf16.msra.mxu0 %v773
        %790 = vmatprep.subr.bf16.mxu0 0
        %791 = vmatpush1.bf16.msra.mxu0 %v772
        %792 = vmatprep.subr.bf16.mxu0 0
        %793 = vmatpush1.bf16.msra.mxu0 %v771
        %794 = vmatprep.subr.bf16.mxu0 0
        %795 = vmatpush1.bf16.msra.mxu0 %v770
        %796 = vmatprep.subr.bf16.mxu0 0
        %797 = vmatpush1.bf16.msra.mxu0 %v769
        %798 = vmatprep.subr.bf16.mxu0 0
        %799 = vmatpush1.bf16.msra.mxu0 %v768
        %800 = vmatprep.subr.bf16.mxu0 0
        %801 = vmatpush2.bf16.msra.mxu0 0
        %802 = vmatprep.subr.bf16.mxu0 0
        %803 = vmatpush2.bf16.msra.mxu0 0
        %804 = vmatprep.subr.bf16.mxu0 0
        %805 = vmatpush2.bf16.msra.mxu0 0
        %806 = vmatprep.subr.bf16.mxu0 0
        %807 = vmatpush2.bf16.msra.mxu0 0
        %808 = vmatprep.subr.bf16.mxu0 0
        %809 = vmatpush2.bf16.msra.mxu0 0
        %810 = vmatprep.subr.bf16.mxu0 0
        %811 = vmatpush2.bf16.msra.mxu0 0
        %812 = vmatprep.subr.bf16.mxu0 0
        %813 = vmatpush2.bf16.msra.mxu0 0
        %814 = vmatprep.subr.bf16.mxu0 0
        %815 = vmatpush2.bf16.msra.mxu0 0
        %816 = vmatprep.mubr.bf16.mxu0 0
        %817 = vmatmul.mubr.bf16.gmra.mxu0 %v715
        %v818 = vpop.f32.mrf.mxu0
        %v819 = vadd.f32 0.0, %v818
        %v820 = vpop.f32.mrf.mxu0
        %v821 = vpop.f32.mrf.mxu0
        %v822 = vadd.f32 0.0, %v821
        %v823 = vpop.f32.mrf.mxu0
        %824 = vmatprep.mubr.bf16.mxu0 0
        %825 = vmatmul.mubr.bf16.gmra.mxu0 %v716
        %v826 = vpop.f32.mrf.mxu0
        %v827 = vadd.f32 0.0, %v826
        %v828 = vpop.f32.mrf.mxu0
        %v829 = vpop.f32.mrf.mxu0
        %v830 = vadd.f32 0.0, %v829
        %v831 = vpop.f32.mrf.mxu0
        %832 = vmatprep.mubr.bf16.mxu0 0
        %833 = vmatmul.mubr.bf16.gmra.mxu0 %v717
        %v834 = vpop.f32.mrf.mxu0
        %v835 = vadd.f32 0.0, %v834
        %v836 = vpop.f32.mrf.mxu0
        %v837 = vpop.f32.mrf.mxu0
        %v838 = vadd.f32 0.0, %v837
        %v839 = vpop.f32.mrf.mxu0
        %840 = vmatprep.mubr.bf16.mxu0 0
        %841 = vmatmul.mubr.bf16.gmra.mxu0 %v718
        %v842 = vpop.f32.mrf.mxu0
        %v843 = vadd.f32 0.0, %v842
        %v844 = vpop.f32.mrf.mxu0
        %v845 = vpop.f32.mrf.mxu0
        %v846 = vadd.f32 0.0, %v845
        %v847 = vpop.f32.mrf.mxu0
        %848 = vdwg.mxu0
        %v865 = vunpack.c.l.b16 %v691
        %v866 = vunpack.c.l.b16 %v692
        %v867 = vunpack.c.l.b16 %v693
        %v868 = vunpack.c.l.b16 %v694
        %v869 = vunpack.c.l.b16 %v695
        %v870 = vunpack.c.l.b16 %v696
        %v871 = vunpack.c.l.b16 %v697
        %v872 = vunpack.c.l.b16 %v698
        %v873 = vunpack.c.l.b16 %v699
        %v874 = vunpack.c.l.b16 %v700
        %v875 = vunpack.c.l.b16 %v701
        %v876 = vunpack.c.l.b16 %v702
        %v877 = vunpack.c.l.b16 %v703
        %v878 = vunpack.c.l.b16 %v704
        %v879 = vunpack.c.l.b16 %v705
        %v880 = vunpack.c.l.b16 %v706
        %v881 = vpack.c.b16 %v866, %v865
        %v882 = vpack.c.b16 %v868, %v867
        %v883 = vpack.c.b16 %v870, %v869
        %v884 = vpack.c.b16 %v872, %v871
        %v885 = vpack.c.b16 %v874, %v873
        %v886 = vpack.c.b16 %v876, %v875
        %v887 = vpack.c.b16 %v878, %v877
        %v888 = vpack.c.b16 %v880, %v879
        %897 = vmatprep.subr.bf16.mxu0 0
        %898 = vmatpush1.bf16.msra.mxu0 %v888
        %899 = vmatprep.subr.bf16.mxu0 0
        %900 = vmatpush1.bf16.msra.mxu0 %v887
        %901 = vmatprep.subr.bf16.mxu0 0
        %902 = vmatpush1.bf16.msra.mxu0 %v886
        %903 = vmatprep.subr.bf16.mxu0 0
        %904 = vmatpush1.bf16.msra.mxu0 %v885
        %905 = vmatprep.subr.bf16.mxu0 0
        %906 = vmatpush1.bf16.msra.mxu0 %v884
        %907 = vmatprep.subr.bf16.mxu0 0
        %908 = vmatpush1.bf16.msra.mxu0 %v883
        %909 = vmatprep.subr.bf16.mxu0 0
        %910 = vmatpush1.bf16.msra.mxu0 %v882
        %911 = vmatprep.subr.bf16.mxu0 0
        %912 = vmatpush1.bf16.msra.mxu0 %v881
        %913 = vmatprep.subr.bf16.mxu0 0
        %914 = vmatpush2.bf16.msra.mxu0 0
        %915 = vmatprep.subr.bf16.mxu0 0
        %916 = vmatpush2.bf16.msra.mxu0 0
        %917 = vmatprep.subr.bf16.mxu0 0
        %918 = vmatpush2.bf16.msra.mxu0 0
        %919 = vmatprep.subr.bf16.mxu0 0
        %920 = vmatpush2.bf16.msra.mxu0 0
        %921 = vmatprep.subr.bf16.mxu0 0
        %922 = vmatpush2.bf16.msra.mxu0 0
        %923 = vmatprep.subr.bf16.mxu0 0
        %924 = vmatpush2.bf16.msra.mxu0 0
        %925 = vmatprep.subr.bf16.mxu0 0
        %926 = vmatpush2.bf16.msra.mxu0 0
        %927 = vmatprep.subr.bf16.mxu0 0
        %928 = vmatpush2.bf16.msra.mxu0 0
        %929 = vmatprep.mubr.bf16.mxu0 0
        %930 = vmatmul.mubr.bf16.gmra.mxu0 %v687
        %v931 = vpop.f32.mrf.mxu0
        %v932 = vadd.f32 %v819, %v931
        %v933 = vpop.f32.mrf.mxu0
        %v934 = vpop.f32.mrf.mxu0
        %v935 = vadd.f32 %v822, %v934
        %v936 = vpop.f32.mrf.mxu0
        %937 = vmatprep.mubr.bf16.mxu0 0
        %938 = vmatmul.mubr.bf16.gmra.mxu0 %v688
        %v939 = vpop.f32.mrf.mxu0
        %v940 = vadd.f32 %v827, %v939
        %v941 = vpop.f32.mrf.mxu0
        %v942 = vpop.f32.mrf.mxu0
        %v943 = vadd.f32 %v830, %v942
        %v944 = vpop.f32.mrf.mxu0
        %945 = vmatprep.mubr.bf16.mxu0 0
        %946 = vmatmul.mubr.bf16.gmra.mxu0 %v689
        %v947 = vpop.f32.mrf.mxu0
        %v948 = vadd.f32 %v835, %v947
        %v949 = vpop.f32.mrf.mxu0
        %v950 = vpop.f32.mrf.mxu0
        %v951 = vadd.f32 %v838, %v950
        %v952 = vpop.f32.mrf.mxu0
        %953 = vmatprep.mubr.bf16.mxu0 0
        %954 = vmatmul.mubr.bf16.gmra.mxu0 %v690
        %v955 = vpop.f32.mrf.mxu0
        %v956 = vadd.f32 %v843, %v955
        %v957 = vpop.f32.mrf.mxu0
        %v958 = vpop.f32.mrf.mxu0
        %v959 = vadd.f32 %v846, %v958
        %v960 = vpop.f32.mrf.mxu0
        %961 = vdwg.mxu0
        %v962 = vld [vmem:[#allocation2 + $0x2] sm:$0xff]
        %v963 = vld [vmem:[#allocation2 + $0x12] sm:$0xff]
        %v964 = vld [vmem:[#allocation2 + $0x22] sm:$0xff]
        %v965 = vld [vmem:[#allocation2 + $0x32] sm:$0xff]
        %v966 = vld [vmem:[#allocation2 + $0x42] sm:$0xff]
        %v967 = vld [vmem:[#allocation2 + $0x52] sm:$0xff]
        %v968 = vld [vmem:[#allocation2 + $0x62] sm:$0xff]
        %v969 = vld [vmem:[#allocation2 + $0x72] sm:$0xff]
        %v970 = vpack.c.bf16 %v963, %v962
        %v971 = vpack.c.bf16 %v965, %v964
        %v972 = vpack.c.bf16 %v967, %v966
        %v973 = vpack.c.bf16 %v969, %v968
        %s974 = scalar_lea.vmem [#allocation11], 128
        %v975 = vld [vmem:[%s974] sm:$0xf]
        %v976 = vld [vmem:[%s974 + $0x4] sm:$0xf]
        %v977 = vld [vmem:[%s974 + $0x8] sm:$0xf]
        %v978 = vld [vmem:[%s974 + $0xc] sm:$0xf]
        %v979 = vld [vmem:[%s974 + $0x10] sm:$0xf]
        %v980 = vld [vmem:[%s974 + $0x14] sm:$0xf]
        %v981 = vld [vmem:[%s974 + $0x18] sm:$0xf]
        %v982 = vld [vmem:[%s974 + $0x1c] sm:$0xf]
        %v983 = vld [vmem:[%s974 + $0x20] sm:$0xf]
        %v984 = vld [vmem:[%s974 + $0x24] sm:$0xf]
        %v985 = vld [vmem:[%s974 + $0x28] sm:$0xf]
        %v986 = vld [vmem:[%s974 + $0x2c] sm:$0xf]
        %v987 = vld [vmem:[%s974 + $0x30] sm:$0xf]
        %v988 = vld [vmem:[%s974 + $0x34] sm:$0xf]
        %v989 = vld [vmem:[%s974 + $0x38] sm:$0xf]
        %v990 = vld [vmem:[%s974 + $0x3c] sm:$0xf]
        %v1007 = vunpack.c.l.b16 %v975
        %v1008 = vunpack.c.l.b16 %v976
        %v1009 = vunpack.c.l.b16 %v977
        %v1010 = vunpack.c.l.b16 %v978
        %v1011 = vunpack.c.l.b16 %v979
        %v1012 = vunpack.c.l.b16 %v980
        %v1013 = vunpack.c.l.b16 %v981
        %v1014 = vunpack.c.l.b16 %v982
        %v1015 = vunpack.c.l.b16 %v983
        %v1016 = vunpack.c.l.b16 %v984
        %v1017 = vunpack.c.l.b16 %v985
        %v1018 = vunpack.c.l.b16 %v986
        %v1019 = vunpack.c.l.b16 %v987
        %v1020 = vunpack.c.l.b16 %v988
        %v1021 = vunpack.c.l.b16 %v989
        %v1022 = vunpack.c.l.b16 %v990
        %v1023 = vpack.c.b16 %v1008, %v1007
        %v1024 = vpack.c.b16 %v1010, %v1009
        %v1025 = vpack.c.b16 %v1012, %v1011
        %v1026 = vpack.c.b16 %v1014, %v1013
        %v1027 = vpack.c.b16 %v1016, %v1015
        %v1028 = vpack.c.b16 %v1018, %v1017
        %v1029 = vpack.c.b16 %v1020, %v1019
        %v1030 = vpack.c.b16 %v1022, %v1021
        %1039 = vmatprep.subr.bf16.mxu0 0
        %1040 = vmatpush1.bf16.msra.mxu0 %v1030
        %1041 = vmatprep.subr.bf16.mxu0 0
        %1042 = vmatpush1.bf16.msra.mxu0 %v1029
        %1043 = vmatprep.subr.bf16.mxu0 0
        %1044 = vmatpush1.bf16.msra.mxu0 %v1028
        %1045 = vmatprep.subr.bf16.mxu0 0
        %1046 = vmatpush1.bf16.msra.mxu0 %v1027
        %1047 = vmatprep.subr.bf16.mxu0 0
        %1048 = vmatpush1.bf16.msra.mxu0 %v1026
        %1049 = vmatprep.subr.bf16.mxu0 0
        %1050 = vmatpush1.bf16.msra.mxu0 %v1025
        %1051 = vmatprep.subr.bf16.mxu0 0
        %1052 = vmatpush1.bf16.msra.mxu0 %v1024
        %1053 = vmatprep.subr.bf16.mxu0 0
        %1054 = vmatpush1.bf16.msra.mxu0 %v1023
        %1055 = vmatprep.subr.bf16.mxu0 0
        %1056 = vmatpush2.bf16.msra.mxu0 0
        %1057 = vmatprep.subr.bf16.mxu0 0
        %1058 = vmatpush2.bf16.msra.mxu0 0
        %1059 = vmatprep.subr.bf16.mxu0 0
        %1060 = vmatpush2.bf16.msra.mxu0 0
        %1061 = vmatprep.subr.bf16.mxu0 0
        %1062 = vmatpush2.bf16.msra.mxu0 0
        %1063 = vmatprep.subr.bf16.mxu0 0
        %1064 = vmatpush2.bf16.msra.mxu0 0
        %1065 = vmatprep.subr.bf16.mxu0 0
        %1066 = vmatpush2.bf16.msra.mxu0 0
        %1067 = vmatprep.subr.bf16.mxu0 0
        %1068 = vmatpush2.bf16.msra.mxu0 0
        %1069 = vmatprep.subr.bf16.mxu0 0
        %1070 = vmatpush2.bf16.msra.mxu0 0
        %1071 = vmatprep.mubr.bf16.mxu0 0
        %1072 = vmatmul.mubr.bf16.gmra.mxu0 %v970
        %v1073 = vpop.f32.mrf.mxu0
        %v1074 = vadd.f32 0.0, %v1073
        %v1075 = vpop.f32.mrf.mxu0
        %v1076 = vpop.f32.mrf.mxu0
        %v1077 = vadd.f32 0.0, %v1076
        %v1078 = vpop.f32.mrf.mxu0
        %1079 = vmatprep.mubr.bf16.mxu0 0
        %1080 = vmatmul.mubr.bf16.gmra.mxu0 %v971
        %v1081 = vpop.f32.mrf.mxu0
        %v1082 = vadd.f32 0.0, %v1081
        %v1083 = vpop.f32.mrf.mxu0
        %v1084 = vpop.f32.mrf.mxu0
        %v1085 = vadd.f32 0.0, %v1084
        %v1086 = vpop.f32.mrf.mxu0
        %1087 = vmatprep.mubr.bf16.mxu0 0
        %1088 = vmatmul.mubr.bf16.gmra.mxu0 %v972
        %v1089 = vpop.f32.mrf.mxu0
        %v1090 = vadd.f32 0.0, %v1089
        %v1091 = vpop.f32.mrf.mxu0
        %v1092 = vpop.f32.mrf.mxu0
        %v1093 = vadd.f32 0.0, %v1092
        %v1094 = vpop.f32.mrf.mxu0
        %1095 = vmatprep.mubr.bf16.mxu0 0
        %1096 = vmatmul.mubr.bf16.gmra.mxu0 %v973
        %v1097 = vpop.f32.mrf.mxu0
        %v1098 = vadd.f32 0.0, %v1097
        %v1099 = vpop.f32.mrf.mxu0
        %v1100 = vpop.f32.mrf.mxu0
        %v1101 = vadd.f32 0.0, %v1100
        %v1102 = vpop.f32.mrf.mxu0
        %1103 = vdwg.mxu0
        %v1104 = vadd.f32 %v932, %v1074
        %v1105 = vadd.f32 %v935, %v1077
        %v1106 = vadd.f32 %v940, %v1082
        %v1107 = vadd.f32 %v943, %v1085
        %v1108 = vadd.f32 %v948, %v1090
        %v1109 = vadd.f32 %v951, %v1093
        %v1110 = vadd.f32 %v956, %v1098
        %v1111 = vadd.f32 %v959, %v1101
        %v1112 = vld [vmem:[%s670] sm:$0xff]
        %v1113 = vld [vmem:[%s670 + $0x10] sm:$0xff]
        %v1114 = vld [vmem:[%s670 + $0x20] sm:$0xff]
        %v1115 = vld [vmem:[%s670 + $0x30] sm:$0xff]
        %v1116 = vld [vmem:[%s670 + $0x40] sm:$0xff]
        %v1117 = vld [vmem:[%s670 + $0x50] sm:$0xff]
        %v1118 = vld [vmem:[%s670 + $0x60] sm:$0xff]
        %v1119 = vld [vmem:[%s670 + $0x70] sm:$0xff]
        %v1120 = vpack.c.bf16 %v1113, %v1112
        %v1121 = vpack.c.bf16 %v1115, %v1114
        %v1122 = vpack.c.bf16 %v1117, %v1116
        %v1123 = vpack.c.bf16 %v1119, %v1118
        %s1124 = scalar_lea.vmem [#allocation11], 192
        %v1125 = vld [vmem:[%s1124] sm:$0xf]
        %v1126 = vld [vmem:[%s1124 + $0x4] sm:$0xf]
        %v1127 = vld [vmem:[%s1124 + $0x8] sm:$0xf]
        %v1128 = vld [vmem:[%s1124 + $0xc] sm:$0xf]
        %v1129 = vld [vmem:[%s1124 + $0x10] sm:$0xf]
        %v1130 = vld [vmem:[%s1124 + $0x14] sm:$0xf]
        %v1131 = vld [vmem:[%s1124 + $0x18] sm:$0xf]
        %v1132 = vld [vmem:[%s1124 + $0x1c] sm:$0xf]
        %v1133 = vld [vmem:[%s1124 + $0x20] sm:$0xf]
        %v1134 = vld [vmem:[%s1124 + $0x24] sm:$0xf]
        %v1135 = vld [vmem:[%s1124 + $0x28] sm:$0xf]
        %v1136 = vld [vmem:[%s1124 + $0x2c] sm:$0xf]
        %v1137 = vld [vmem:[%s1124 + $0x30] sm:$0xf]
        %v1138 = vld [vmem:[%s1124 + $0x34] sm:$0xf]
        %v1139 = vld [vmem:[%s1124 + $0x38] sm:$0xf]
        %v1140 = vld [vmem:[%s1124 + $0x3c] sm:$0xf]
        %v1157 = vunpack.c.l.b16 %v1125
        %v1158 = vunpack.c.l.b16 %v1126
        %v1159 = vunpack.c.l.b16 %v1127
        %v1160 = vunpack.c.l.b16 %v1128
        %v1161 = vunpack.c.l.b16 %v1129
        %v1162 = vunpack.c.l.b16 %v1130
        %v1163 = vunpack.c.l.b16 %v1131
        %v1164 = vunpack.c.l.b16 %v1132
        %v1165 = vunpack.c.l.b16 %v1133
        %v1166 = vunpack.c.l.b16 %v1134
        %v1167 = vunpack.c.l.b16 %v1135
        %v1168 = vunpack.c.l.b16 %v1136
        %v1169 = vunpack.c.l.b16 %v1137
        %v1170 = vunpack.c.l.b16 %v1138
        %v1171 = vunpack.c.l.b16 %v1139
        %v1172 = vunpack.c.l.b16 %v1140
        %v1173 = vpack.c.b16 %v1158, %v1157
        %v1174 = vpack.c.b16 %v1160, %v1159
        %v1175 = vpack.c.b16 %v1162, %v1161
        %v1176 = vpack.c.b16 %v1164, %v1163
        %v1177 = vpack.c.b16 %v1166, %v1165
        %v1178 = vpack.c.b16 %v1168, %v1167
        %v1179 = vpack.c.b16 %v1170, %v1169
        %v1180 = vpack.c.b16 %v1172, %v1171
        %1189 = vmatprep.subr.bf16.mxu0 0
        %1190 = vmatpush1.bf16.msra.mxu0 %v1180
        %1191 = vmatprep.subr.bf16.mxu0 0
        %1192 = vmatpush1.bf16.msra.mxu0 %v1179
        %1193 = vmatprep.subr.bf16.mxu0 0
        %1194 = vmatpush1.bf16.msra.mxu0 %v1178
        %1195 = vmatprep.subr.bf16.mxu0 0
        %1196 = vmatpush1.bf16.msra.mxu0 %v1177
        %1197 = vmatprep.subr.bf16.mxu0 0
        %1198 = vmatpush1.bf16.msra.mxu0 %v1176
        %1199 = vmatprep.subr.bf16.mxu0 0
        %1200 = vmatpush1.bf16.msra.mxu0 %v1175
        %1201 = vmatprep.subr.bf16.mxu0 0
        %1202 = vmatpush1.bf16.msra.mxu0 %v1174
        %1203 = vmatprep.subr.bf16.mxu0 0
        %1204 = vmatpush1.bf16.msra.mxu0 %v1173
        %1205 = vmatprep.subr.bf16.mxu0 0
        %1206 = vmatpush2.bf16.msra.mxu0 0
        %1207 = vmatprep.subr.bf16.mxu0 0
        %1208 = vmatpush2.bf16.msra.mxu0 0
        %1209 = vmatprep.subr.bf16.mxu0 0
        %1210 = vmatpush2.bf16.msra.mxu0 0
        %1211 = vmatprep.subr.bf16.mxu0 0
        %1212 = vmatpush2.bf16.msra.mxu0 0
        %1213 = vmatprep.subr.bf16.mxu0 0
        %1214 = vmatpush2.bf16.msra.mxu0 0
        %1215 = vmatprep.subr.bf16.mxu0 0
        %1216 = vmatpush2.bf16.msra.mxu0 0
        %1217 = vmatprep.subr.bf16.mxu0 0
        %1218 = vmatpush2.bf16.msra.mxu0 0
        %1219 = vmatprep.subr.bf16.mxu0 0
        %1220 = vmatpush2.bf16.msra.mxu0 0
        %1221 = vmatprep.mubr.bf16.mxu0 0
        %1222 = vmatmul.mubr.bf16.gmra.mxu0 %v1120
        %v1223 = vpop.f32.mrf.mxu0
        %v1224 = vadd.f32 0.0, %v1223
        %v1225 = vpop.f32.mrf.mxu0
        %v1226 = vpop.f32.mrf.mxu0
        %v1227 = vadd.f32 0.0, %v1226
        %v1228 = vpop.f32.mrf.mxu0
        %1229 = vmatprep.mubr.bf16.mxu0 0
        %1230 = vmatmul.mubr.bf16.gmra.mxu0 %v1121
        %v1231 = vpop.f32.mrf.mxu0
        %v1232 = vadd.f32 0.0, %v1231
        %v1233 = vpop.f32.mrf.mxu0
        %v1234 = vpop.f32.mrf.mxu0
        %v1235 = vadd.f32 0.0, %v1234
        %v1236 = vpop.f32.mrf.mxu0
        %1237 = vmatprep.mubr.bf16.mxu0 0
        %1238 = vmatmul.mubr.bf16.gmra.mxu0 %v1122
        %v1239 = vpop.f32.mrf.mxu0
        %v1240 = vadd.f32 0.0, %v1239
        %v1241 = vpop.f32.mrf.mxu0
        %v1242 = vpop.f32.mrf.mxu0
        %v1243 = vadd.f32 0.0, %v1242
        %v1244 = vpop.f32.mrf.mxu0
        %1245 = vmatprep.mubr.bf16.mxu0 0
        %1246 = vmatmul.mubr.bf16.gmra.mxu0 %v1123
        %v1247 = vpop.f32.mrf.mxu0
        %v1248 = vadd.f32 0.0, %v1247
        %v1249 = vpop.f32.mrf.mxu0
        %v1250 = vpop.f32.mrf.mxu0
        %v1251 = vadd.f32 0.0, %v1250
        %v1252 = vpop.f32.mrf.mxu0
        %1253 = vdwg.mxu0
        %v1254 = vadd.f32 %v1104, %v1224
        %v1255 = vadd.f32 %v1105, %v1227
        %v1256 = vadd.f32 %v1106, %v1232
        %v1257 = vadd.f32 %v1107, %v1235
        %v1258 = vadd.f32 %v1108, %v1240
        %v1259 = vadd.f32 %v1109, %v1243
        %v1260 = vadd.f32 %v1110, %v1248
        %v1261 = vadd.f32 %v1111, %v1251
        %v1262 = vld [vmem:[%s670 + $0x1] sm:$0xff]
        %v1263 = vld [vmem:[%s670 + $0x11] sm:$0xff]
        %v1264 = vld [vmem:[%s670 + $0x21] sm:$0xff]
        %v1265 = vld [vmem:[%s670 + $0x31] sm:$0xff]
        %v1266 = vld [vmem:[%s670 + $0x41] sm:$0xff]
        %v1267 = vld [vmem:[%s670 + $0x51] sm:$0xff]
        %v1268 = vld [vmem:[%s670 + $0x61] sm:$0xff]
        %v1269 = vld [vmem:[%s670 + $0x71] sm:$0xff]
        %v1270 = vpack.c.bf16 %v1263, %v1262
        %v1271 = vpack.c.bf16 %v1265, %v1264
        %v1272 = vpack.c.bf16 %v1267, %v1266
        %v1273 = vpack.c.bf16 %v1269, %v1268
        %s1274 = scalar_lea.vmem [#allocation11], 256
        %v1275 = vld [vmem:[%s1274] sm:$0xf]
        %v1276 = vld [vmem:[%s1274 + $0x4] sm:$0xf]
        %v1277 = vld [vmem:[%s1274 + $0x8] sm:$0xf]
        %v1278 = vld [vmem:[%s1274 + $0xc] sm:$0xf]
        %v1279 = vld [vmem:[%s1274 + $0x10] sm:$0xf]
        %v1280 = vld [vmem:[%s1274 + $0x14] sm:$0xf]
        %v1281 = vld [vmem:[%s1274 + $0x18] sm:$0xf]
        %v1282 = vld [vmem:[%s1274 + $0x1c] sm:$0xf]
        %v1283 = vld [vmem:[%s1274 + $0x20] sm:$0xf]
        %v1284 = vld [vmem:[%s1274 + $0x24] sm:$0xf]
        %v1285 = vld [vmem:[%s1274 + $0x28] sm:$0xf]
        %v1286 = vld [vmem:[%s1274 + $0x2c] sm:$0xf]
        %v1287 = vld [vmem:[%s1274 + $0x30] sm:$0xf]
        %v1288 = vld [vmem:[%s1274 + $0x34] sm:$0xf]
        %v1289 = vld [vmem:[%s1274 + $0x38] sm:$0xf]
        %v1290 = vld [vmem:[%s1274 + $0x3c] sm:$0xf]
        %v1307 = vunpack.c.l.b16 %v1275
        %v1308 = vunpack.c.l.b16 %v1276
        %v1309 = vunpack.c.l.b16 %v1277
        %v1310 = vunpack.c.l.b16 %v1278
        %v1311 = vunpack.c.l.b16 %v1279
        %v1312 = vunpack.c.l.b16 %v1280
        %v1313 = vunpack.c.l.b16 %v1281
        %v1314 = vunpack.c.l.b16 %v1282
        %v1315 = vunpack.c.l.b16 %v1283
        %v1316 = vunpack.c.l.b16 %v1284
        %v1317 = vunpack.c.l.b16 %v1285
        %v1318 = vunpack.c.l.b16 %v1286
        %v1319 = vunpack.c.l.b16 %v1287
        %v1320 = vunpack.c.l.b16 %v1288
        %v1321 = vunpack.c.l.b16 %v1289
        %v1322 = vunpack.c.l.b16 %v1290
        %v1323 = vpack.c.b16 %v1308, %v1307
        %v1324 = vpack.c.b16 %v1310, %v1309
        %v1325 = vpack.c.b16 %v1312, %v1311
        %v1326 = vpack.c.b16 %v1314, %v1313
        %v1327 = vpack.c.b16 %v1316, %v1315
        %v1328 = vpack.c.b16 %v1318, %v1317
        %v1329 = vpack.c.b16 %v1320, %v1319
        %v1330 = vpack.c.b16 %v1322, %v1321
        %1339 = vmatprep.subr.bf16.mxu0 0
        %1340 = vmatpush1.bf16.msra.mxu0 %v1330
        %1341 = vmatprep.subr.bf16.mxu0 0
        %1342 = vmatpush1.bf16.msra.mxu0 %v1329
        %1343 = vmatprep.subr.bf16.mxu0 0
        %1344 = vmatpush1.bf16.msra.mxu0 %v1328
        %1345 = vmatprep.subr.bf16.mxu0 0
        %1346 = vmatpush1.bf16.msra.mxu0 %v1327
        %1347 = vmatprep.subr.bf16.mxu0 0
        %1348 = vmatpush1.bf16.msra.mxu0 %v1326
        %1349 = vmatprep.subr.bf16.mxu0 0
        %1350 = vmatpush1.bf16.msra.mxu0 %v1325
        %1351 = vmatprep.subr.bf16.mxu0 0
        %1352 = vmatpush1.bf16.msra.mxu0 %v1324
        %1353 = vmatprep.subr.bf16.mxu0 0
        %1354 = vmatpush1.bf16.msra.mxu0 %v1323
        %1355 = vmatprep.subr.bf16.mxu0 0
        %1356 = vmatpush2.bf16.msra.mxu0 0
        %1357 = vmatprep.subr.bf16.mxu0 0
        %1358 = vmatpush2.bf16.msra.mxu0 0
        %1359 = vmatprep.subr.bf16.mxu0 0
        %1360 = vmatpush2.bf16.msra.mxu0 0
        %1361 = vmatprep.subr.bf16.mxu0 0
        %1362 = vmatpush2.bf16.msra.mxu0 0
        %1363 = vmatprep.subr.bf16.mxu0 0
        %1364 = vmatpush2.bf16.msra.mxu0 0
        %1365 = vmatprep.subr.bf16.mxu0 0
        %1366 = vmatpush2.bf16.msra.mxu0 0
        %1367 = vmatprep.subr.bf16.mxu0 0
        %1368 = vmatpush2.bf16.msra.mxu0 0
        %1369 = vmatprep.subr.bf16.mxu0 0
        %1370 = vmatpush2.bf16.msra.mxu0 0
        %1371 = vmatprep.mubr.bf16.mxu0 0
        %1372 = vmatmul.mubr.bf16.gmra.mxu0 %v1270
        %v1373 = vpop.f32.mrf.mxu0
        %v1374 = vadd.f32 0.0, %v1373
        %v1375 = vpop.f32.mrf.mxu0
        %v1376 = vpop.f32.mrf.mxu0
        %v1377 = vadd.f32 0.0, %v1376
        %v1378 = vpop.f32.mrf.mxu0
        %1379 = vmatprep.mubr.bf16.mxu0 0
        %1380 = vmatmul.mubr.bf16.gmra.mxu0 %v1271
        %v1381 = vpop.f32.mrf.mxu0
        %v1382 = vadd.f32 0.0, %v1381
        %v1383 = vpop.f32.mrf.mxu0
        %v1384 = vpop.f32.mrf.mxu0
        %v1385 = vadd.f32 0.0, %v1384
        %v1386 = vpop.f32.mrf.mxu0
        %1387 = vmatprep.mubr.bf16.mxu0 0
        %1388 = vmatmul.mubr.bf16.gmra.mxu0 %v1272
        %v1389 = vpop.f32.mrf.mxu0
        %v1390 = vadd.f32 0.0, %v1389
        %v1391 = vpop.f32.mrf.mxu0
        %v1392 = vpop.f32.mrf.mxu0
        %v1393 = vadd.f32 0.0, %v1392
        %v1394 = vpop.f32.mrf.mxu0
        %1395 = vmatprep.mubr.bf16.mxu0 0
        %1396 = vmatmul.mubr.bf16.gmra.mxu0 %v1273
        %v1397 = vpop.f32.mrf.mxu0
        %v1398 = vadd.f32 0.0, %v1397
        %v1399 = vpop.f32.mrf.mxu0
        %v1400 = vpop.f32.mrf.mxu0
        %v1401 = vadd.f32 0.0, %v1400
        %v1402 = vpop.f32.mrf.mxu0
        %1403 = vdwg.mxu0
        %v1404 = vadd.f32 %v1254, %v1374
        %v1405 = vadd.f32 %v1255, %v1377
        %v1406 = vadd.f32 %v1256, %v1382
        %v1407 = vadd.f32 %v1257, %v1385
        %v1408 = vadd.f32 %v1258, %v1390
        %v1409 = vadd.f32 %v1259, %v1393
        %v1410 = vadd.f32 %v1260, %v1398
        %v1411 = vadd.f32 %v1261, %v1401
        %v1412 = vld [vmem:[%s670 + $0x2] sm:$0xff]
        %v1413 = vld [vmem:[%s670 + $0x12] sm:$0xff]
        %v1414 = vld [vmem:[%s670 + $0x22] sm:$0xff]
        %v1415 = vld [vmem:[%s670 + $0x32] sm:$0xff]
        %v1416 = vld [vmem:[%s670 + $0x42] sm:$0xff]
        %v1417 = vld [vmem:[%s670 + $0x52] sm:$0xff]
        %v1418 = vld [vmem:[%s670 + $0x62] sm:$0xff]
        %v1419 = vld [vmem:[%s670 + $0x72] sm:$0xff]
        %v1420 = vpack.c.bf16 %v1413, %v1412
        %v1421 = vpack.c.bf16 %v1415, %v1414
        %v1422 = vpack.c.bf16 %v1417, %v1416
        %v1423 = vpack.c.bf16 %v1419, %v1418
        %s1424 = scalar_lea.vmem [#allocation11], 320
        %v1425 = vld [vmem:[%s1424] sm:$0xf]
        %v1426 = vld [vmem:[%s1424 + $0x4] sm:$0xf]
        %v1427 = vld [vmem:[%s1424 + $0x8] sm:$0xf]
        %v1428 = vld [vmem:[%s1424 + $0xc] sm:$0xf]
        %v1429 = vld [vmem:[%s1424 + $0x10] sm:$0xf]
        %v1430 = vld [vmem:[%s1424 + $0x14] sm:$0xf]
        %v1431 = vld [vmem:[%s1424 + $0x18] sm:$0xf]
        %v1432 = vld [vmem:[%s1424 + $0x1c] sm:$0xf]
        %v1433 = vld [vmem:[%s1424 + $0x20] sm:$0xf]
        %v1434 = vld [vmem:[%s1424 + $0x24] sm:$0xf]
        %v1435 = vld [vmem:[%s1424 + $0x28] sm:$0xf]
        %v1436 = vld [vmem:[%s1424 + $0x2c] sm:$0xf]
        %v1437 = vld [vmem:[%s1424 + $0x30] sm:$0xf]
        %v1438 = vld [vmem:[%s1424 + $0x34] sm:$0xf]
        %v1439 = vld [vmem:[%s1424 + $0x38] sm:$0xf]
        %v1440 = vld [vmem:[%s1424 + $0x3c] sm:$0xf]
        %v1457 = vunpack.c.l.b16 %v1425
        %v1458 = vunpack.c.l.b16 %v1426
        %v1459 = vunpack.c.l.b16 %v1427
        %v1460 = vunpack.c.l.b16 %v1428
        %v1461 = vunpack.c.l.b16 %v1429
        %v1462 = vunpack.c.l.b16 %v1430
        %v1463 = vunpack.c.l.b16 %v1431
        %v1464 = vunpack.c.l.b16 %v1432
        %v1465 = vunpack.c.l.b16 %v1433
        %v1466 = vunpack.c.l.b16 %v1434
        %v1467 = vunpack.c.l.b16 %v1435
        %v1468 = vunpack.c.l.b16 %v1436
        %v1469 = vunpack.c.l.b16 %v1437
        %v1470 = vunpack.c.l.b16 %v1438
        %v1471 = vunpack.c.l.b16 %v1439
        %v1472 = vunpack.c.l.b16 %v1440
        %v1473 = vpack.c.b16 %v1458, %v1457
        %v1474 = vpack.c.b16 %v1460, %v1459
        %v1475 = vpack.c.b16 %v1462, %v1461
        %v1476 = vpack.c.b16 %v1464, %v1463
        %v1477 = vpack.c.b16 %v1466, %v1465
        %v1478 = vpack.c.b16 %v1468, %v1467
        %v1479 = vpack.c.b16 %v1470, %v1469
        %v1480 = vpack.c.b16 %v1472, %v1471
        %1489 = vmatprep.subr.bf16.mxu0 0
        %1490 = vmatpush1.bf16.msra.mxu0 %v1480
        %1491 = vmatprep.subr.bf16.mxu0 0
        %1492 = vmatpush1.bf16.msra.mxu0 %v1479
        %1493 = vmatprep.subr.bf16.mxu0 0
        %1494 = vmatpush1.bf16.msra.mxu0 %v1478
        %1495 = vmatprep.subr.bf16.mxu0 0
        %1496 = vmatpush1.bf16.msra.mxu0 %v1477
        %1497 = vmatprep.subr.bf16.mxu0 0
        %1498 = vmatpush1.bf16.msra.mxu0 %v1476
        %1499 = vmatprep.subr.bf16.mxu0 0
        %1500 = vmatpush1.bf16.msra.mxu0 %v1475
        %1501 = vmatprep.subr.bf16.mxu0 0
        %1502 = vmatpush1.bf16.msra.mxu0 %v1474
        %1503 = vmatprep.subr.bf16.mxu0 0
        %1504 = vmatpush1.bf16.msra.mxu0 %v1473
        %1505 = vmatprep.subr.bf16.mxu0 0
        %1506 = vmatpush2.bf16.msra.mxu0 0
        %1507 = vmatprep.subr.bf16.mxu0 0
        %1508 = vmatpush2.bf16.msra.mxu0 0
        %1509 = vmatprep.subr.bf16.mxu0 0
        %1510 = vmatpush2.bf16.msra.mxu0 0
        %1511 = vmatprep.subr.bf16.mxu0 0
        %1512 = vmatpush2.bf16.msra.mxu0 0
        %1513 = vmatprep.subr.bf16.mxu0 0
        %1514 = vmatpush2.bf16.msra.mxu0 0
        %1515 = vmatprep.subr.bf16.mxu0 0
        %1516 = vmatpush2.bf16.msra.mxu0 0
        %1517 = vmatprep.subr.bf16.mxu0 0
        %1518 = vmatpush2.bf16.msra.mxu0 0
        %1519 = vmatprep.subr.bf16.mxu0 0
        %1520 = vmatpush2.bf16.msra.mxu0 0
        %1521 = vmatprep.mubr.bf16.mxu0 0
        %1522 = vmatmul.mubr.bf16.gmra.mxu0 %v1420
        %v1523 = vpop.f32.mrf.mxu0
        %v1524 = vadd.f32 0.0, %v1523
        %v1525 = vpop.f32.mrf.mxu0
        %v1526 = vpop.f32.mrf.mxu0
        %v1527 = vadd.f32 0.0, %v1526
        %v1528 = vpop.f32.mrf.mxu0
        %1529 = vmatprep.mubr.bf16.mxu0 0
        %1530 = vmatmul.mubr.bf16.gmra.mxu0 %v1421
        %v1531 = vpop.f32.mrf.mxu0
        %v1532 = vadd.f32 0.0, %v1531
        %v1533 = vpop.f32.mrf.mxu0
        %v1534 = vpop.f32.mrf.mxu0
        %v1535 = vadd.f32 0.0, %v1534
        %v1536 = vpop.f32.mrf.mxu0
        %1537 = vmatprep.mubr.bf16.mxu0 0
        %1538 = vmatmul.mubr.bf16.gmra.mxu0 %v1422
        %v1539 = vpop.f32.mrf.mxu0
        %v1540 = vadd.f32 0.0, %v1539
        %v1541 = vpop.f32.mrf.mxu0
        %v1542 = vpop.f32.mrf.mxu0
        %v1543 = vadd.f32 0.0, %v1542
        %v1544 = vpop.f32.mrf.mxu0
        %1545 = vmatprep.mubr.bf16.mxu0 0
        %1546 = vmatmul.mubr.bf16.gmra.mxu0 %v1423
        %v1547 = vpop.f32.mrf.mxu0
        %v1548 = vadd.f32 0.0, %v1547
        %v1549 = vpop.f32.mrf.mxu0
        %v1550 = vpop.f32.mrf.mxu0
        %v1551 = vadd.f32 0.0, %v1550
        %v1552 = vpop.f32.mrf.mxu0
        %1553 = vdwg.mxu0
        %v1554 = vadd.f32 %v1404, %v1524
        %v1555 = vadd.f32 %v1405, %v1527
        %v1556 = vadd.f32 %v1406, %v1532
        %v1557 = vadd.f32 %v1407, %v1535
        %v1558 = vadd.f32 %v1408, %v1540
        %v1559 = vadd.f32 %v1409, %v1543
        %v1560 = vadd.f32 %v1410, %v1548
        %v1561 = vadd.f32 %v1411, %v1551
        %s1562 = scalar_lea.vmem [#allocation2], 32
        %v1563 = vld [vmem:[%s1562] sm:$0xff]
        %v1564 = vld [vmem:[%s1562 + $0x10] sm:$0xff]
        %v1565 = vld [vmem:[%s1562 + $0x20] sm:$0xff]
        %v1566 = vld [vmem:[%s1562 + $0x30] sm:$0xff]
        %v1567 = vld [vmem:[%s1562 + $0x40] sm:$0xff]
        %v1568 = vld [vmem:[%s1562 + $0x50] sm:$0xff]
        %v1569 = vld [vmem:[%s1562 + $0x60] sm:$0xff]
        %v1570 = vld [vmem:[%s1562 + $0x70] sm:$0xff]
        %v1571 = vpack.c.bf16 %v1564, %v1563
        %v1572 = vpack.c.bf16 %v1566, %v1565
        %v1573 = vpack.c.bf16 %v1568, %v1567
        %v1574 = vpack.c.bf16 %v1570, %v1569
        %s1575 = scalar_lea.vmem [#allocation11], 384
        %v1576 = vld [vmem:[%s1575] sm:$0xf]
        %v1577 = vld [vmem:[%s1575 + $0x4] sm:$0xf]
        %v1578 = vld [vmem:[%s1575 + $0x8] sm:$0xf]
        %v1579 = vld [vmem:[%s1575 + $0xc] sm:$0xf]
        %v1580 = vld [vmem:[%s1575 + $0x10] sm:$0xf]
        %v1581 = vld [vmem:[%s1575 + $0x14] sm:$0xf]
        %v1582 = vld [vmem:[%s1575 + $0x18] sm:$0xf]
        %v1583 = vld [vmem:[%s1575 + $0x1c] sm:$0xf]
        %v1584 = vld [vmem:[%s1575 + $0x20] sm:$0xf]
        %v1585 = vld [vmem:[%s1575 + $0x24] sm:$0xf]
        %v1586 = vld [vmem:[%s1575 + $0x28] sm:$0xf]
        %v1587 = vld [vmem:[%s1575 + $0x2c] sm:$0xf]
        %v1588 = vld [vmem:[%s1575 + $0x30] sm:$0xf]
        %v1589 = vld [vmem:[%s1575 + $0x34] sm:$0xf]
        %v1590 = vld [vmem:[%s1575 + $0x38] sm:$0xf]
        %v1591 = vld [vmem:[%s1575 + $0x3c] sm:$0xf]
        %v1608 = vunpack.c.l.b16 %v1576
        %v1609 = vunpack.c.l.b16 %v1577
        %v1610 = vunpack.c.l.b16 %v1578
        %v1611 = vunpack.c.l.b16 %v1579
        %v1612 = vunpack.c.l.b16 %v1580
        %v1613 = vunpack.c.l.b16 %v1581
        %v1614 = vunpack.c.l.b16 %v1582
        %v1615 = vunpack.c.l.b16 %v1583
        %v1616 = vunpack.c.l.b16 %v1584
        %v1617 = vunpack.c.l.b16 %v1585
        %v1618 = vunpack.c.l.b16 %v1586
        %v1619 = vunpack.c.l.b16 %v1587
        %v1620 = vunpack.c.l.b16 %v1588
        %v1621 = vunpack.c.l.b16 %v1589
        %v1622 = vunpack.c.l.b16 %v1590
        %v1623 = vunpack.c.l.b16 %v1591
        %v1624 = vpack.c.b16 %v1609, %v1608
        %v1625 = vpack.c.b16 %v1611, %v1610
        %v1626 = vpack.c.b16 %v1613, %v1612
        %v1627 = vpack.c.b16 %v1615, %v1614
        %v1628 = vpack.c.b16 %v1617, %v1616
        %v1629 = vpack.c.b16 %v1619, %v1618
        %v1630 = vpack.c.b16 %v1621, %v1620
        %v1631 = vpack.c.b16 %v1623, %v1622
        %1640 = vmatprep.subr.bf16.mxu0 0
        %1641 = vmatpush1.bf16.msra.mxu0 %v1631
        %1642 = vmatprep.subr.bf16.mxu0 0
        %1643 = vmatpush1.bf16.msra.mxu0 %v1630
        %1644 = vmatprep.subr.bf16.mxu0 0
        %1645 = vmatpush1.bf16.msra.mxu0 %v1629
        %1646 = vmatprep.subr.bf16.mxu0 0
        %1647 = vmatpush1.bf16.msra.mxu0 %v1628
        %1648 = vmatprep.subr.bf16.mxu0 0
        %1649 = vmatpush1.bf16.msra.mxu0 %v1627
        %1650 = vmatprep.subr.bf16.mxu0 0
        %1651 = vmatpush1.bf16.msra.mxu0 %v1626
        %1652 = vmatprep.subr.bf16.mxu0 0
        %1653 = vmatpush1.bf16.msra.mxu0 %v1625
        %1654 = vmatprep.subr.bf16.mxu0 0
        %1655 = vmatpush1.bf16.msra.mxu0 %v1624
        %1656 = vmatprep.subr.bf16.mxu0 0
        %1657 = vmatpush2.bf16.msra.mxu0 0
        %1658 = vmatprep.subr.bf16.mxu0 0
        %1659 = vmatpush2.bf16.msra.mxu0 0
        %1660 = vmatprep.subr.bf16.mxu0 0
        %1661 = vmatpush2.bf16.msra.mxu0 0
        %1662 = vmatprep.subr.bf16.mxu0 0
        %1663 = vmatpush2.bf16.msra.mxu0 0
        %1664 = vmatprep.subr.bf16.mxu0 0
        %1665 = vmatpush2.bf16.msra.mxu0 0
        %1666 = vmatprep.subr.bf16.mxu0 0
        %1667 = vmatpush2.bf16.msra.mxu0 0
        %1668 = vmatprep.subr.bf16.mxu0 0
        %1669 = vmatpush2.bf16.msra.mxu0 0
        %1670 = vmatprep.subr.bf16.mxu0 0
        %1671 = vmatpush2.bf16.msra.mxu0 0
        %1672 = vmatprep.mubr.bf16.mxu0 0
        %1673 = vmatmul.mubr.bf16.gmra.mxu0 %v1571
        %v1674 = vpop.f32.mrf.mxu0
        %v1675 = vadd.f32 0.0, %v1674
        %v1676 = vpop.f32.mrf.mxu0
        %v1677 = vpop.f32.mrf.mxu0
        %v1678 = vadd.f32 0.0, %v1677
        %v1679 = vpop.f32.mrf.mxu0
        %1680 = vmatprep.mubr.bf16.mxu0 0
        %1681 = vmatmul.mubr.bf16.gmra.mxu0 %v1572
        %v1682 = vpop.f32.mrf.mxu0
        %v1683 = vadd.f32 0.0, %v1682
        %v1684 = vpop.f32.mrf.mxu0
        %v1685 = vpop.f32.mrf.mxu0
        %v1686 = vadd.f32 0.0, %v1685
        %v1687 = vpop.f32.mrf.mxu0
        %1688 = vmatprep.mubr.bf16.mxu0 0
        %1689 = vmatmul.mubr.bf16.gmra.mxu0 %v1573
        %v1690 = vpop.f32.mrf.mxu0
        %v1691 = vadd.f32 0.0, %v1690
        %v1692 = vpop.f32.mrf.mxu0
        %v1693 = vpop.f32.mrf.mxu0
        %v1694 = vadd.f32 0.0, %v1693
        %v1695 = vpop.f32.mrf.mxu0
        %1696 = vmatprep.mubr.bf16.mxu0 0
        %1697 = vmatmul.mubr.bf16.gmra.mxu0 %v1574
        %v1698 = vpop.f32.mrf.mxu0
        %v1699 = vadd.f32 0.0, %v1698
        %v1700 = vpop.f32.mrf.mxu0
        %v1701 = vpop.f32.mrf.mxu0
        %v1702 = vadd.f32 0.0, %v1701
        %v1703 = vpop.f32.mrf.mxu0
        %1704 = vdwg.mxu0
        %v1705 = vadd.f32 %v1554, %v1675
        %v1706 = vadd.f32 %v1555, %v1678
        %v1707 = vadd.f32 %v1556, %v1683
        %v1708 = vadd.f32 %v1557, %v1686
        %v1709 = vadd.f32 %v1558, %v1691
        %v1710 = vadd.f32 %v1559, %v1694
        %v1711 = vadd.f32 %v1560, %v1699
        %v1712 = vadd.f32 %v1561, %v1702
        %v1713 = vld [vmem:[%s1562 + $0x1] sm:$0xff]
        %v1714 = vld [vmem:[%s1562 + $0x11] sm:$0xff]
        %v1715 = vld [vmem:[%s1562 + $0x21] sm:$0xff]
        %v1716 = vld [vmem:[%s1562 + $0x31] sm:$0xff]
        %v1717 = vld [vmem:[%s1562 + $0x41] sm:$0xff]
        %v1718 = vld [vmem:[%s1562 + $0x51] sm:$0xff]
        %v1719 = vld [vmem:[%s1562 + $0x61] sm:$0xff]
        %v1720 = vld [vmem:[%s1562 + $0x71] sm:$0xff]
        %v1721 = vpack.c.bf16 %v1714, %v1713
        %v1722 = vpack.c.bf16 %v1716, %v1715
        %v1723 = vpack.c.bf16 %v1718, %v1717
        %v1724 = vpack.c.bf16 %v1720, %v1719
        %s1725 = scalar_lea.vmem [#allocation11], 448
        %v1726 = vld [vmem:[%s1725] sm:$0xf]
        %v1727 = vld [vmem:[%s1725 + $0x4] sm:$0xf]
        %v1728 = vld [vmem:[%s1725 + $0x8] sm:$0xf]
        %v1729 = vld [vmem:[%s1725 + $0xc] sm:$0xf]
        %v1730 = vld [vmem:[%s1725 + $0x10] sm:$0xf]
        %v1731 = vld [vmem:[%s1725 + $0x14] sm:$0xf]
        %v1732 = vld [vmem:[%s1725 + $0x18] sm:$0xf]
        %v1733 = vld [vmem:[%s1725 + $0x1c] sm:$0xf]
        %v1734 = vld [vmem:[%s1725 + $0x20] sm:$0xf]
        %v1735 = vld [vmem:[%s1725 + $0x24] sm:$0xf]
        %v1736 = vld [vmem:[%s1725 + $0x28] sm:$0xf]
        %v1737 = vld [vmem:[%s1725 + $0x2c] sm:$0xf]
        %v1738 = vld [vmem:[%s1725 + $0x30] sm:$0xf]
        %v1739 = vld [vmem:[%s1725 + $0x34] sm:$0xf]
        %v1740 = vld [vmem:[%s1725 + $0x38] sm:$0xf]
        %v1741 = vld [vmem:[%s1725 + $0x3c] sm:$0xf]
        %v1758 = vunpack.c.l.b16 %v1726
        %v1759 = vunpack.c.l.b16 %v1727
        %v1760 = vunpack.c.l.b16 %v1728
        %v1761 = vunpack.c.l.b16 %v1729
        %v1762 = vunpack.c.l.b16 %v1730
        %v1763 = vunpack.c.l.b16 %v1731
        %v1764 = vunpack.c.l.b16 %v1732
        %v1765 = vunpack.c.l.b16 %v1733
        %v1766 = vunpack.c.l.b16 %v1734
        %v1767 = vunpack.c.l.b16 %v1735
        %v1768 = vunpack.c.l.b16 %v1736
        %v1769 = vunpack.c.l.b16 %v1737
        %v1770 = vunpack.c.l.b16 %v1738
        %v1771 = vunpack.c.l.b16 %v1739
        %v1772 = vunpack.c.l.b16 %v1740
        %v1773 = vunpack.c.l.b16 %v1741
        %v1774 = vpack.c.b16 %v1759, %v1758
        %v1775 = vpack.c.b16 %v1761, %v1760
        %v1776 = vpack.c.b16 %v1763, %v1762
        %v1777 = vpack.c.b16 %v1765, %v1764
        %v1778 = vpack.c.b16 %v1767, %v1766
        %v1779 = vpack.c.b16 %v1769, %v1768
        %v1780 = vpack.c.b16 %v1771, %v1770
        %v1781 = vpack.c.b16 %v1773, %v1772
        %1790 = vmatprep.subr.bf16.mxu0 0
        %1791 = vmatpush1.bf16.msra.mxu0 %v1781
        %1792 = vmatprep.subr.bf16.mxu0 0
        %1793 = vmatpush1.bf16.msra.mxu0 %v1780
        %1794 = vmatprep.subr.bf16.mxu0 0
        %1795 = vmatpush1.bf16.msra.mxu0 %v1779
        %1796 = vmatprep.subr.bf16.mxu0 0
        %1797 = vmatpush1.bf16.msra.mxu0 %v1778
        %1798 = vmatprep.subr.bf16.mxu0 0
        %1799 = vmatpush1.bf16.msra.mxu0 %v1777
        %1800 = vmatprep.subr.bf16.mxu0 0
        %1801 = vmatpush1.bf16.msra.mxu0 %v1776
        %1802 = vmatprep.subr.bf16.mxu0 0
        %1803 = vmatpush1.bf16.msra.mxu0 %v1775
        %1804 = vmatprep.subr.bf16.mxu0 0
        %1805 = vmatpush1.bf16.msra.mxu0 %v1774
        %1806 = vmatprep.subr.bf16.mxu0 0
        %1807 = vmatpush2.bf16.msra.mxu0 0
        %1808 = vmatprep.subr.bf16.mxu0 0
        %1809 = vmatpush2.bf16.msra.mxu0 0
        %1810 = vmatprep.subr.bf16.mxu0 0
        %1811 = vmatpush2.bf16.msra.mxu0 0
        %1812 = vmatprep.subr.bf16.mxu0 0
        %1813 = vmatpush2.bf16.msra.mxu0 0
        %1814 = vmatprep.subr.bf16.mxu0 0
        %1815 = vmatpush2.bf16.msra.mxu0 0
        %1816 = vmatprep.subr.bf16.mxu0 0
        %1817 = vmatpush2.bf16.msra.mxu0 0
        %1818 = vmatprep.subr.bf16.mxu0 0
        %1819 = vmatpush2.bf16.msra.mxu0 0
        %1820 = vmatprep.subr.bf16.mxu0 0
        %1821 = vmatpush2.bf16.msra.mxu0 0
        %1822 = vmatprep.mubr.bf16.mxu0 0
        %1823 = vmatmul.mubr.bf16.gmra.mxu0 %v1721
        %v1824 = vpop.f32.mrf.mxu0
        %v1825 = vadd.f32 0.0, %v1824
        %v1826 = vpop.f32.mrf.mxu0
        %v1827 = vpop.f32.mrf.mxu0
        %v1828 = vadd.f32 0.0, %v1827
        %v1829 = vpop.f32.mrf.mxu0
        %1830 = vmatprep.mubr.bf16.mxu0 0
        %1831 = vmatmul.mubr.bf16.gmra.mxu0 %v1722
        %v1832 = vpop.f32.mrf.mxu0
        %v1833 = vadd.f32 0.0, %v1832
        %v1834 = vpop.f32.mrf.mxu0
        %v1835 = vpop.f32.mrf.mxu0
        %v1836 = vadd.f32 0.0, %v1835
        %v1837 = vpop.f32.mrf.mxu0
        %1838 = vmatprep.mubr.bf16.mxu0 0
        %1839 = vmatmul.mubr.bf16.gmra.mxu0 %v1723
        %v1840 = vpop.f32.mrf.mxu0
        %v1841 = vadd.f32 0.0, %v1840
        %v1842 = vpop.f32.mrf.mxu0
        %v1843 = vpop.f32.mrf.mxu0
        %v1844 = vadd.f32 0.0, %v1843
        %v1845 = vpop.f32.mrf.mxu0
        %1846 = vmatprep.mubr.bf16.mxu0 0
        %1847 = vmatmul.mubr.bf16.gmra.mxu0 %v1724
        %v1848 = vpop.f32.mrf.mxu0
        %v1849 = vadd.f32 0.0, %v1848
        %v1850 = vpop.f32.mrf.mxu0
        %v1851 = vpop.f32.mrf.mxu0
        %v1852 = vadd.f32 0.0, %v1851
        %v1853 = vpop.f32.mrf.mxu0
        %1854 = vdwg.mxu0
        %v1855 = vadd.f32 %v1705, %v1825
        %v1856 = vadd.f32 %v1706, %v1828
        %v1857 = vadd.f32 %v1707, %v1833
        %v1858 = vadd.f32 %v1708, %v1836
        %v1859 = vadd.f32 %v1709, %v1841
        %v1860 = vadd.f32 %v1710, %v1844
        %v1861 = vadd.f32 %v1711, %v1849
        %v1862 = vadd.f32 %v1712, %v1852
        %v1863 = vld [vmem:[%s1562 + $0x2] sm:$0xff]
        %v1864 = vld [vmem:[%s1562 + $0x12] sm:$0xff]
        %v1865 = vld [vmem:[%s1562 + $0x22] sm:$0xff]
        %v1866 = vld [vmem:[%s1562 + $0x32] sm:$0xff]
        %v1867 = vld [vmem:[%s1562 + $0x42] sm:$0xff]
        %v1868 = vld [vmem:[%s1562 + $0x52] sm:$0xff]
        %v1869 = vld [vmem:[%s1562 + $0x62] sm:$0xff]
        %v1870 = vld [vmem:[%s1562 + $0x72] sm:$0xff]
        %v1871 = vpack.c.bf16 %v1864, %v1863
        %v1872 = vpack.c.bf16 %v1866, %v1865
        %v1873 = vpack.c.bf16 %v1868, %v1867
        %v1874 = vpack.c.bf16 %v1870, %v1869
        %s1875 = scalar_lea.vmem [#allocation11], 512
        %v1876 = vld [vmem:[%s1875] sm:$0xf]
        %v1877 = vld [vmem:[%s1875 + $0x4] sm:$0xf]
        %v1878 = vld [vmem:[%s1875 + $0x8] sm:$0xf]
        %v1879 = vld [vmem:[%s1875 + $0xc] sm:$0xf]
        %v1880 = vld [vmem:[%s1875 + $0x10] sm:$0xf]
        %v1881 = vld [vmem:[%s1875 + $0x14] sm:$0xf]
        %v1882 = vld [vmem:[%s1875 + $0x18] sm:$0xf]
        %v1883 = vld [vmem:[%s1875 + $0x1c] sm:$0xf]
        %v1884 = vld [vmem:[%s1875 + $0x20] sm:$0xf]
        %v1885 = vld [vmem:[%s1875 + $0x24] sm:$0xf]
        %v1886 = vld [vmem:[%s1875 + $0x28] sm:$0xf]
        %v1887 = vld [vmem:[%s1875 + $0x2c] sm:$0xf]
        %v1888 = vld [vmem:[%s1875 + $0x30] sm:$0xf]
        %v1889 = vld [vmem:[%s1875 + $0x34] sm:$0xf]
        %v1890 = vld [vmem:[%s1875 + $0x38] sm:$0xf]
        %v1891 = vld [vmem:[%s1875 + $0x3c] sm:$0xf]
        %v1908 = vunpack.c.l.b16 %v1876
        %v1909 = vunpack.c.l.b16 %v1877
        %v1910 = vunpack.c.l.b16 %v1878
        %v1911 = vunpack.c.l.b16 %v1879
        %v1912 = vunpack.c.l.b16 %v1880
        %v1913 = vunpack.c.l.b16 %v1881
        %v1914 = vunpack.c.l.b16 %v1882
        %v1915 = vunpack.c.l.b16 %v1883
        %v1916 = vunpack.c.l.b16 %v1884
        %v1917 = vunpack.c.l.b16 %v1885
        %v1918 = vunpack.c.l.b16 %v1886
        %v1919 = vunpack.c.l.b16 %v1887
        %v1920 = vunpack.c.l.b16 %v1888
        %v1921 = vunpack.c.l.b16 %v1889
        %v1922 = vunpack.c.l.b16 %v1890
        %v1923 = vunpack.c.l.b16 %v1891
        %v1924 = vpack.c.b16 %v1909, %v1908
        %v1925 = vpack.c.b16 %v1911, %v1910
        %v1926 = vpack.c.b16 %v1913, %v1912
        %v1927 = vpack.c.b16 %v1915, %v1914
        %v1928 = vpack.c.b16 %v1917, %v1916
        %v1929 = vpack.c.b16 %v1919, %v1918
        %v1930 = vpack.c.b16 %v1921, %v1920
        %v1931 = vpack.c.b16 %v1923, %v1922
        %1940 = vmatprep.subr.bf16.mxu0 0
        %1941 = vmatpush1.bf16.msra.mxu0 %v1931
        %1942 = vmatprep.subr.bf16.mxu0 0
        %1943 = vmatpush1.bf16.msra.mxu0 %v1930
        %1944 = vmatprep.subr.bf16.mxu0 0
        %1945 = vmatpush1.bf16.msra.mxu0 %v1929
        %1946 = vmatprep.subr.bf16.mxu0 0
        %1947 = vmatpush1.bf16.msra.mxu0 %v1928
        %1948 = vmatprep.subr.bf16.mxu0 0
        %1949 = vmatpush1.bf16.msra.mxu0 %v1927
        %1950 = vmatprep.subr.bf16.mxu0 0
        %1951 = vmatpush1.bf16.msra.mxu0 %v1926
        %1952 = vmatprep.subr.bf16.mxu0 0
        %1953 = vmatpush1.bf16.msra.mxu0 %v1925
        %1954 = vmatprep.subr.bf16.mxu0 0
        %1955 = vmatpush1.bf16.msra.mxu0 %v1924
        %1956 = vmatprep.subr.bf16.mxu0 0
        %1957 = vmatpush2.bf16.msra.mxu0 0
        %1958 = vmatprep.subr.bf16.mxu0 0
        %1959 = vmatpush2.bf16.msra.mxu0 0
        %1960 = vmatprep.subr.bf16.mxu0 0
        %1961 = vmatpush2.bf16.msra.mxu0 0
        %1962 = vmatprep.subr.bf16.mxu0 0
        %1963 = vmatpush2.bf16.msra.mxu0 0
        %1964 = vmatprep.subr.bf16.mxu0 0
        %1965 = vmatpush2.bf16.msra.mxu0 0
        %1966 = vmatprep.subr.bf16.mxu0 0
        %1967 = vmatpush2.bf16.msra.mxu0 0
        %1968 = vmatprep.subr.bf16.mxu0 0
        %1969 = vmatpush2.bf16.msra.mxu0 0
        %1970 = vmatprep.subr.bf16.mxu0 0
        %1971 = vmatpush2.bf16.msra.mxu0 0
        %1972 = vmatprep.mubr.bf16.mxu0 0
        %1973 = vmatmul.mubr.bf16.gmra.mxu0 %v1871
        %v1974 = vpop.f32.mrf.mxu0
        %v1975 = vadd.f32 0.0, %v1974
        %v1976 = vpop.f32.mrf.mxu0
        %v1977 = vpop.f32.mrf.mxu0
        %v1978 = vadd.f32 0.0, %v1977
        %v1979 = vpop.f32.mrf.mxu0
        %1980 = vmatprep.mubr.bf16.mxu0 0
        %1981 = vmatmul.mubr.bf16.gmra.mxu0 %v1872
        %v1982 = vpop.f32.mrf.mxu0
        %v1983 = vadd.f32 0.0, %v1982
        %v1984 = vpop.f32.mrf.mxu0
        %v1985 = vpop.f32.mrf.mxu0
        %v1986 = vadd.f32 0.0, %v1985
        %v1987 = vpop.f32.mrf.mxu0
        %1988 = vmatprep.mubr.bf16.mxu0 0
        %1989 = vmatmul.mubr.bf16.gmra.mxu0 %v1873
        %v1990 = vpop.f32.mrf.mxu0
        %v1991 = vadd.f32 0.0, %v1990
        %v1992 = vpop.f32.mrf.mxu0
        %v1993 = vpop.f32.mrf.mxu0
        %v1994 = vadd.f32 0.0, %v1993
        %v1995 = vpop.f32.mrf.mxu0
        %1996 = vmatprep.mubr.bf16.mxu0 0
        %1997 = vmatmul.mubr.bf16.gmra.mxu0 %v1874
        %v1998 = vpop.f32.mrf.mxu0
        %v1999 = vadd.f32 0.0, %v1998
        %v2000 = vpop.f32.mrf.mxu0
        %v2001 = vpop.f32.mrf.mxu0
        %v2002 = vadd.f32 0.0, %v2001
        %v2003 = vpop.f32.mrf.mxu0
        %2004 = vdwg.mxu0
        %v2005 = vadd.f32 %v1855, %v1975
        %v2006 = vadd.f32 %v1856, %v1978
        %v2007 = vadd.f32 %v1857, %v1983
        %v2008 = vadd.f32 %v1858, %v1986
        %v2009 = vadd.f32 %v1859, %v1991
        %v2010 = vadd.f32 %v1860, %v1994
        %v2011 = vadd.f32 %v1861, %v1999
        %v2012 = vadd.f32 %v1862, %v2002
        %s2013 = scalar_lea.vmem [#allocation8], 2
        %v2014 = vld [vmem:[%s2013] sm:$0x1]
        %v2016 = vlaneseq
        %v2017 = vshrl.u32 %v2016, 7
        %v2018 = vsub.s32 0, %v2017
        %v2019 = vrot.slane %v2014, %v2018
        %v2021 = vadd.f32 %v2005, %v2019
        %v2022 = vadd.f32 %v2006, %v2019
        %v2023 = vadd.f32 %v2007, %v2019
        %v2024 = vadd.f32 %v2008, %v2019
        %v2025 = vadd.f32 %v2009, %v2019
        %v2026 = vadd.f32 %v2010, %v2019
        %v2027 = vadd.f32 %v2011, %v2019
        %v2028 = vadd.f32 %v2012, %v2019
        %s2029 = sld [smem:[#allocation3 + $0x2]]
        %v2030 = vstv %s2029
        %v2031 = vmul.f32 %v2030, %v466
        %v2032 = vmul.f32 %v2030, %v469
        %v2033 = vmul.f32 %v2030, %v474
        %v2034 = vmul.f32 %v2030, %v477
        %v2035 = vmul.f32 %v2030, %v482
        %v2036 = vmul.f32 %v2030, %v485
        %v2037 = vmul.f32 %v2030, %v490
        %v2038 = vmul.f32 %v2030, %v493
        %s2039 = sld [smem:[#allocation3 + $0x3]]
        %v2040 = vstv %s2039
        %v2041 = vmul.f32 %v2040, %v2021
        %v2042 = vmul.f32 %v2040, %v2022
        %v2043 = vmul.f32 %v2040, %v2023
        %v2044 = vmul.f32 %v2040, %v2024
        %v2045 = vmul.f32 %v2040, %v2025
        %v2046 = vmul.f32 %v2040, %v2026
        %v2047 = vmul.f32 %v2040, %v2027
        %v2048 = vmul.f32 %v2040, %v2028
        %v2049 = vadd.f32 %v2031, %v2041
        %v2050 = vadd.f32 %v2032, %v2042
        %v2051 = vadd.f32 %v2033, %v2043
        %v2052 = vadd.f32 %v2034, %v2044
        %v2053 = vadd.f32 %v2035, %v2045
        %v2054 = vadd.f32 %v2036, %v2046
        %v2055 = vadd.f32 %v2037, %v2047
        %v2056 = vadd.f32 %v2038, %v2048
        %v2057 = vmax.f32 %v2049, 0.0
        %v2058 = vmax.f32 %v2050, 0.0
        %v2059 = vmax.f32 %v2051, 0.0
        %v2060 = vmax.f32 %v2052, 0.0
        %v2061 = vmax.f32 %v2053, 0.0
        %v2062 = vmax.f32 %v2054, 0.0
        %v2063 = vmax.f32 %v2055, 0.0
        %v2064 = vmax.f32 %v2056, 0.0
        %2065 = vst [vmem:[%s670 + $0x1] sm:$0xff] %v2057
        %2066 = vst [vmem:[%s670 + $0x11] sm:$0xff] %v2058
        %2067 = vst [vmem:[%s670 + $0x21] sm:$0xff] %v2059
        %2068 = vst [vmem:[%s670 + $0x31] sm:$0xff] %v2060
        %2069 = vst [vmem:[%s670 + $0x41] sm:$0xff] %v2061
        %2070 = vst [vmem:[%s670 + $0x51] sm:$0xff] %v2062
        %2071 = vst [vmem:[%s670 + $0x61] sm:$0xff] %v2063
        %2072 = vst [vmem:[%s670 + $0x71] sm:$0xff] %v2064
        %v2073 = vld [vmem:[#allocation2] sm:$0xff]
        %v2074 = vld [vmem:[#allocation2 + $0x10] sm:$0xff]
        %v2075 = vld [vmem:[#allocation2 + $0x20] sm:$0xff]
        %v2076 = vld [vmem:[#allocation2 + $0x30] sm:$0xff]
        %v2077 = vld [vmem:[#allocation2 + $0x40] sm:$0xff]
        %v2078 = vld [vmem:[#allocation2 + $0x50] sm:$0xff]
        %v2079 = vld [vmem:[#allocation2 + $0x60] sm:$0xff]
        %v2080 = vld [vmem:[#allocation2 + $0x70] sm:$0xff]
        %v2081 = vpack.c.bf16 %v2074, %v2073
        %v2082 = vpack.c.bf16 %v2076, %v2075
        %v2083 = vpack.c.bf16 %v2078, %v2077
        %v2084 = vpack.c.bf16 %v2080, %v2079
        %s2085 = scalar_lea.vmem [#allocation11], 576
        %v2086 = vld [vmem:[%s2085] sm:$0xf]
        %v2087 = vld [vmem:[%s2085 + $0x4] sm:$0xf]
        %v2088 = vld [vmem:[%s2085 + $0x8] sm:$0xf]
        %v2089 = vld [vmem:[%s2085 + $0xc] sm:$0xf]
        %v2090 = vld [vmem:[%s2085 + $0x10] sm:$0xf]
        %v2091 = vld [vmem:[%s2085 + $0x14] sm:$0xf]
        %v2092 = vld [vmem:[%s2085 + $0x18] sm:$0xf]
        %v2093 = vld [vmem:[%s2085 + $0x1c] sm:$0xf]
        %v2094 = vld [vmem:[%s2085 + $0x20] sm:$0xf]
        %v2095 = vld [vmem:[%s2085 + $0x24] sm:$0xf]
        %v2096 = vld [vmem:[%s2085 + $0x28] sm:$0xf]
        %v2097 = vld [vmem:[%s2085 + $0x2c] sm:$0xf]
        %v2098 = vld [vmem:[%s2085 + $0x30] sm:$0xf]
        %v2099 = vld [vmem:[%s2085 + $0x34] sm:$0xf]
        %v2100 = vld [vmem:[%s2085 + $0x38] sm:$0xf]
        %v2101 = vld [vmem:[%s2085 + $0x3c] sm:$0xf]
        %v2102 = vld [vmem:[#allocation2 + $0x1] sm:$0xff]
        %v2103 = vld [vmem:[#allocation2 + $0x11] sm:$0xff]
        %v2104 = vld [vmem:[#allocation2 + $0x21] sm:$0xff]
        %v2105 = vld [vmem:[#allocation2 + $0x31] sm:$0xff]
        %v2106 = vld [vmem:[#allocation2 + $0x41] sm:$0xff]
        %v2107 = vld [vmem:[#allocation2 + $0x51] sm:$0xff]
        %v2108 = vld [vmem:[#allocation2 + $0x61] sm:$0xff]
        %v2109 = vld [vmem:[#allocation2 + $0x71] sm:$0xff]
        %v2110 = vpack.c.bf16 %v2103, %v2102
        %v2111 = vpack.c.bf16 %v2105, %v2104
        %v2112 = vpack.c.bf16 %v2107, %v2106
        %v2113 = vpack.c.bf16 %v2109, %v2108
        %s2114 = scalar_lea.vmem [#allocation11], 640
        %v2115 = vld [vmem:[%s2114] sm:$0xf]
        %v2116 = vld [vmem:[%s2114 + $0x4] sm:$0xf]
        %v2117 = vld [vmem:[%s2114 + $0x8] sm:$0xf]
        %v2118 = vld [vmem:[%s2114 + $0xc] sm:$0xf]
        %v2119 = vld [vmem:[%s2114 + $0x10] sm:$0xf]
        %v2120 = vld [vmem:[%s2114 + $0x14] sm:$0xf]
        %v2121 = vld [vmem:[%s2114 + $0x18] sm:$0xf]
        %v2122 = vld [vmem:[%s2114 + $0x1c] sm:$0xf]
        %v2123 = vld [vmem:[%s2114 + $0x20] sm:$0xf]
        %v2124 = vld [vmem:[%s2114 + $0x24] sm:$0xf]
        %v2125 = vld [vmem:[%s2114 + $0x28] sm:$0xf]
        %v2126 = vld [vmem:[%s2114 + $0x2c] sm:$0xf]
        %v2127 = vld [vmem:[%s2114 + $0x30] sm:$0xf]
        %v2128 = vld [vmem:[%s2114 + $0x34] sm:$0xf]
        %v2129 = vld [vmem:[%s2114 + $0x38] sm:$0xf]
        %v2130 = vld [vmem:[%s2114 + $0x3c] sm:$0xf]
        %v2147 = vunpack.c.l.b16 %v2115
        %v2148 = vunpack.c.l.b16 %v2116
        %v2149 = vunpack.c.l.b16 %v2117
        %v2150 = vunpack.c.l.b16 %v2118
        %v2151 = vunpack.c.l.b16 %v2119
        %v2152 = vunpack.c.l.b16 %v2120
        %v2153 = vunpack.c.l.b16 %v2121
        %v2154 = vunpack.c.l.b16 %v2122
        %v2155 = vunpack.c.l.b16 %v2123
        %v2156 = vunpack.c.l.b16 %v2124
        %v2157 = vunpack.c.l.b16 %v2125
        %v2158 = vunpack.c.l.b16 %v2126
        %v2159 = vunpack.c.l.b16 %v2127
        %v2160 = vunpack.c.l.b16 %v2128
        %v2161 = vunpack.c.l.b16 %v2129
        %v2162 = vunpack.c.l.b16 %v2130
        %v2163 = vpack.c.b16 %v2148, %v2147
        %v2164 = vpack.c.b16 %v2150, %v2149
        %v2165 = vpack.c.b16 %v2152, %v2151
        %v2166 = vpack.c.b16 %v2154, %v2153
        %v2167 = vpack.c.b16 %v2156, %v2155
        %v2168 = vpack.c.b16 %v2158, %v2157
        %v2169 = vpack.c.b16 %v2160, %v2159
        %v2170 = vpack.c.b16 %v2162, %v2161
        %2179 = vmatprep.subr.bf16.mxu0 0
        %2180 = vmatpush1.bf16.msra.mxu0 %v2170
        %2181 = vmatprep.subr.bf16.mxu0 0
        %2182 = vmatpush1.bf16.msra.mxu0 %v2169
        %2183 = vmatprep.subr.bf16.mxu0 0
        %2184 = vmatpush1.bf16.msra.mxu0 %v2168
        %2185 = vmatprep.subr.bf16.mxu0 0
        %2186 = vmatpush1.bf16.msra.mxu0 %v2167
        %2187 = vmatprep.subr.bf16.mxu0 0
        %2188 = vmatpush1.bf16.msra.mxu0 %v2166
        %2189 = vmatprep.subr.bf16.mxu0 0
        %2190 = vmatpush1.bf16.msra.mxu0 %v2165
        %2191 = vmatprep.subr.bf16.mxu0 0
        %2192 = vmatpush1.bf16.msra.mxu0 %v2164
        %2193 = vmatprep.subr.bf16.mxu0 0
        %2194 = vmatpush1.bf16.msra.mxu0 %v2163
        %2195 = vmatprep.subr.bf16.mxu0 0
        %2196 = vmatpush2.bf16.msra.mxu0 0
        %2197 = vmatprep.subr.bf16.mxu0 0
        %2198 = vmatpush2.bf16.msra.mxu0 0
        %2199 = vmatprep.subr.bf16.mxu0 0
        %2200 = vmatpush2.bf16.msra.mxu0 0
        %2201 = vmatprep.subr.bf16.mxu0 0
        %2202 = vmatpush2.bf16.msra.mxu0 0
        %2203 = vmatprep.subr.bf16.mxu0 0
        %2204 = vmatpush2.bf16.msra.mxu0 0
        %2205 = vmatprep.subr.bf16.mxu0 0
        %2206 = vmatpush2.bf16.msra.mxu0 0
        %2207 = vmatprep.subr.bf16.mxu0 0
        %2208 = vmatpush2.bf16.msra.mxu0 0
        %2209 = vmatprep.subr.bf16.mxu0 0
        %2210 = vmatpush2.bf16.msra.mxu0 0
        %2211 = vmatprep.mubr.bf16.mxu0 0
        %2212 = vmatmul.mubr.bf16.gmra.mxu0 %v2110
        %v2213 = vpop.f32.mrf.mxu0
        %v2214 = vadd.f32 0.0, %v2213
        %v2215 = vpop.f32.mrf.mxu0
        %v2216 = vpop.f32.mrf.mxu0
        %v2217 = vadd.f32 0.0, %v2216
        %v2218 = vpop.f32.mrf.mxu0
        %2219 = vmatprep.mubr.bf16.mxu0 0
        %2220 = vmatmul.mubr.bf16.gmra.mxu0 %v2111
        %v2221 = vpop.f32.mrf.mxu0
        %v2222 = vadd.f32 0.0, %v2221
        %v2223 = vpop.f32.mrf.mxu0
        %v2224 = vpop.f32.mrf.mxu0
        %v2225 = vadd.f32 0.0, %v2224
        %v2226 = vpop.f32.mrf.mxu0
        %2227 = vmatprep.mubr.bf16.mxu0 0
        %2228 = vmatmul.mubr.bf16.gmra.mxu0 %v2112
        %v2229 = vpop.f32.mrf.mxu0
        %v2230 = vadd.f32 0.0, %v2229
        %v2231 = vpop.f32.mrf.mxu0
        %v2232 = vpop.f32.mrf.mxu0
        %v2233 = vadd.f32 0.0, %v2232
        %v2234 = vpop.f32.mrf.mxu0
        %2235 = vmatprep.mubr.bf16.mxu0 0
        %2236 = vmatmul.mubr.bf16.gmra.mxu0 %v2113
        %v2237 = vpop.f32.mrf.mxu0
        %v2238 = vadd.f32 0.0, %v2237
        %v2239 = vpop.f32.mrf.mxu0
        %v2240 = vpop.f32.mrf.mxu0
        %v2241 = vadd.f32 0.0, %v2240
        %v2242 = vpop.f32.mrf.mxu0
        %2243 = vdwg.mxu0
        %v2260 = vunpack.c.l.b16 %v2086
        %v2261 = vunpack.c.l.b16 %v2087
        %v2262 = vunpack.c.l.b16 %v2088
        %v2263 = vunpack.c.l.b16 %v2089
        %v2264 = vunpack.c.l.b16 %v2090
        %v2265 = vunpack.c.l.b16 %v2091
        %v2266 = vunpack.c.l.b16 %v2092
        %v2267 = vunpack.c.l.b16 %v2093
        %v2268 = vunpack.c.l.b16 %v2094
        %v2269 = vunpack.c.l.b16 %v2095
        %v2270 = vunpack.c.l.b16 %v2096
        %v2271 = vunpack.c.l.b16 %v2097
        %v2272 = vunpack.c.l.b16 %v2098
        %v2273 = vunpack.c.l.b16 %v2099
        %v2274 = vunpack.c.l.b16 %v2100
        %v2275 = vunpack.c.l.b16 %v2101
        %v2276 = vpack.c.b16 %v2261, %v2260
        %v2277 = vpack.c.b16 %v2263, %v2262
        %v2278 = vpack.c.b16 %v2265, %v2264
        %v2279 = vpack.c.b16 %v2267, %v2266
        %v2280 = vpack.c.b16 %v2269, %v2268
        %v2281 = vpack.c.b16 %v2271, %v2270
        %v2282 = vpack.c.b16 %v2273, %v2272
        %v2283 = vpack.c.b16 %v2275, %v2274
        %2292 = vmatprep.subr.bf16.mxu0 0
        %2293 = vmatpush1.bf16.msra.mxu0 %v2283
        %2294 = vmatprep.subr.bf16.mxu0 0
        %2295 = vmatpush1.bf16.msra.mxu0 %v2282
        %2296 = vmatprep.subr.bf16.mxu0 0
        %2297 = vmatpush1.bf16.msra.mxu0 %v2281
        %2298 = vmatprep.subr.bf16.mxu0 0
        %2299 = vmatpush1.bf16.msra.mxu0 %v2280
        %2300 = vmatprep.subr.bf16.mxu0 0
        %2301 = vmatpush1.bf16.msra.mxu0 %v2279
        %2302 = vmatprep.subr.bf16.mxu0 0
        %2303 = vmatpush1.bf16.msra.mxu0 %v2278
        %2304 = vmatprep.subr.bf16.mxu0 0
        %2305 = vmatpush1.bf16.msra.mxu0 %v2277
        %2306 = vmatprep.subr.bf16.mxu0 0
        %2307 = vmatpush1.bf16.msra.mxu0 %v2276
        %2308 = vmatprep.subr.bf16.mxu0 0
        %2309 = vmatpush2.bf16.msra.mxu0 0
        %2310 = vmatprep.subr.bf16.mxu0 0
        %2311 = vmatpush2.bf16.msra.mxu0 0
        %2312 = vmatprep.subr.bf16.mxu0 0
        %2313 = vmatpush2.bf16.msra.mxu0 0
        %2314 = vmatprep.subr.bf16.mxu0 0
        %2315 = vmatpush2.bf16.msra.mxu0 0
        %2316 = vmatprep.subr.bf16.mxu0 0
        %2317 = vmatpush2.bf16.msra.mxu0 0
        %2318 = vmatprep.subr.bf16.mxu0 0
        %2319 = vmatpush2.bf16.msra.mxu0 0
        %2320 = vmatprep.subr.bf16.mxu0 0
        %2321 = vmatpush2.bf16.msra.mxu0 0
        %2322 = vmatprep.subr.bf16.mxu0 0
        %2323 = vmatpush2.bf16.msra.mxu0 0
        %2324 = vmatprep.mubr.bf16.mxu0 0
        %2325 = vmatmul.mubr.bf16.gmra.mxu0 %v2081
        %v2326 = vpop.f32.mrf.mxu0
        %v2327 = vadd.f32 %v2214, %v2326
        %v2328 = vpop.f32.mrf.mxu0
        %v2329 = vpop.f32.mrf.mxu0
        %v2330 = vadd.f32 %v2217, %v2329
        %v2331 = vpop.f32.mrf.mxu0
        %2332 = vmatprep.mubr.bf16.mxu0 0
        %2333 = vmatmul.mubr.bf16.gmra.mxu0 %v2082
        %v2334 = vpop.f32.mrf.mxu0
        %v2335 = vadd.f32 %v2222, %v2334
        %v2336 = vpop.f32.mrf.mxu0
        %v2337 = vpop.f32.mrf.mxu0
        %v2338 = vadd.f32 %v2225, %v2337
        %v2339 = vpop.f32.mrf.mxu0
        %2340 = vmatprep.mubr.bf16.mxu0 0
        %2341 = vmatmul.mubr.bf16.gmra.mxu0 %v2083
        %v2342 = vpop.f32.mrf.mxu0
        %v2343 = vadd.f32 %v2230, %v2342
        %v2344 = vpop.f32.mrf.mxu0
        %v2345 = vpop.f32.mrf.mxu0
        %v2346 = vadd.f32 %v2233, %v2345
        %v2347 = vpop.f32.mrf.mxu0
        %2348 = vmatprep.mubr.bf16.mxu0 0
        %2349 = vmatmul.mubr.bf16.gmra.mxu0 %v2084
        %v2350 = vpop.f32.mrf.mxu0
        %v2351 = vadd.f32 %v2238, %v2350
        %v2352 = vpop.f32.mrf.mxu0
        %v2353 = vpop.f32.mrf.mxu0
        %v2354 = vadd.f32 %v2241, %v2353
        %v2355 = vpop.f32.mrf.mxu0
        %2356 = vdwg.mxu0
        %v2357 = vld [vmem:[#allocation2 + $0x2] sm:$0xff]
        %v2358 = vld [vmem:[#allocation2 + $0x12] sm:$0xff]
        %v2359 = vld [vmem:[#allocation2 + $0x22] sm:$0xff]
        %v2360 = vld [vmem:[#allocation2 + $0x32] sm:$0xff]
        %v2361 = vld [vmem:[#allocation2 + $0x42] sm:$0xff]
        %v2362 = vld [vmem:[#allocation2 + $0x52] sm:$0xff]
        %v2363 = vld [vmem:[#allocation2 + $0x62] sm:$0xff]
        %v2364 = vld [vmem:[#allocation2 + $0x72] sm:$0xff]
        %v2365 = vpack.c.bf16 %v2358, %v2357
        %v2366 = vpack.c.bf16 %v2360, %v2359
        %v2367 = vpack.c.bf16 %v2362, %v2361
        %v2368 = vpack.c.bf16 %v2364, %v2363
        %s2369 = scalar_lea.vmem [#allocation11], 704
        %v2370 = vld [vmem:[%s2369] sm:$0xf]
        %v2371 = vld [vmem:[%s2369 + $0x4] sm:$0xf]
        %v2372 = vld [vmem:[%s2369 + $0x8] sm:$0xf]
        %v2373 = vld [vmem:[%s2369 + $0xc] sm:$0xf]
        %v2374 = vld [vmem:[%s2369 + $0x10] sm:$0xf]
        %v2375 = vld [vmem:[%s2369 + $0x14] sm:$0xf]
        %v2376 = vld [vmem:[%s2369 + $0x18] sm:$0xf]
        %v2377 = vld [vmem:[%s2369 + $0x1c] sm:$0xf]
        %v2378 = vld [vmem:[%s2369 + $0x20] sm:$0xf]
        %v2379 = vld [vmem:[%s2369 + $0x24] sm:$0xf]
        %v2380 = vld [vmem:[%s2369 + $0x28] sm:$0xf]
        %v2381 = vld [vmem:[%s2369 + $0x2c] sm:$0xf]
        %v2382 = vld [vmem:[%s2369 + $0x30] sm:$0xf]
        %v2383 = vld [vmem:[%s2369 + $0x34] sm:$0xf]
        %v2384 = vld [vmem:[%s2369 + $0x38] sm:$0xf]
        %v2385 = vld [vmem:[%s2369 + $0x3c] sm:$0xf]
        %v2402 = vunpack.c.l.b16 %v2370
        %v2403 = vunpack.c.l.b16 %v2371
        %v2404 = vunpack.c.l.b16 %v2372
        %v2405 = vunpack.c.l.b16 %v2373
        %v2406 = vunpack.c.l.b16 %v2374
        %v2407 = vunpack.c.l.b16 %v2375
        %v2408 = vunpack.c.l.b16 %v2376
        %v2409 = vunpack.c.l.b16 %v2377
        %v2410 = vunpack.c.l.b16 %v2378
        %v2411 = vunpack.c.l.b16 %v2379
        %v2412 = vunpack.c.l.b16 %v2380
        %v2413 = vunpack.c.l.b16 %v2381
        %v2414 = vunpack.c.l.b16 %v2382
        %v2415 = vunpack.c.l.b16 %v2383
        %v2416 = vunpack.c.l.b16 %v2384
        %v2417 = vunpack.c.l.b16 %v2385
        %v2418 = vpack.c.b16 %v2403, %v2402
        %v2419 = vpack.c.b16 %v2405, %v2404
        %v2420 = vpack.c.b16 %v2407, %v2406
        %v2421 = vpack.c.b16 %v2409, %v2408
        %v2422 = vpack.c.b16 %v2411, %v2410
        %v2423 = vpack.c.b16 %v2413, %v2412
        %v2424 = vpack.c.b16 %v2415, %v2414
        %v2425 = vpack.c.b16 %v2417, %v2416
        %2434 = vmatprep.subr.bf16.mxu0 0
        %2435 = vmatpush1.bf16.msra.mxu0 %v2425
        %2436 = vmatprep.subr.bf16.mxu0 0
        %2437 = vmatpush1.bf16.msra.mxu0 %v2424
        %2438 = vmatprep.subr.bf16.mxu0 0
        %2439 = vmatpush1.bf16.msra.mxu0 %v2423
        %2440 = vmatprep.subr.bf16.mxu0 0
        %2441 = vmatpush1.bf16.msra.mxu0 %v2422
        %2442 = vmatprep.subr.bf16.mxu0 0
        %2443 = vmatpush1.bf16.msra.mxu0 %v2421
        %2444 = vmatprep.subr.bf16.mxu0 0
        %2445 = vmatpush1.bf16.msra.mxu0 %v2420
        %2446 = vmatprep.subr.bf16.mxu0 0
        %2447 = vmatpush1.bf16.msra.mxu0 %v2419
        %2448 = vmatprep.subr.bf16.mxu0 0
        %2449 = vmatpush1.bf16.msra.mxu0 %v2418
        %2450 = vmatprep.subr.bf16.mxu0 0
        %2451 = vmatpush2.bf16.msra.mxu0 0
        %2452 = vmatprep.subr.bf16.mxu0 0
        %2453 = vmatpush2.bf16.msra.mxu0 0
        %2454 = vmatprep.subr.bf16.mxu0 0
        %2455 = vmatpush2.bf16.msra.mxu0 0
        %2456 = vmatprep.subr.bf16.mxu0 0
        %2457 = vmatpush2.bf16.msra.mxu0 0
        %2458 = vmatprep.subr.bf16.mxu0 0
        %2459 = vmatpush2.bf16.msra.mxu0 0
        %2460 = vmatprep.subr.bf16.mxu0 0
        %2461 = vmatpush2.bf16.msra.mxu0 0
        %2462 = vmatprep.subr.bf16.mxu0 0
        %2463 = vmatpush2.bf16.msra.mxu0 0
        %2464 = vmatprep.subr.bf16.mxu0 0
        %2465 = vmatpush2.bf16.msra.mxu0 0
        %2466 = vmatprep.mubr.bf16.mxu0 0
        %2467 = vmatmul.mubr.bf16.gmra.mxu0 %v2365
        %v2468 = vpop.f32.mrf.mxu0
        %v2469 = vadd.f32 0.0, %v2468
        %v2470 = vpop.f32.mrf.mxu0
        %v2471 = vpop.f32.mrf.mxu0
        %v2472 = vadd.f32 0.0, %v2471
        %v2473 = vpop.f32.mrf.mxu0
        %2474 = vmatprep.mubr.bf16.mxu0 0
        %2475 = vmatmul.mubr.bf16.gmra.mxu0 %v2366
        %v2476 = vpop.f32.mrf.mxu0
        %v2477 = vadd.f32 0.0, %v2476
        %v2478 = vpop.f32.mrf.mxu0
        %v2479 = vpop.f32.mrf.mxu0
        %v2480 = vadd.f32 0.0, %v2479
        %v2481 = vpop.f32.mrf.mxu0
        %2482 = vmatprep.mubr.bf16.mxu0 0
        %2483 = vmatmul.mubr.bf16.gmra.mxu0 %v2367
        %v2484 = vpop.f32.mrf.mxu0
        %v2485 = vadd.f32 0.0, %v2484
        %v2486 = vpop.f32.mrf.mxu0
        %v2487 = vpop.f32.mrf.mxu0
        %v2488 = vadd.f32 0.0, %v2487
        %v2489 = vpop.f32.mrf.mxu0
        %2490 = vmatprep.mubr.bf16.mxu0 0
        %2491 = vmatmul.mubr.bf16.gmra.mxu0 %v2368
        %v2492 = vpop.f32.mrf.mxu0
        %v2493 = vadd.f32 0.0, %v2492
        %v2494 = vpop.f32.mrf.mxu0
        %v2495 = vpop.f32.mrf.mxu0
        %v2496 = vadd.f32 0.0, %v2495
        %v2497 = vpop.f32.mrf.mxu0
        %2498 = vdwg.mxu0
        %v2499 = vadd.f32 %v2327, %v2469
        %v2500 = vadd.f32 %v2330, %v2472
        %v2501 = vadd.f32 %v2335, %v2477
        %v2502 = vadd.f32 %v2338, %v2480
        %v2503 = vadd.f32 %v2343, %v2485
        %v2504 = vadd.f32 %v2346, %v2488
        %v2505 = vadd.f32 %v2351, %v2493
        %v2506 = vadd.f32 %v2354, %v2496
        %v2507 = vld [vmem:[%s670] sm:$0xff]
        %v2508 = vld [vmem:[%s670 + $0x10] sm:$0xff]
        %v2509 = vld [vmem:[%s670 + $0x20] sm:$0xff]
        %v2510 = vld [vmem:[%s670 + $0x30] sm:$0xff]
        %v2511 = vld [vmem:[%s670 + $0x40] sm:$0xff]
        %v2512 = vld [vmem:[%s670 + $0x50] sm:$0xff]
        %v2513 = vld [vmem:[%s670 + $0x60] sm:$0xff]
        %v2514 = vld [vmem:[%s670 + $0x70] sm:$0xff]
        %v2515 = vpack.c.bf16 %v2508, %v2507
        %v2516 = vpack.c.bf16 %v2510, %v2509
        %v2517 = vpack.c.bf16 %v2512, %v2511
        %v2518 = vpack.c.bf16 %v2514, %v2513
        %s2519 = scalar_lea.vmem [#allocation11], 768
        %v2520 = vld [vmem:[%s2519] sm:$0xf]
        %v2521 = vld [vmem:[%s2519 + $0x4] sm:$0xf]
        %v2522 = vld [vmem:[%s2519 + $0x8] sm:$0xf]
        %v2523 = vld [vmem:[%s2519 + $0xc] sm:$0xf]
        %v2524 = vld [vmem:[%s2519 + $0x10] sm:$0xf]
        %v2525 = vld [vmem:[%s2519 + $0x14] sm:$0xf]
        %v2526 = vld [vmem:[%s2519 + $0x18] sm:$0xf]
        %v2527 = vld [vmem:[%s2519 + $0x1c] sm:$0xf]
        %v2528 = vld [vmem:[%s2519 + $0x20] sm:$0xf]
        %v2529 = vld [vmem:[%s2519 + $0x24] sm:$0xf]
        %v2530 = vld [vmem:[%s2519 + $0x28] sm:$0xf]
        %v2531 = vld [vmem:[%s2519 + $0x2c] sm:$0xf]
        %v2532 = vld [vmem:[%s2519 + $0x30] sm:$0xf]
        %v2533 = vld [vmem:[%s2519 + $0x34] sm:$0xf]
        %v2534 = vld [vmem:[%s2519 + $0x38] sm:$0xf]
        %v2535 = vld [vmem:[%s2519 + $0x3c] sm:$0xf]
        %v2552 = vunpack.c.l.b16 %v2520
        %v2553 = vunpack.c.l.b16 %v2521
        %v2554 = vunpack.c.l.b16 %v2522
        %v2555 = vunpack.c.l.b16 %v2523
        %v2556 = vunpack.c.l.b16 %v2524
        %v2557 = vunpack.c.l.b16 %v2525
        %v2558 = vunpack.c.l.b16 %v2526
        %v2559 = vunpack.c.l.b16 %v2527
        %v2560 = vunpack.c.l.b16 %v2528
        %v2561 = vunpack.c.l.b16 %v2529
        %v2562 = vunpack.c.l.b16 %v2530
        %v2563 = vunpack.c.l.b16 %v2531
        %v2564 = vunpack.c.l.b16 %v2532
        %v2565 = vunpack.c.l.b16 %v2533
        %v2566 = vunpack.c.l.b16 %v2534
        %v2567 = vunpack.c.l.b16 %v2535
        %v2568 = vpack.c.b16 %v2553, %v2552
        %v2569 = vpack.c.b16 %v2555, %v2554
        %v2570 = vpack.c.b16 %v2557, %v2556
        %v2571 = vpack.c.b16 %v2559, %v2558
        %v2572 = vpack.c.b16 %v2561, %v2560
        %v2573 = vpack.c.b16 %v2563, %v2562
        %v2574 = vpack.c.b16 %v2565, %v2564
        %v2575 = vpack.c.b16 %v2567, %v2566
        %2584 = vmatprep.subr.bf16.mxu0 0
        %2585 = vmatpush1.bf16.msra.mxu0 %v2575
        %2586 = vmatprep.subr.bf16.mxu0 0
        %2587 = vmatpush1.bf16.msra.mxu0 %v2574
        %2588 = vmatprep.subr.bf16.mxu0 0
        %2589 = vmatpush1.bf16.msra.mxu0 %v2573
        %2590 = vmatprep.subr.bf16.mxu0 0
        %2591 = vmatpush1.bf16.msra.mxu0 %v2572
        %2592 = vmatprep.subr.bf16.mxu0 0
        %2593 = vmatpush1.bf16.msra.mxu0 %v2571
        %2594 = vmatprep.subr.bf16.mxu0 0
        %2595 = vmatpush1.bf16.msra.mxu0 %v2570
        %2596 = vmatprep.subr.bf16.mxu0 0
        %2597 = vmatpush1.bf16.msra.mxu0 %v2569
        %2598 = vmatprep.subr.bf16.mxu0 0
        %2599 = vmatpush1.bf16.msra.mxu0 %v2568
        %2600 = vmatprep.subr.bf16.mxu0 0
        %2601 = vmatpush2.bf16.msra.mxu0 0
        %2602 = vmatprep.subr.bf16.mxu0 0
        %2603 = vmatpush2.bf16.msra.mxu0 0
        %2604 = vmatprep.subr.bf16.mxu0 0
        %2605 = vmatpush2.bf16.msra.mxu0 0
        %2606 = vmatprep.subr.bf16.mxu0 0
        %2607 = vmatpush2.bf16.msra.mxu0 0
        %2608 = vmatprep.subr.bf16.mxu0 0
        %2609 = vmatpush2.bf16.msra.mxu0 0
        %2610 = vmatprep.subr.bf16.mxu0 0
        %2611 = vmatpush2.bf16.msra.mxu0 0
        %2612 = vmatprep.subr.bf16.mxu0 0
        %2613 = vmatpush2.bf16.msra.mxu0 0
        %2614 = vmatprep.subr.bf16.mxu0 0
        %2615 = vmatpush2.bf16.msra.mxu0 0
        %2616 = vmatprep.mubr.bf16.mxu0 0
        %2617 = vmatmul.mubr.bf16.gmra.mxu0 %v2515
        %v2618 = vpop.f32.mrf.mxu0
        %v2619 = vadd.f32 0.0, %v2618
        %v2620 = vpop.f32.mrf.mxu0
        %v2621 = vpop.f32.mrf.mxu0
        %v2622 = vadd.f32 0.0, %v2621
        %v2623 = vpop.f32.mrf.mxu0
        %2624 = vmatprep.mubr.bf16.mxu0 0
        %2625 = vmatmul.mubr.bf16.gmra.mxu0 %v2516
        %v2626 = vpop.f32.mrf.mxu0
        %v2627 = vadd.f32 0.0, %v2626
        %v2628 = vpop.f32.mrf.mxu0
        %v2629 = vpop.f32.mrf.mxu0
        %v2630 = vadd.f32 0.0, %v2629
        %v2631 = vpop.f32.mrf.mxu0
        %2632 = vmatprep.mubr.bf16.mxu0 0
        %2633 = vmatmul.mubr.bf16.gmra.mxu0 %v2517
        %v2634 = vpop.f32.mrf.mxu0
        %v2635 = vadd.f32 0.0, %v2634
        %v2636 = vpop.f32.mrf.mxu0
        %v2637 = vpop.f32.mrf.mxu0
        %v2638 = vadd.f32 0.0, %v2637
        %v2639 = vpop.f32.mrf.mxu0
        %2640 = vmatprep.mubr.bf16.mxu0 0
        %2641 = vmatmul.mubr.bf16.gmra.mxu0 %v2518
        %v2642 = vpop.f32.mrf.mxu0
        %v2643 = vadd.f32 0.0, %v2642
        %v2644 = vpop.f32.mrf.mxu0
        %v2645 = vpop.f32.mrf.mxu0
        %v2646 = vadd.f32 0.0, %v2645
        %v2647 = vpop.f32.mrf.mxu0
        %2648 = vdwg.mxu0
        %v2649 = vadd.f32 %v2499, %v2619
        %v2650 = vadd.f32 %v2500, %v2622
        %v2651 = vadd.f32 %v2501, %v2627
        %v2652 = vadd.f32 %v2502, %v2630
        %v2653 = vadd.f32 %v2503, %v2635
        %v2654 = vadd.f32 %v2504, %v2638
        %v2655 = vadd.f32 %v2505, %v2643
        %v2656 = vadd.f32 %v2506, %v2646
        %v2657 = vld [vmem:[%s670 + $0x1] sm:$0xff]
        %v2658 = vld [vmem:[%s670 + $0x11] sm:$0xff]
        %v2659 = vld [vmem:[%s670 + $0x21] sm:$0xff]
        %v2660 = vld [vmem:[%s670 + $0x31] sm:$0xff]
        %v2661 = vld [vmem:[%s670 + $0x41] sm:$0xff]
        %v2662 = vld [vmem:[%s670 + $0x51] sm:$0xff]
        %v2663 = vld [vmem:[%s670 + $0x61] sm:$0xff]
        %v2664 = vld [vmem:[%s670 + $0x71] sm:$0xff]
        %v2665 = vpack.c.bf16 %v2658, %v2657
        %v2666 = vpack.c.bf16 %v2660, %v2659
        %v2667 = vpack.c.bf16 %v2662, %v2661
        %v2668 = vpack.c.bf16 %v2664, %v2663
        %s2669 = scalar_lea.vmem [#allocation11], 832
        %v2670 = vld [vmem:[%s2669] sm:$0xf]
        %v2671 = vld [vmem:[%s2669 + $0x4] sm:$0xf]
        %v2672 = vld [vmem:[%s2669 + $0x8] sm:$0xf]
        %v2673 = vld [vmem:[%s2669 + $0xc] sm:$0xf]
        %v2674 = vld [vmem:[%s2669 + $0x10] sm:$0xf]
        %v2675 = vld [vmem:[%s2669 + $0x14] sm:$0xf]
        %v2676 = vld [vmem:[%s2669 + $0x18] sm:$0xf]
        %v2677 = vld [vmem:[%s2669 + $0x1c] sm:$0xf]
        %v2678 = vld [vmem:[%s2669 + $0x20] sm:$0xf]
        %v2679 = vld [vmem:[%s2669 + $0x24] sm:$0xf]
        %v2680 = vld [vmem:[%s2669 + $0x28] sm:$0xf]
        %v2681 = vld [vmem:[%s2669 + $0x2c] sm:$0xf]
        %v2682 = vld [vmem:[%s2669 + $0x30] sm:$0xf]
        %v2683 = vld [vmem:[%s2669 + $0x34] sm:$0xf]
        %v2684 = vld [vmem:[%s2669 + $0x38] sm:$0xf]
        %v2685 = vld [vmem:[%s2669 + $0x3c] sm:$0xf]
        %v2702 = vunpack.c.l.b16 %v2670
        %v2703 = vunpack.c.l.b16 %v2671
        %v2704 = vunpack.c.l.b16 %v2672
        %v2705 = vunpack.c.l.b16 %v2673
        %v2706 = vunpack.c.l.b16 %v2674
        %v2707 = vunpack.c.l.b16 %v2675
        %v2708 = vunpack.c.l.b16 %v2676
        %v2709 = vunpack.c.l.b16 %v2677
        %v2710 = vunpack.c.l.b16 %v2678
        %v2711 = vunpack.c.l.b16 %v2679
        %v2712 = vunpack.c.l.b16 %v2680
        %v2713 = vunpack.c.l.b16 %v2681
        %v2714 = vunpack.c.l.b16 %v2682
        %v2715 = vunpack.c.l.b16 %v2683
        %v2716 = vunpack.c.l.b16 %v2684
        %v2717 = vunpack.c.l.b16 %v2685
        %v2718 = vpack.c.b16 %v2703, %v2702
        %v2719 = vpack.c.b16 %v2705, %v2704
        %v2720 = vpack.c.b16 %v2707, %v2706
        %v2721 = vpack.c.b16 %v2709, %v2708
        %v2722 = vpack.c.b16 %v2711, %v2710
        %v2723 = vpack.c.b16 %v2713, %v2712
        %v2724 = vpack.c.b16 %v2715, %v2714
        %v2725 = vpack.c.b16 %v2717, %v2716
        %2734 = vmatprep.subr.bf16.mxu0 0
        %2735 = vmatpush1.bf16.msra.mxu0 %v2725
        %2736 = vmatprep.subr.bf16.mxu0 0
        %2737 = vmatpush1.bf16.msra.mxu0 %v2724
        %2738 = vmatprep.subr.bf16.mxu0 0
        %2739 = vmatpush1.bf16.msra.mxu0 %v2723
        %2740 = vmatprep.subr.bf16.mxu0 0
        %2741 = vmatpush1.bf16.msra.mxu0 %v2722
        %2742 = vmatprep.subr.bf16.mxu0 0
        %2743 = vmatpush1.bf16.msra.mxu0 %v2721
        %2744 = vmatprep.subr.bf16.mxu0 0
        %2745 = vmatpush1.bf16.msra.mxu0 %v2720
        %2746 = vmatprep.subr.bf16.mxu0 0
        %2747 = vmatpush1.bf16.msra.mxu0 %v2719
        %2748 = vmatprep.subr.bf16.mxu0 0
        %2749 = vmatpush1.bf16.msra.mxu0 %v2718
        %2750 = vmatprep.subr.bf16.mxu0 0
        %2751 = vmatpush2.bf16.msra.mxu0 0
        %2752 = vmatprep.subr.bf16.mxu0 0
        %2753 = vmatpush2.bf16.msra.mxu0 0
        %2754 = vmatprep.subr.bf16.mxu0 0
        %2755 = vmatpush2.bf16.msra.mxu0 0
        %2756 = vmatprep.subr.bf16.mxu0 0
        %2757 = vmatpush2.bf16.msra.mxu0 0
        %2758 = vmatprep.subr.bf16.mxu0 0
        %2759 = vmatpush2.bf16.msra.mxu0 0
        %2760 = vmatprep.subr.bf16.mxu0 0
        %2761 = vmatpush2.bf16.msra.mxu0 0
        %2762 = vmatprep.subr.bf16.mxu0 0
        %2763 = vmatpush2.bf16.msra.mxu0 0
        %2764 = vmatprep.subr.bf16.mxu0 0
        %2765 = vmatpush2.bf16.msra.mxu0 0
        %2766 = vmatprep.mubr.bf16.mxu0 0
        %2767 = vmatmul.mubr.bf16.gmra.mxu0 %v2665
        %v2768 = vpop.f32.mrf.mxu0
        %v2769 = vadd.f32 0.0, %v2768
        %v2770 = vpop.f32.mrf.mxu0
        %v2771 = vpop.f32.mrf.mxu0
        %v2772 = vadd.f32 0.0, %v2771
        %v2773 = vpop.f32.mrf.mxu0
        %2774 = vmatprep.mubr.bf16.mxu0 0
        %2775 = vmatmul.mubr.bf16.gmra.mxu0 %v2666
        %v2776 = vpop.f32.mrf.mxu0
        %v2777 = vadd.f32 0.0, %v2776
        %v2778 = vpop.f32.mrf.mxu0
        %v2779 = vpop.f32.mrf.mxu0
        %v2780 = vadd.f32 0.0, %v2779
        %v2781 = vpop.f32.mrf.mxu0
        %2782 = vmatprep.mubr.bf16.mxu0 0
        %2783 = vmatmul.mubr.bf16.gmra.mxu0 %v2667
        %v2784 = vpop.f32.mrf.mxu0
        %v2785 = vadd.f32 0.0, %v2784
        %v2786 = vpop.f32.mrf.mxu0
        %v2787 = vpop.f32.mrf.mxu0
        %v2788 = vadd.f32 0.0, %v2787
        %v2789 = vpop.f32.mrf.mxu0
        %2790 = vmatprep.mubr.bf16.mxu0 0
        %2791 = vmatmul.mubr.bf16.gmra.mxu0 %v2668
        %v2792 = vpop.f32.mrf.mxu0
        %v2793 = vadd.f32 0.0, %v2792
        %v2794 = vpop.f32.mrf.mxu0
        %v2795 = vpop.f32.mrf.mxu0
        %v2796 = vadd.f32 0.0, %v2795
        %v2797 = vpop.f32.mrf.mxu0
        %2798 = vdwg.mxu0
        %v2799 = vadd.f32 %v2649, %v2769
        %v2800 = vadd.f32 %v2650, %v2772
        %v2801 = vadd.f32 %v2651, %v2777
        %v2802 = vadd.f32 %v2652, %v2780
        %v2803 = vadd.f32 %v2653, %v2785
        %v2804 = vadd.f32 %v2654, %v2788
        %v2805 = vadd.f32 %v2655, %v2793
        %v2806 = vadd.f32 %v2656, %v2796
        %v2807 = vld [vmem:[%s670 + $0x2] sm:$0xff]
        %v2808 = vld [vmem:[%s670 + $0x12] sm:$0xff]
        %v2809 = vld [vmem:[%s670 + $0x22] sm:$0xff]
        %v2810 = vld [vmem:[%s670 + $0x32] sm:$0xff]
        %v2811 = vld [vmem:[%s670 + $0x42] sm:$0xff]
        %v2812 = vld [vmem:[%s670 + $0x52] sm:$0xff]
        %v2813 = vld [vmem:[%s670 + $0x62] sm:$0xff]
        %v2814 = vld [vmem:[%s670 + $0x72] sm:$0xff]
        %v2815 = vpack.c.bf16 %v2808, %v2807
        %v2816 = vpack.c.bf16 %v2810, %v2809
        %v2817 = vpack.c.bf16 %v2812, %v2811
        %v2818 = vpack.c.bf16 %v2814, %v2813
        %s2819 = scalar_lea.vmem [#allocation11], 896
        %v2820 = vld [vmem:[%s2819] sm:$0xf]
        %v2821 = vld [vmem:[%s2819 + $0x4] sm:$0xf]
        %v2822 = vld [vmem:[%s2819 + $0x8] sm:$0xf]
        %v2823 = vld [vmem:[%s2819 + $0xc] sm:$0xf]
        %v2824 = vld [vmem:[%s2819 + $0x10] sm:$0xf]
        %v2825 = vld [vmem:[%s2819 + $0x14] sm:$0xf]
        %v2826 = vld [vmem:[%s2819 + $0x18] sm:$0xf]
        %v2827 = vld [vmem:[%s2819 + $0x1c] sm:$0xf]
        %v2828 = vld [vmem:[%s2819 + $0x20] sm:$0xf]
        %v2829 = vld [vmem:[%s2819 + $0x24] sm:$0xf]
        %v2830 = vld [vmem:[%s2819 + $0x28] sm:$0xf]
        %v2831 = vld [vmem:[%s2819 + $0x2c] sm:$0xf]
        %v2832 = vld [vmem:[%s2819 + $0x30] sm:$0xf]
        %v2833 = vld [vmem:[%s2819 + $0x34] sm:$0xf]
        %v2834 = vld [vmem:[%s2819 + $0x38] sm:$0xf]
        %v2835 = vld [vmem:[%s2819 + $0x3c] sm:$0xf]
        %v2852 = vunpack.c.l.b16 %v2820
        %v2853 = vunpack.c.l.b16 %v2821
        %v2854 = vunpack.c.l.b16 %v2822
        %v2855 = vunpack.c.l.b16 %v2823
        %v2856 = vunpack.c.l.b16 %v2824
        %v2857 = vunpack.c.l.b16 %v2825
        %v2858 = vunpack.c.l.b16 %v2826
        %v2859 = vunpack.c.l.b16 %v2827
        %v2860 = vunpack.c.l.b16 %v2828
        %v2861 = vunpack.c.l.b16 %v2829
        %v2862 = vunpack.c.l.b16 %v2830
        %v2863 = vunpack.c.l.b16 %v2831
        %v2864 = vunpack.c.l.b16 %v2832
        %v2865 = vunpack.c.l.b16 %v2833
        %v2866 = vunpack.c.l.b16 %v2834
        %v2867 = vunpack.c.l.b16 %v2835
        %v2868 = vpack.c.b16 %v2853, %v2852
        %v2869 = vpack.c.b16 %v2855, %v2854
        %v2870 = vpack.c.b16 %v2857, %v2856
        %v2871 = vpack.c.b16 %v2859, %v2858
        %v2872 = vpack.c.b16 %v2861, %v2860
        %v2873 = vpack.c.b16 %v2863, %v2862
        %v2874 = vpack.c.b16 %v2865, %v2864
        %v2875 = vpack.c.b16 %v2867, %v2866
        %2884 = vmatprep.subr.bf16.mxu0 0
        %2885 = vmatpush1.bf16.msra.mxu0 %v2875
        %2886 = vmatprep.subr.bf16.mxu0 0
        %2887 = vmatpush1.bf16.msra.mxu0 %v2874
        %2888 = vmatprep.subr.bf16.mxu0 0
        %2889 = vmatpush1.bf16.msra.mxu0 %v2873
        %2890 = vmatprep.subr.bf16.mxu0 0
        %2891 = vmatpush1.bf16.msra.mxu0 %v2872
        %2892 = vmatprep.subr.bf16.mxu0 0
        %2893 = vmatpush1.bf16.msra.mxu0 %v2871
        %2894 = vmatprep.subr.bf16.mxu0 0
        %2895 = vmatpush1.bf16.msra.mxu0 %v2870
        %2896 = vmatprep.subr.bf16.mxu0 0
        %2897 = vmatpush1.bf16.msra.mxu0 %v2869
        %2898 = vmatprep.subr.bf16.mxu0 0
        %2899 = vmatpush1.bf16.msra.mxu0 %v2868
        %2900 = vmatprep.subr.bf16.mxu0 0
        %2901 = vmatpush2.bf16.msra.mxu0 0
        %2902 = vmatprep.subr.bf16.mxu0 0
        %2903 = vmatpush2.bf16.msra.mxu0 0
        %2904 = vmatprep.subr.bf16.mxu0 0
        %2905 = vmatpush2.bf16.msra.mxu0 0
        %2906 = vmatprep.subr.bf16.mxu0 0
        %2907 = vmatpush2.bf16.msra.mxu0 0
        %2908 = vmatprep.subr.bf16.mxu0 0
        %2909 = vmatpush2.bf16.msra.mxu0 0
        %2910 = vmatprep.subr.bf16.mxu0 0
        %2911 = vmatpush2.bf16.msra.mxu0 0
        %2912 = vmatprep.subr.bf16.mxu0 0
        %2913 = vmatpush2.bf16.msra.mxu0 0
        %2914 = vmatprep.subr.bf16.mxu0 0
        %2915 = vmatpush2.bf16.msra.mxu0 0
        %2916 = vmatprep.mubr.bf16.mxu0 0
        %2917 = vmatmul.mubr.bf16.gmra.mxu0 %v2815
        %v2918 = vpop.f32.mrf.mxu0
        %v2919 = vadd.f32 0.0, %v2918
        %v2920 = vpop.f32.mrf.mxu0
        %v2921 = vpop.f32.mrf.mxu0
        %v2922 = vadd.f32 0.0, %v2921
        %v2923 = vpop.f32.mrf.mxu0
        %2924 = vmatprep.mubr.bf16.mxu0 0
        %2925 = vmatmul.mubr.bf16.gmra.mxu0 %v2816
        %v2926 = vpop.f32.mrf.mxu0
        %v2927 = vadd.f32 0.0, %v2926
        %v2928 = vpop.f32.mrf.mxu0
        %v2929 = vpop.f32.mrf.mxu0
        %v2930 = vadd.f32 0.0, %v2929
        %v2931 = vpop.f32.mrf.mxu0
        %2932 = vmatprep.mubr.bf16.mxu0 0
        %2933 = vmatmul.mubr.bf16.gmra.mxu0 %v2817
        %v2934 = vpop.f32.mrf.mxu0
        %v2935 = vadd.f32 0.0, %v2934
        %v2936 = vpop.f32.mrf.mxu0
        %v2937 = vpop.f32.mrf.mxu0
        %v2938 = vadd.f32 0.0, %v2937
        %v2939 = vpop.f32.mrf.mxu0
        %2940 = vmatprep.mubr.bf16.mxu0 0
        %2941 = vmatmul.mubr.bf16.gmra.mxu0 %v2818
        %v2942 = vpop.f32.mrf.mxu0
        %v2943 = vadd.f32 0.0, %v2942
        %v2944 = vpop.f32.mrf.mxu0
        %v2945 = vpop.f32.mrf.mxu0
        %v2946 = vadd.f32 0.0, %v2945
        %v2947 = vpop.f32.mrf.mxu0
        %2948 = vdwg.mxu0
        %v2949 = vadd.f32 %v2799, %v2919
        %v2950 = vadd.f32 %v2800, %v2922
        %v2951 = vadd.f32 %v2801, %v2927
        %v2952 = vadd.f32 %v2802, %v2930
        %v2953 = vadd.f32 %v2803, %v2935
        %v2954 = vadd.f32 %v2804, %v2938
        %v2955 = vadd.f32 %v2805, %v2943
        %v2956 = vadd.f32 %v2806, %v2946
        %v2957 = vld [vmem:[%s1562] sm:$0xff]
        %v2958 = vld [vmem:[%s1562 + $0x10] sm:$0xff]
        %v2959 = vld [vmem:[%s1562 + $0x20] sm:$0xff]
        %v2960 = vld [vmem:[%s1562 + $0x30] sm:$0xff]
        %v2961 = vld [vmem:[%s1562 + $0x40] sm:$0xff]
        %v2962 = vld [vmem:[%s1562 + $0x50] sm:$0xff]
        %v2963 = vld [vmem:[%s1562 + $0x60] sm:$0xff]
        %v2964 = vld [vmem:[%s1562 + $0x70] sm:$0xff]
        %v2965 = vpack.c.bf16 %v2958, %v2957
        %v2966 = vpack.c.bf16 %v2960, %v2959
        %v2967 = vpack.c.bf16 %v2962, %v2961
        %v2968 = vpack.c.bf16 %v2964, %v2963
        %s2969 = scalar_lea.vmem [#allocation11], 960
        %v2970 = vld [vmem:[%s2969] sm:$0xf]
        %v2971 = vld [vmem:[%s2969 + $0x4] sm:$0xf]
        %v2972 = vld [vmem:[%s2969 + $0x8] sm:$0xf]
        %v2973 = vld [vmem:[%s2969 + $0xc] sm:$0xf]
        %v2974 = vld [vmem:[%s2969 + $0x10] sm:$0xf]
        %v2975 = vld [vmem:[%s2969 + $0x14] sm:$0xf]
        %v2976 = vld [vmem:[%s2969 + $0x18] sm:$0xf]
        %v2977 = vld [vmem:[%s2969 + $0x1c] sm:$0xf]
        %v2978 = vld [vmem:[%s2969 + $0x20] sm:$0xf]
        %v2979 = vld [vmem:[%s2969 + $0x24] sm:$0xf]
        %v2980 = vld [vmem:[%s2969 + $0x28] sm:$0xf]
        %v2981 = vld [vmem:[%s2969 + $0x2c] sm:$0xf]
        %v2982 = vld [vmem:[%s2969 + $0x30] sm:$0xf]
        %v2983 = vld [vmem:[%s2969 + $0x34] sm:$0xf]
        %v2984 = vld [vmem:[%s2969 + $0x38] sm:$0xf]
        %v2985 = vld [vmem:[%s2969 + $0x3c] sm:$0xf]
        %v3002 = vunpack.c.l.b16 %v2970
        %v3003 = vunpack.c.l.b16 %v2971
        %v3004 = vunpack.c.l.b16 %v2972
        %v3005 = vunpack.c.l.b16 %v2973
        %v3006 = vunpack.c.l.b16 %v2974
        %v3007 = vunpack.c.l.b16 %v2975
        %v3008 = vunpack.c.l.b16 %v2976
        %v3009 = vunpack.c.l.b16 %v2977
        %v3010 = vunpack.c.l.b16 %v2978
        %v3011 = vunpack.c.l.b16 %v2979
        %v3012 = vunpack.c.l.b16 %v2980
        %v3013 = vunpack.c.l.b16 %v2981
        %v3014 = vunpack.c.l.b16 %v2982
        %v3015 = vunpack.c.l.b16 %v2983
        %v3016 = vunpack.c.l.b16 %v2984
        %v3017 = vunpack.c.l.b16 %v2985
        %v3018 = vpack.c.b16 %v3003, %v3002
        %v3019 = vpack.c.b16 %v3005, %v3004
        %v3020 = vpack.c.b16 %v3007, %v3006
        %v3021 = vpack.c.b16 %v3009, %v3008
        %v3022 = vpack.c.b16 %v3011, %v3010
        %v3023 = vpack.c.b16 %v3013, %v3012
        %v3024 = vpack.c.b16 %v3015, %v3014
        %v3025 = vpack.c.b16 %v3017, %v3016
        %3034 = vmatprep.subr.bf16.mxu0 0
        %3035 = vmatpush1.bf16.msra.mxu0 %v3025
        %3036 = vmatprep.subr.bf16.mxu0 0
        %3037 = vmatpush1.bf16.msra.mxu0 %v3024
        %3038 = vmatprep.subr.bf16.mxu0 0
        %3039 = vmatpush1.bf16.msra.mxu0 %v3023
        %3040 = vmatprep.subr.bf16.mxu0 0
        %3041 = vmatpush1.bf16.msra.mxu0 %v3022
        %3042 = vmatprep.subr.bf16.mxu0 0
        %3043 = vmatpush1.bf16.msra.mxu0 %v3021
        %3044 = vmatprep.subr.bf16.mxu0 0
        %3045 = vmatpush1.bf16.msra.mxu0 %v3020
        %3046 = vmatprep.subr.bf16.mxu0 0
        %3047 = vmatpush1.bf16.msra.mxu0 %v3019
        %3048 = vmatprep.subr.bf16.mxu0 0
        %3049 = vmatpush1.bf16.msra.mxu0 %v3018
        %3050 = vmatprep.subr.bf16.mxu0 0
        %3051 = vmatpush2.bf16.msra.mxu0 0
        %3052 = vmatprep.subr.bf16.mxu0 0
        %3053 = vmatpush2.bf16.msra.mxu0 0
        %3054 = vmatprep.subr.bf16.mxu0 0
        %3055 = vmatpush2.bf16.msra.mxu0 0
        %3056 = vmatprep.subr.bf16.mxu0 0
        %3057 = vmatpush2.bf16.msra.mxu0 0
        %3058 = vmatprep.subr.bf16.mxu0 0
        %3059 = vmatpush2.bf16.msra.mxu0 0
        %3060 = vmatprep.subr.bf16.mxu0 0
        %3061 = vmatpush2.bf16.msra.mxu0 0
        %3062 = vmatprep.subr.bf16.mxu0 0
        %3063 = vmatpush2.bf16.msra.mxu0 0
        %3064 = vmatprep.subr.bf16.mxu0 0
        %3065 = vmatpush2.bf16.msra.mxu0 0
        %3066 = vmatprep.mubr.bf16.mxu0 0
        %3067 = vmatmul.mubr.bf16.gmra.mxu0 %v2965
        %v3068 = vpop.f32.mrf.mxu0
        %v3069 = vadd.f32 0.0, %v3068
        %v3070 = vpop.f32.mrf.mxu0
        %v3071 = vpop.f32.mrf.mxu0
        %v3072 = vadd.f32 0.0, %v3071
        %v3073 = vpop.f32.mrf.mxu0
        %3074 = vmatprep.mubr.bf16.mxu0 0
        %3075 = vmatmul.mubr.bf16.gmra.mxu0 %v2966
        %v3076 = vpop.f32.mrf.mxu0
        %v3077 = vadd.f32 0.0, %v3076
        %v3078 = vpop.f32.mrf.mxu0
        %v3079 = vpop.f32.mrf.mxu0
        %v3080 = vadd.f32 0.0, %v3079
        %v3081 = vpop.f32.mrf.mxu0
        %3082 = vmatprep.mubr.bf16.mxu0 0
        %3083 = vmatmul.mubr.bf16.gmra.mxu0 %v2967
        %v3084 = vpop.f32.mrf.mxu0
        %v3085 = vadd.f32 0.0, %v3084
        %v3086 = vpop.f32.mrf.mxu0
        %v3087 = vpop.f32.mrf.mxu0
        %v3088 = vadd.f32 0.0, %v3087
        %v3089 = vpop.f32.mrf.mxu0
        %3090 = vmatprep.mubr.bf16.mxu0 0
        %3091 = vmatmul.mubr.bf16.gmra.mxu0 %v2968
        %v3092 = vpop.f32.mrf.mxu0
        %v3093 = vadd.f32 0.0, %v3092
        %v3094 = vpop.f32.mrf.mxu0
        %v3095 = vpop.f32.mrf.mxu0
        %v3096 = vadd.f32 0.0, %v3095
        %v3097 = vpop.f32.mrf.mxu0
        %3098 = vdwg.mxu0
        %v3099 = vadd.f32 %v2949, %v3069
        %v3100 = vadd.f32 %v2950, %v3072
        %v3101 = vadd.f32 %v2951, %v3077
        %v3102 = vadd.f32 %v2952, %v3080
        %v3103 = vadd.f32 %v2953, %v3085
        %v3104 = vadd.f32 %v2954, %v3088
        %v3105 = vadd.f32 %v2955, %v3093
        %v3106 = vadd.f32 %v2956, %v3096
        %v3107 = vld [vmem:[%s1562 + $0x1] sm:$0xff]
        %v3108 = vld [vmem:[%s1562 + $0x11] sm:$0xff]
        %v3109 = vld [vmem:[%s1562 + $0x21] sm:$0xff]
        %v3110 = vld [vmem:[%s1562 + $0x31] sm:$0xff]
        %v3111 = vld [vmem:[%s1562 + $0x41] sm:$0xff]
        %v3112 = vld [vmem:[%s1562 + $0x51] sm:$0xff]
        %v3113 = vld [vmem:[%s1562 + $0x61] sm:$0xff]
        %v3114 = vld [vmem:[%s1562 + $0x71] sm:$0xff]
        %v3115 = vpack.c.bf16 %v3108, %v3107
        %v3116 = vpack.c.bf16 %v3110, %v3109
        %v3117 = vpack.c.bf16 %v3112, %v3111
        %v3118 = vpack.c.bf16 %v3114, %v3113
        %s3119 = scalar_lea.vmem [#allocation11], 1024
        %v3120 = vld [vmem:[%s3119] sm:$0xf]
        %v3121 = vld [vmem:[%s3119 + $0x4] sm:$0xf]
        %v3122 = vld [vmem:[%s3119 + $0x8] sm:$0xf]
        %v3123 = vld [vmem:[%s3119 + $0xc] sm:$0xf]
        %v3124 = vld [vmem:[%s3119 + $0x10] sm:$0xf]
        %v3125 = vld [vmem:[%s3119 + $0x14] sm:$0xf]
        %v3126 = vld [vmem:[%s3119 + $0x18] sm:$0xf]
        %v3127 = vld [vmem:[%s3119 + $0x1c] sm:$0xf]
        %v3128 = vld [vmem:[%s3119 + $0x20] sm:$0xf]
        %v3129 = vld [vmem:[%s3119 + $0x24] sm:$0xf]
        %v3130 = vld [vmem:[%s3119 + $0x28] sm:$0xf]
        %v3131 = vld [vmem:[%s3119 + $0x2c] sm:$0xf]
        %v3132 = vld [vmem:[%s3119 + $0x30] sm:$0xf]
        %v3133 = vld [vmem:[%s3119 + $0x34] sm:$0xf]
        %v3134 = vld [vmem:[%s3119 + $0x38] sm:$0xf]
        %v3135 = vld [vmem:[%s3119 + $0x3c] sm:$0xf]
        %v3152 = vunpack.c.l.b16 %v3120
        %v3153 = vunpack.c.l.b16 %v3121
        %v3154 = vunpack.c.l.b16 %v3122
        %v3155 = vunpack.c.l.b16 %v3123
        %v3156 = vunpack.c.l.b16 %v3124
        %v3157 = vunpack.c.l.b16 %v3125
        %v3158 = vunpack.c.l.b16 %v3126
        %v3159 = vunpack.c.l.b16 %v3127
        %v3160 = vunpack.c.l.b16 %v3128
        %v3161 = vunpack.c.l.b16 %v3129
        %v3162 = vunpack.c.l.b16 %v3130
        %v3163 = vunpack.c.l.b16 %v3131
        %v3164 = vunpack.c.l.b16 %v3132
        %v3165 = vunpack.c.l.b16 %v3133
        %v3166 = vunpack.c.l.b16 %v3134
        %v3167 = vunpack.c.l.b16 %v3135
        %v3168 = vpack.c.b16 %v3153, %v3152
        %v3169 = vpack.c.b16 %v3155, %v3154
        %v3170 = vpack.c.b16 %v3157, %v3156
        %v3171 = vpack.c.b16 %v3159, %v3158
        %v3172 = vpack.c.b16 %v3161, %v3160
        %v3173 = vpack.c.b16 %v3163, %v3162
        %v3174 = vpack.c.b16 %v3165, %v3164
        %v3175 = vpack.c.b16 %v3167, %v3166
        %3184 = vmatprep.subr.bf16.mxu0 0
        %3185 = vmatpush1.bf16.msra.mxu0 %v3175
        %3186 = vmatprep.subr.bf16.mxu0 0
        %3187 = vmatpush1.bf16.msra.mxu0 %v3174
        %3188 = vmatprep.subr.bf16.mxu0 0
        %3189 = vmatpush1.bf16.msra.mxu0 %v3173
        %3190 = vmatprep.subr.bf16.mxu0 0
        %3191 = vmatpush1.bf16.msra.mxu0 %v3172
        %3192 = vmatprep.subr.bf16.mxu0 0
        %3193 = vmatpush1.bf16.msra.mxu0 %v3171
        %3194 = vmatprep.subr.bf16.mxu0 0
        %3195 = vmatpush1.bf16.msra.mxu0 %v3170
        %3196 = vmatprep.subr.bf16.mxu0 0
        %3197 = vmatpush1.bf16.msra.mxu0 %v3169
        %3198 = vmatprep.subr.bf16.mxu0 0
        %3199 = vmatpush1.bf16.msra.mxu0 %v3168
        %3200 = vmatprep.subr.bf16.mxu0 0
        %3201 = vmatpush2.bf16.msra.mxu0 0
        %3202 = vmatprep.subr.bf16.mxu0 0
        %3203 = vmatpush2.bf16.msra.mxu0 0
        %3204 = vmatprep.subr.bf16.mxu0 0
        %3205 = vmatpush2.bf16.msra.mxu0 0
        %3206 = vmatprep.subr.bf16.mxu0 0
        %3207 = vmatpush2.bf16.msra.mxu0 0
        %3208 = vmatprep.subr.bf16.mxu0 0
        %3209 = vmatpush2.bf16.msra.mxu0 0
        %3210 = vmatprep.subr.bf16.mxu0 0
        %3211 = vmatpush2.bf16.msra.mxu0 0
        %3212 = vmatprep.subr.bf16.mxu0 0
        %3213 = vmatpush2.bf16.msra.mxu0 0
        %3214 = vmatprep.subr.bf16.mxu0 0
        %3215 = vmatpush2.bf16.msra.mxu0 0
        %3216 = vmatprep.mubr.bf16.mxu0 0
        %3217 = vmatmul.mubr.bf16.gmra.mxu0 %v3115
        %v3218 = vpop.f32.mrf.mxu0
        %v3219 = vadd.f32 0.0, %v3218
        %v3220 = vpop.f32.mrf.mxu0
        %v3221 = vpop.f32.mrf.mxu0
        %v3222 = vadd.f32 0.0, %v3221
        %v3223 = vpop.f32.mrf.mxu0
        %3224 = vmatprep.mubr.bf16.mxu0 0
        %3225 = vmatmul.mubr.bf16.gmra.mxu0 %v3116
        %v3226 = vpop.f32.mrf.mxu0
        %v3227 = vadd.f32 0.0, %v3226
        %v3228 = vpop.f32.mrf.mxu0
        %v3229 = vpop.f32.mrf.mxu0
        %v3230 = vadd.f32 0.0, %v3229
        %v3231 = vpop.f32.mrf.mxu0
        %3232 = vmatprep.mubr.bf16.mxu0 0
        %3233 = vmatmul.mubr.bf16.gmra.mxu0 %v3117
        %v3234 = vpop.f32.mrf.mxu0
        %v3235 = vadd.f32 0.0, %v3234
        %v3236 = vpop.f32.mrf.mxu0
        %v3237 = vpop.f32.mrf.mxu0
        %v3238 = vadd.f32 0.0, %v3237
        %v3239 = vpop.f32.mrf.mxu0
        %3240 = vmatprep.mubr.bf16.mxu0 0
        %3241 = vmatmul.mubr.bf16.gmra.mxu0 %v3118
        %v3242 = vpop.f32.mrf.mxu0
        %v3243 = vadd.f32 0.0, %v3242
        %v3244 = vpop.f32.mrf.mxu0
        %v3245 = vpop.f32.mrf.mxu0
        %v3246 = vadd.f32 0.0, %v3245
        %v3247 = vpop.f32.mrf.mxu0
        %3248 = vdwg.mxu0
        %v3249 = vadd.f32 %v3099, %v3219
        %v3250 = vadd.f32 %v3100, %v3222
        %v3251 = vadd.f32 %v3101, %v3227
        %v3252 = vadd.f32 %v3102, %v3230
        %v3253 = vadd.f32 %v3103, %v3235
        %v3254 = vadd.f32 %v3104, %v3238
        %v3255 = vadd.f32 %v3105, %v3243
        %v3256 = vadd.f32 %v3106, %v3246
        %v3257 = vld [vmem:[%s1562 + $0x2] sm:$0xff]
        %v3258 = vld [vmem:[%s1562 + $0x12] sm:$0xff]
        %v3259 = vld [vmem:[%s1562 + $0x22] sm:$0xff]
        %v3260 = vld [vmem:[%s1562 + $0x32] sm:$0xff]
        %v3261 = vld [vmem:[%s1562 + $0x42] sm:$0xff]
        %v3262 = vld [vmem:[%s1562 + $0x52] sm:$0xff]
        %v3263 = vld [vmem:[%s1562 + $0x62] sm:$0xff]
        %v3264 = vld [vmem:[%s1562 + $0x72] sm:$0xff]
        %v3265 = vpack.c.bf16 %v3258, %v3257
        %v3266 = vpack.c.bf16 %v3260, %v3259
        %v3267 = vpack.c.bf16 %v3262, %v3261
        %v3268 = vpack.c.bf16 %v3264, %v3263
        %s3269 = scalar_lea.vmem [#allocation11], 1088
        %v3270 = vld [vmem:[%s3269] sm:$0xf]
        %v3271 = vld [vmem:[%s3269 + $0x4] sm:$0xf]
        %v3272 = vld [vmem:[%s3269 + $0x8] sm:$0xf]
        %v3273 = vld [vmem:[%s3269 + $0xc] sm:$0xf]
        %v3274 = vld [vmem:[%s3269 + $0x10] sm:$0xf]
        %v3275 = vld [vmem:[%s3269 + $0x14] sm:$0xf]
        %v3276 = vld [vmem:[%s3269 + $0x18] sm:$0xf]
        %v3277 = vld [vmem:[%s3269 + $0x1c] sm:$0xf]
        %v3278 = vld [vmem:[%s3269 + $0x20] sm:$0xf]
        %v3279 = vld [vmem:[%s3269 + $0x24] sm:$0xf]
        %v3280 = vld [vmem:[%s3269 + $0x28] sm:$0xf]
        %v3281 = vld [vmem:[%s3269 + $0x2c] sm:$0xf]
        %v3282 = vld [vmem:[%s3269 + $0x30] sm:$0xf]
        %v3283 = vld [vmem:[%s3269 + $0x34] sm:$0xf]
        %v3284 = vld [vmem:[%s3269 + $0x38] sm:$0xf]
        %v3285 = vld [vmem:[%s3269 + $0x3c] sm:$0xf]
        %v3302 = vunpack.c.l.b16 %v3270
        %v3303 = vunpack.c.l.b16 %v3271
        %v3304 = vunpack.c.l.b16 %v3272
        %v3305 = vunpack.c.l.b16 %v3273
        %v3306 = vunpack.c.l.b16 %v3274
        %v3307 = vunpack.c.l.b16 %v3275
        %v3308 = vunpack.c.l.b16 %v3276
        %v3309 = vunpack.c.l.b16 %v3277
        %v3310 = vunpack.c.l.b16 %v3278
        %v3311 = vunpack.c.l.b16 %v3279
        %v3312 = vunpack.c.l.b16 %v3280
        %v3313 = vunpack.c.l.b16 %v3281
        %v3314 = vunpack.c.l.b16 %v3282
        %v3315 = vunpack.c.l.b16 %v3283
        %v3316 = vunpack.c.l.b16 %v3284
        %v3317 = vunpack.c.l.b16 %v3285
        %v3318 = vpack.c.b16 %v3303, %v3302
        %v3319 = vpack.c.b16 %v3305, %v3304
        %v3320 = vpack.c.b16 %v3307, %v3306
        %v3321 = vpack.c.b16 %v3309, %v3308
        %v3322 = vpack.c.b16 %v3311, %v3310
        %v3323 = vpack.c.b16 %v3313, %v3312
        %v3324 = vpack.c.b16 %v3315, %v3314
        %v3325 = vpack.c.b16 %v3317, %v3316
        %3334 = vmatprep.subr.bf16.mxu0 0
        %3335 = vmatpush1.bf16.msra.mxu0 %v3325
        %3336 = vmatprep.subr.bf16.mxu0 0
        %3337 = vmatpush1.bf16.msra.mxu0 %v3324
        %3338 = vmatprep.subr.bf16.mxu0 0
        %3339 = vmatpush1.bf16.msra.mxu0 %v3323
        %3340 = vmatprep.subr.bf16.mxu0 0
        %3341 = vmatpush1.bf16.msra.mxu0 %v3322
        %3342 = vmatprep.subr.bf16.mxu0 0
        %3343 = vmatpush1.bf16.msra.mxu0 %v3321
        %3344 = vmatprep.subr.bf16.mxu0 0
        %3345 = vmatpush1.bf16.msra.mxu0 %v3320
        %3346 = vmatprep.subr.bf16.mxu0 0
        %3347 = vmatpush1.bf16.msra.mxu0 %v3319
        %3348 = vmatprep.subr.bf16.mxu0 0
        %3349 = vmatpush1.bf16.msra.mxu0 %v3318
        %3350 = vmatprep.subr.bf16.mxu0 0
        %3351 = vmatpush2.bf16.msra.mxu0 0
        %3352 = vmatprep.subr.bf16.mxu0 0
        %3353 = vmatpush2.bf16.msra.mxu0 0
        %3354 = vmatprep.subr.bf16.mxu0 0
        %3355 = vmatpush2.bf16.msra.mxu0 0
        %3356 = vmatprep.subr.bf16.mxu0 0
        %3357 = vmatpush2.bf16.msra.mxu0 0
        %3358 = vmatprep.subr.bf16.mxu0 0
        %3359 = vmatpush2.bf16.msra.mxu0 0
        %3360 = vmatprep.subr.bf16.mxu0 0
        %3361 = vmatpush2.bf16.msra.mxu0 0
        %3362 = vmatprep.subr.bf16.mxu0 0
        %3363 = vmatpush2.bf16.msra.mxu0 0
        %3364 = vmatprep.subr.bf16.mxu0 0
        %3365 = vmatpush2.bf16.msra.mxu0 0
        %3366 = vmatprep.mubr.bf16.mxu0 0
        %3367 = vmatmul.mubr.bf16.gmra.mxu0 %v3265
        %v3368 = vpop.f32.mrf.mxu0
        %v3369 = vadd.f32 0.0, %v3368
        %v3370 = vpop.f32.mrf.mxu0
        %v3371 = vpop.f32.mrf.mxu0
        %v3372 = vadd.f32 0.0, %v3371
        %v3373 = vpop.f32.mrf.mxu0
        %3374 = vmatprep.mubr.bf16.mxu0 0
        %3375 = vmatmul.mubr.bf16.gmra.mxu0 %v3266
        %v3376 = vpop.f32.mrf.mxu0
        %v3377 = vadd.f32 0.0, %v3376
        %v3378 = vpop.f32.mrf.mxu0
        %v3379 = vpop.f32.mrf.mxu0
        %v3380 = vadd.f32 0.0, %v3379
        %v3381 = vpop.f32.mrf.mxu0
        %3382 = vmatprep.mubr.bf16.mxu0 0
        %3383 = vmatmul.mubr.bf16.gmra.mxu0 %v3267
        %v3384 = vpop.f32.mrf.mxu0
        %v3385 = vadd.f32 0.0, %v3384
        %v3386 = vpop.f32.mrf.mxu0
        %v3387 = vpop.f32.mrf.mxu0
        %v3388 = vadd.f32 0.0, %v3387
        %v3389 = vpop.f32.mrf.mxu0
        %3390 = vmatprep.mubr.bf16.mxu0 0
        %3391 = vmatmul.mubr.bf16.gmra.mxu0 %v3268
        %v3392 = vpop.f32.mrf.mxu0
        %v3393 = vadd.f32 0.0, %v3392
        %v3394 = vpop.f32.mrf.mxu0
        %v3395 = vpop.f32.mrf.mxu0
        %v3396 = vadd.f32 0.0, %v3395
        %v3397 = vpop.f32.mrf.mxu0
        %3398 = vdwg.mxu0
        %v3399 = vadd.f32 %v3249, %v3369
        %v3400 = vadd.f32 %v3250, %v3372
        %v3401 = vadd.f32 %v3251, %v3377
        %v3402 = vadd.f32 %v3252, %v3380
        %v3403 = vadd.f32 %v3253, %v3385
        %v3404 = vadd.f32 %v3254, %v3388
        %v3405 = vadd.f32 %v3255, %v3393
        %v3406 = vadd.f32 %v3256, %v3396
        %s3407 = scalar_lea.vmem [#allocation8], 3
        %v3408 = vld [vmem:[%s3407] sm:$0x1]
        %v3410 = vlaneseq
        %v3411 = vshrl.u32 %v3410, 7
        %v3412 = vsub.s32 0, %v3411
        %v3413 = vrot.slane %v3408, %v3412
        %v3415 = vadd.f32 %v3399, %v3413
        %v3416 = vadd.f32 %v3400, %v3413
        %v3417 = vadd.f32 %v3401, %v3413
        %v3418 = vadd.f32 %v3402, %v3413
        %v3419 = vadd.f32 %v3403, %v3413
        %v3420 = vadd.f32 %v3404, %v3413
        %v3421 = vadd.f32 %v3405, %v3413
        %v3422 = vadd.f32 %v3406, %v3413
        %v3423 = vld [vmem:[%s298] sm:$0xff]
        %v3424 = vld [vmem:[%s298 + $0x8] sm:$0xff]
        %v3425 = vld [vmem:[%s298 + $0x10] sm:$0xff]
        %v3426 = vld [vmem:[%s298 + $0x18] sm:$0xff]
        %v3427 = vld [vmem:[%s298 + $0x20] sm:$0xff]
        %v3428 = vld [vmem:[%s298 + $0x28] sm:$0xff]
        %v3429 = vld [vmem:[%s298 + $0x30] sm:$0xff]
        %v3430 = vld [vmem:[%s298 + $0x38] sm:$0xff]
        %v3431 = vmul.f32 %v3415, 0.5
        %v3432 = vmul.f32 %v3416, 0.5
        %v3433 = vmul.f32 %v3417, 0.5
        %v3434 = vmul.f32 %v3418, 0.5
        %v3435 = vmul.f32 %v3419, 0.5
        %v3436 = vmul.f32 %v3420, 0.5
        %v3437 = vmul.f32 %v3421, 0.5
        %v3438 = vmul.f32 %v3422, 0.5
        %v3439 = vadd.f32 %v3423, %v3431
        %v3440 = vadd.f32 %v3424, %v3432
        %v3441 = vadd.f32 %v3425, %v3433
        %v3442 = vadd.f32 %v3426, %v3434
        %v3443 = vadd.f32 %v3427, %v3435
        %v3444 = vadd.f32 %v3428, %v3436
        %v3445 = vadd.f32 %v3429, %v3437
        %v3446 = vadd.f32 %v3430, %v3438
        %3447 = vst [vmem:[%s298] sm:$0xff] %v3439
        %3448 = vst [vmem:[%s298 + $0x8] sm:$0xff] %v3440
        %3449 = vst [vmem:[%s298 + $0x10] sm:$0xff] %v3441
        %3450 = vst [vmem:[%s298 + $0x18] sm:$0xff] %v3442
        %3451 = vst [vmem:[%s298 + $0x20] sm:$0xff] %v3443
        %3452 = vst [vmem:[%s298 + $0x28] sm:$0xff] %v3444
        %3453 = vst [vmem:[%s298 + $0x30] sm:$0xff] %v3445
        %3454 = vst [vmem:[%s298 + $0x38] sm:$0xff] %v3446
        %s3455 = sld [smem:[#allocation3 + $0x4]]
        %v3456 = vstv %s3455
        %v3457 = vmul.f32 %v3456, %v604
        %v3458 = vmul.f32 %v3456, %v607
        %v3459 = vmul.f32 %v3456, %v612
        %v3460 = vmul.f32 %v3456, %v615
        %v3461 = vmul.f32 %v3456, %v620
        %v3462 = vmul.f32 %v3456, %v623
        %v3463 = vmul.f32 %v3456, %v628
        %v3464 = vmul.f32 %v3456, %v631
        %s3465 = sld [smem:[#allocation3 + $0x5]]
        %v3466 = vstv %s3465
        %v3467 = vmul.f32 %v3466, %v2021
        %v3468 = vmul.f32 %v3466, %v2022
        %v3469 = vmul.f32 %v3466, %v2023
        %v3470 = vmul.f32 %v3466, %v2024
        %v3471 = vmul.f32 %v3466, %v2025
        %v3472 = vmul.f32 %v3466, %v2026
        %v3473 = vmul.f32 %v3466, %v2027
        %v3474 = vmul.f32 %v3466, %v2028
        %v3475 = vadd.f32 %v3457, %v3467
        %v3476 = vadd.f32 %v3458, %v3468
        %v3477 = vadd.f32 %v3459, %v3469
        %v3478 = vadd.f32 %v3460, %v3470
        %v3479 = vadd.f32 %v3461, %v3471
        %v3480 = vadd.f32 %v3462, %v3472
        %v3481 = vadd.f32 %v3463, %v3473
        %v3482 = vadd.f32 %v3464, %v3474
        %v3483 = vmax.f32 %v3475, 0.0
        %v3484 = vmax.f32 %v3476, 0.0
        %v3485 = vmax.f32 %v3477, 0.0
        %v3486 = vmax.f32 %v3478, 0.0
        %v3487 = vmax.f32 %v3479, 0.0
        %v3488 = vmax.f32 %v3480, 0.0
        %v3489 = vmax.f32 %v3481, 0.0
        %v3490 = vmax.f32 %v3482, 0.0
        %3491 = vst [vmem:[%s670 + $0x1] sm:$0xff] %v3483
        %3492 = vst [vmem:[%s670 + $0x11] sm:$0xff] %v3484
        %3493 = vst [vmem:[%s670 + $0x21] sm:$0xff] %v3485
        %3494 = vst [vmem:[%s670 + $0x31] sm:$0xff] %v3486
        %3495 = vst [vmem:[%s670 + $0x41] sm:$0xff] %v3487
        %3496 = vst [vmem:[%s670 + $0x51] sm:$0xff] %v3488
        %3497 = vst [vmem:[%s670 + $0x61] sm:$0xff] %v3489
        %3498 = vst [vmem:[%s670 + $0x71] sm:$0xff] %v3490
        %v3499 = vld [vmem:[#allocation2] sm:$0xff]
        %v3500 = vld [vmem:[#allocation2 + $0x10] sm:$0xff]
        %v3501 = vld [vmem:[#allocation2 + $0x20] sm:$0xff]
        %v3502 = vld [vmem:[#allocation2 + $0x30] sm:$0xff]
        %v3503 = vld [vmem:[#allocation2 + $0x40] sm:$0xff]
        %v3504 = vld [vmem:[#allocation2 + $0x50] sm:$0xff]
        %v3505 = vld [vmem:[#allocation2 + $0x60] sm:$0xff]
        %v3506 = vld [vmem:[#allocation2 + $0x70] sm:$0xff]
        %v3507 = vpack.c.bf16 %v3500, %v3499
        %v3508 = vpack.c.bf16 %v3502, %v3501
        %v3509 = vpack.c.bf16 %v3504, %v3503
        %v3510 = vpack.c.bf16 %v3506, %v3505
        %s3511 = scalar_lea.vmem [#allocation11], 1152
        %v3512 = vld [vmem:[%s3511] sm:$0xf]
        %v3513 = vld [vmem:[%s3511 + $0x4] sm:$0xf]
        %v3514 = vld [vmem:[%s3511 + $0x8] sm:$0xf]
        %v3515 = vld [vmem:[%s3511 + $0xc] sm:$0xf]
        %v3516 = vld [vmem:[%s3511 + $0x10] sm:$0xf]
        %v3517 = vld [vmem:[%s3511 + $0x14] sm:$0xf]
        %v3518 = vld [vmem:[%s3511 + $0x18] sm:$0xf]
        %v3519 = vld [vmem:[%s3511 + $0x1c] sm:$0xf]
        %v3520 = vld [vmem:[%s3511 + $0x20] sm:$0xf]
        %v3521 = vld [vmem:[%s3511 + $0x24] sm:$0xf]
        %v3522 = vld [vmem:[%s3511 + $0x28] sm:$0xf]
        %v3523 = vld [vmem:[%s3511 + $0x2c] sm:$0xf]
        %v3524 = vld [vmem:[%s3511 + $0x30] sm:$0xf]
        %v3525 = vld [vmem:[%s3511 + $0x34] sm:$0xf]
        %v3526 = vld [vmem:[%s3511 + $0x38] sm:$0xf]
        %v3527 = vld [vmem:[%s3511 + $0x3c] sm:$0xf]
        %v3528 = vld [vmem:[#allocation2 + $0x1] sm:$0xff]
        %v3529 = vld [vmem:[#allocation2 + $0x11] sm:$0xff]
        %v3530 = vld [vmem:[#allocation2 + $0x21] sm:$0xff]
        %v3531 = vld [vmem:[#allocation2 + $0x31] sm:$0xff]
        %v3532 = vld [vmem:[#allocation2 + $0x41] sm:$0xff]
        %v3533 = vld [vmem:[#allocation2 + $0x51] sm:$0xff]
        %v3534 = vld [vmem:[#allocation2 + $0x61] sm:$0xff]
        %v3535 = vld [vmem:[#allocation2 + $0x71] sm:$0xff]
        %v3536 = vpack.c.bf16 %v3529, %v3528
        %v3537 = vpack.c.bf16 %v3531, %v3530
        %v3538 = vpack.c.bf16 %v3533, %v3532
        %v3539 = vpack.c.bf16 %v3535, %v3534
        %s3540 = scalar_lea.vmem [#allocation11], 1216
        %v3541 = vld [vmem:[%s3540] sm:$0xf]
        %v3542 = vld [vmem:[%s3540 + $0x4] sm:$0xf]
        %v3543 = vld [vmem:[%s3540 + $0x8] sm:$0xf]
        %v3544 = vld [vmem:[%s3540 + $0xc] sm:$0xf]
        %v3545 = vld [vmem:[%s3540 + $0x10] sm:$0xf]
        %v3546 = vld [vmem:[%s3540 + $0x14] sm:$0xf]
        %v3547 = vld [vmem:[%s3540 + $0x18] sm:$0xf]
        %v3548 = vld [vmem:[%s3540 + $0x1c] sm:$0xf]
        %v3549 = vld [vmem:[%s3540 + $0x20] sm:$0xf]
        %v3550 = vld [vmem:[%s3540 + $0x24] sm:$0xf]
        %v3551 = vld [vmem:[%s3540 + $0x28] sm:$0xf]
        %v3552 = vld [vmem:[%s3540 + $0x2c] sm:$0xf]
        %v3553 = vld [vmem:[%s3540 + $0x30] sm:$0xf]
        %v3554 = vld [vmem:[%s3540 + $0x34] sm:$0xf]
        %v3555 = vld [vmem:[%s3540 + $0x38] sm:$0xf]
        %v3556 = vld [vmem:[%s3540 + $0x3c] sm:$0xf]
        %v3573 = vunpack.c.l.b16 %v3541
        %v3574 = vunpack.c.l.b16 %v3542
        %v3575 = vunpack.c.l.b16 %v3543
        %v3576 = vunpack.c.l.b16 %v3544
        %v3577 = vunpack.c.l.b16 %v3545
        %v3578 = vunpack.c.l.b16 %v3546
        %v3579 = vunpack.c.l.b16 %v3547
        %v3580 = vunpack.c.l.b16 %v3548
        %v3581 = vunpack.c.l.b16 %v3549
        %v3582 = vunpack.c.l.b16 %v3550
        %v3583 = vunpack.c.l.b16 %v3551
        %v3584 = vunpack.c.l.b16 %v3552
        %v3585 = vunpack.c.l.b16 %v3553
        %v3586 = vunpack.c.l.b16 %v3554
        %v3587 = vunpack.c.l.b16 %v3555
        %v3588 = vunpack.c.l.b16 %v3556
        %v3589 = vpack.c.b16 %v3574, %v3573
        %v3590 = vpack.c.b16 %v3576, %v3575
        %v3591 = vpack.c.b16 %v3578, %v3577
        %v3592 = vpack.c.b16 %v3580, %v3579
        %v3593 = vpack.c.b16 %v3582, %v3581
        %v3594 = vpack.c.b16 %v3584, %v3583
        %v3595 = vpack.c.b16 %v3586, %v3585
        %v3596 = vpack.c.b16 %v3588, %v3587
        %3605 = vmatprep.subr.bf16.mxu0 0
        %3606 = vmatpush1.bf16.msra.mxu0 %v3596
        %3607 = vmatprep.subr.bf16.mxu0 0
        %3608 = vmatpush1.bf16.msra.mxu0 %v3595
        %3609 = vmatprep.subr.bf16.mxu0 0
        %3610 = vmatpush1.bf16.msra.mxu0 %v3594
        %3611 = vmatprep.subr.bf16.mxu0 0
        %3612 = vmatpush1.bf16.msra.mxu0 %v3593
        %3613 = vmatprep.subr.bf16.mxu0 0
        %3614 = vmatpush1.bf16.msra.mxu0 %v3592
        %3615 = vmatprep.subr.bf16.mxu0 0
        %3616 = vmatpush1.bf16.msra.mxu0 %v3591
        %3617 = vmatprep.subr.bf16.mxu0 0
        %3618 = vmatpush1.bf16.msra.mxu0 %v3590
        %3619 = vmatprep.subr.bf16.mxu0 0
        %3620 = vmatpush1.bf16.msra.mxu0 %v3589
        %3621 = vmatprep.subr.bf16.mxu0 0
        %3622 = vmatpush2.bf16.msra.mxu0 0
        %3623 = vmatprep.subr.bf16.mxu0 0
        %3624 = vmatpush2.bf16.msra.mxu0 0
        %3625 = vmatprep.subr.bf16.mxu0 0
        %3626 = vmatpush2.bf16.msra.mxu0 0
        %3627 = vmatprep.subr.bf16.mxu0 0
        %3628 = vmatpush2.bf16.msra.mxu0 0
        %3629 = vmatprep.subr.bf16.mxu0 0
        %3630 = vmatpush2.bf16.msra.mxu0 0
        %3631 = vmatprep.subr.bf16.mxu0 0
        %3632 = vmatpush2.bf16.msra.mxu0 0
        %3633 = vmatprep.subr.bf16.mxu0 0
        %3634 = vmatpush2.bf16.msra.mxu0 0
        %3635 = vmatprep.subr.bf16.mxu0 0
        %3636 = vmatpush2.bf16.msra.mxu0 0
        %3637 = vmatprep.mubr.bf16.mxu0 0
        %3638 = vmatmul.mubr.bf16.gmra.mxu0 %v3536
        %v3639 = vpop.f32.mrf.mxu0
        %v3640 = vadd.f32 0.0, %v3639
        %v3641 = vpop.f32.mrf.mxu0
        %v3642 = vpop.f32.mrf.mxu0
        %v3643 = vadd.f32 0.0, %v3642
        %v3644 = vpop.f32.mrf.mxu0
        %3645 = vmatprep.mubr.bf16.mxu0 0
        %3646 = vmatmul.mubr.bf16.gmra.mxu0 %v3537
        %v3647 = vpop.f32.mrf.mxu0
        %v3648 = vadd.f32 0.0, %v3647
        %v3649 = vpop.f32.mrf.mxu0
        %v3650 = vpop.f32.mrf.mxu0
        %v3651 = vadd.f32 0.0, %v3650
        %v3652 = vpop.f32.mrf.mxu0
        %3653 = vmatprep.mubr.bf16.mxu0 0
        %3654 = vmatmul.mubr.bf16.gmra.mxu0 %v3538
        %v3655 = vpop.f32.mrf.mxu0
        %v3656 = vadd.f32 0.0, %v3655
        %v3657 = vpop.f32.mrf.mxu0
        %v3658 = vpop.f32.mrf.mxu0
        %v3659 = vadd.f32 0.0, %v3658
        %v3660 = vpop.f32.mrf.mxu0
        %3661 = vmatprep.mubr.bf16.mxu0 0
        %3662 = vmatmul.mubr.bf16.gmra.mxu0 %v3539
        %v3663 = vpop.f32.mrf.mxu0
        %v3664 = vadd.f32 0.0, %v3663
        %v3665 = vpop.f32.mrf.mxu0
        %v3666 = vpop.f32.mrf.mxu0
        %v3667 = vadd.f32 0.0, %v3666
        %v3668 = vpop.f32.mrf.mxu0
        %3669 = vdwg.mxu0
        %v3686 = vunpack.c.l.b16 %v3512
        %v3687 = vunpack.c.l.b16 %v3513
        %v3688 = vunpack.c.l.b16 %v3514
        %v3689 = vunpack.c.l.b16 %v3515
        %v3690 = vunpack.c.l.b16 %v3516
        %v3691 = vunpack.c.l.b16 %v3517
        %v3692 = vunpack.c.l.b16 %v3518
        %v3693 = vunpack.c.l.b16 %v3519
        %v3694 = vunpack.c.l.b16 %v3520
        %v3695 = vunpack.c.l.b16 %v3521
        %v3696 = vunpack.c.l.b16 %v3522
        %v3697 = vunpack.c.l.b16 %v3523
        %v3698 = vunpack.c.l.b16 %v3524
        %v3699 = vunpack.c.l.b16 %v3525
        %v3700 = vunpack.c.l.b16 %v3526
        %v3701 = vunpack.c.l.b16 %v3527
        %v3702 = vpack.c.b16 %v3687, %v3686
        %v3703 = vpack.c.b16 %v3689, %v3688
        %v3704 = vpack.c.b16 %v3691, %v3690
        %v3705 = vpack.c.b16 %v3693, %v3692
        %v3706 = vpack.c.b16 %v3695, %v3694
        %v3707 = vpack.c.b16 %v3697, %v3696
        %v3708 = vpack.c.b16 %v3699, %v3698
        %v3709 = vpack.c.b16 %v3701, %v3700
        %3718 = vmatprep.subr.bf16.mxu0 0
        %3719 = vmatpush1.bf16.msra.mxu0 %v3709
        %3720 = vmatprep.subr.bf16.mxu0 0
        %3721 = vmatpush1.bf16.msra.mxu0 %v3708
        %3722 = vmatprep.subr.bf16.mxu0 0
        %3723 = vmatpush1.bf16.msra.mxu0 %v3707
        %3724 = vmatprep.subr.bf16.mxu0 0
        %3725 = vmatpush1.bf16.msra.mxu0 %v3706
        %3726 = vmatprep.subr.bf16.mxu0 0
        %3727 = vmatpush1.bf16.msra.mxu0 %v3705
        %3728 = vmatprep.subr.bf16.mxu0 0
        %3729 = vmatpush1.bf16.msra.mxu0 %v3704
        %3730 = vmatprep.subr.bf16.mxu0 0
        %3731 = vmatpush1.bf16.msra.mxu0 %v3703
        %3732 = vmatprep.subr.bf16.mxu0 0
        %3733 = vmatpush1.bf16.msra.mxu0 %v3702
        %3734 = vmatprep.subr.bf16.mxu0 0
        %3735 = vmatpush2.bf16.msra.mxu0 0
        %3736 = vmatprep.subr.bf16.mxu0 0
        %3737 = vmatpush2.bf16.msra.mxu0 0
        %3738 = vmatprep.subr.bf16.mxu0 0
        %3739 = vmatpush2.bf16.msra.mxu0 0
        %3740 = vmatprep.subr.bf16.mxu0 0
        %3741 = vmatpush2.bf16.msra.mxu0 0
        %3742 = vmatprep.subr.bf16.mxu0 0
        %3743 = vmatpush2.bf16.msra.mxu0 0
        %3744 = vmatprep.subr.bf16.mxu0 0
        %3745 = vmatpush2.bf16.msra.mxu0 0
        %3746 = vmatprep.subr.bf16.mxu0 0
        %3747 = vmatpush2.bf16.msra.mxu0 0
        %3748 = vmatprep.subr.bf16.mxu0 0
        %3749 = vmatpush2.bf16.msra.mxu0 0
        %3750 = vmatprep.mubr.bf16.mxu0 0
        %3751 = vmatmul.mubr.bf16.gmra.mxu0 %v3507
        %v3752 = vpop.f32.mrf.mxu0
        %v3753 = vadd.f32 %v3640, %v3752
        %v3754 = vpop.f32.mrf.mxu0
        %v3755 = vpop.f32.mrf.mxu0
        %v3756 = vadd.f32 %v3643, %v3755
        %v3757 = vpop.f32.mrf.mxu0
        %3758 = vmatprep.mubr.bf16.mxu0 0
        %3759 = vmatmul.mubr.bf16.gmra.mxu0 %v3508
        %v3760 = vpop.f32.mrf.mxu0
        %v3761 = vadd.f32 %v3648, %v3760
        %v3762 = vpop.f32.mrf.mxu0
        %v3763 = vpop.f32.mrf.mxu0
        %v3764 = vadd.f32 %v3651, %v3763
        %v3765 = vpop.f32.mrf.mxu0
        %3766 = vmatprep.mubr.bf16.mxu0 0
        %3767 = vmatmul.mubr.bf16.gmra.mxu0 %v3509
        %v3768 = vpop.f32.mrf.mxu0
        %v3769 = vadd.f32 %v3656, %v3768
        %v3770 = vpop.f32.mrf.mxu0
        %v3771 = vpop.f32.mrf.mxu0
        %v3772 = vadd.f32 %v3659, %v3771
        %v3773 = vpop.f32.mrf.mxu0
        %3774 = vmatprep.mubr.bf16.mxu0 0
        %3775 = vmatmul.mubr.bf16.gmra.mxu0 %v3510
        %v3776 = vpop.f32.mrf.mxu0
        %v3777 = vadd.f32 %v3664, %v3776
        %v3778 = vpop.f32.mrf.mxu0
        %v3779 = vpop.f32.mrf.mxu0
        %v3780 = vadd.f32 %v3667, %v3779
        %v3781 = vpop.f32.mrf.mxu0
        %3782 = vdwg.mxu0
        %v3783 = vld [vmem:[#allocation2 + $0x2] sm:$0xff]
        %v3784 = vld [vmem:[#allocation2 + $0x12] sm:$0xff]
        %v3785 = vld [vmem:[#allocation2 + $0x22] sm:$0xff]
        %v3786 = vld [vmem:[#allocation2 + $0x32] sm:$0xff]
        %v3787 = vld [vmem:[#allocation2 + $0x42] sm:$0xff]
        %v3788 = vld [vmem:[#allocation2 + $0x52] sm:$0xff]
        %v3789 = vld [vmem:[#allocation2 + $0x62] sm:$0xff]
        %v3790 = vld [vmem:[#allocation2 + $0x72] sm:$0xff]
        %v3791 = vpack.c.bf16 %v3784, %v3783
        %v3792 = vpack.c.bf16 %v3786, %v3785
        %v3793 = vpack.c.bf16 %v3788, %v3787
        %v3794 = vpack.c.bf16 %v3790, %v3789
        %s3795 = scalar_lea.vmem [#allocation11], 1280
        %v3796 = vld [vmem:[%s3795] sm:$0xf]
        %v3797 = vld [vmem:[%s3795 + $0x4] sm:$0xf]
        %v3798 = vld [vmem:[%s3795 + $0x8] sm:$0xf]
        %v3799 = vld [vmem:[%s3795 + $0xc] sm:$0xf]
        %v3800 = vld [vmem:[%s3795 + $0x10] sm:$0xf]
        %v3801 = vld [vmem:[%s3795 + $0x14] sm:$0xf]
        %v3802 = vld [vmem:[%s3795 + $0x18] sm:$0xf]
        %v3803 = vld [vmem:[%s3795 + $0x1c] sm:$0xf]
        %v3804 = vld [vmem:[%s3795 + $0x20] sm:$0xf]
        %v3805 = vld [vmem:[%s3795 + $0x24] sm:$0xf]
        %v3806 = vld [vmem:[%s3795 + $0x28] sm:$0xf]
        %v3807 = vld [vmem:[%s3795 + $0x2c] sm:$0xf]
        %v3808 = vld [vmem:[%s3795 + $0x30] sm:$0xf]
        %v3809 = vld [vmem:[%s3795 + $0x34] sm:$0xf]
        %v3810 = vld [vmem:[%s3795 + $0x38] sm:$0xf]
        %v3811 = vld [vmem:[%s3795 + $0x3c] sm:$0xf]
        %v3828 = vunpack.c.l.b16 %v3796
        %v3829 = vunpack.c.l.b16 %v3797
        %v3830 = vunpack.c.l.b16 %v3798
        %v3831 = vunpack.c.l.b16 %v3799
        %v3832 = vunpack.c.l.b16 %v3800
        %v3833 = vunpack.c.l.b16 %v3801
        %v3834 = vunpack.c.l.b16 %v3802
        %v3835 = vunpack.c.l.b16 %v3803
        %v3836 = vunpack.c.l.b16 %v3804
        %v3837 = vunpack.c.l.b16 %v3805
        %v3838 = vunpack.c.l.b16 %v3806
        %v3839 = vunpack.c.l.b16 %v3807
        %v3840 = vunpack.c.l.b16 %v3808
        %v3841 = vunpack.c.l.b16 %v3809
        %v3842 = vunpack.c.l.b16 %v3810
        %v3843 = vunpack.c.l.b16 %v3811
        %v3844 = vpack.c.b16 %v3829, %v3828
        %v3845 = vpack.c.b16 %v3831, %v3830
        %v3846 = vpack.c.b16 %v3833, %v3832
        %v3847 = vpack.c.b16 %v3835, %v3834
        %v3848 = vpack.c.b16 %v3837, %v3836
        %v3849 = vpack.c.b16 %v3839, %v3838
        %v3850 = vpack.c.b16 %v3841, %v3840
        %v3851 = vpack.c.b16 %v3843, %v3842
        %3860 = vmatprep.subr.bf16.mxu0 0
        %3861 = vmatpush1.bf16.msra.mxu0 %v3851
        %3862 = vmatprep.subr.bf16.mxu0 0
        %3863 = vmatpush1.bf16.msra.mxu0 %v3850
        %3864 = vmatprep.subr.bf16.mxu0 0
        %3865 = vmatpush1.bf16.msra.mxu0 %v3849
        %3866 = vmatprep.subr.bf16.mxu0 0
        %3867 = vmatpush1.bf16.msra.mxu0 %v3848
        %3868 = vmatprep.subr.bf16.mxu0 0
        %3869 = vmatpush1.bf16.msra.mxu0 %v3847
        %3870 = vmatprep.subr.bf16.mxu0 0
        %3871 = vmatpush1.bf16.msra.mxu0 %v3846
        %3872 = vmatprep.subr.bf16.mxu0 0
        %3873 = vmatpush1.bf16.msra.mxu0 %v3845
        %3874 = vmatprep.subr.bf16.mxu0 0
        %3875 = vmatpush1.bf16.msra.mxu0 %v3844
        %3876 = vmatprep.subr.bf16.mxu0 0
        %3877 = vmatpush2.bf16.msra.mxu0 0
        %3878 = vmatprep.subr.bf16.mxu0 0
        %3879 = vmatpush2.bf16.msra.mxu0 0
        %3880 = vmatprep.subr.bf16.mxu0 0
        %3881 = vmatpush2.bf16.msra.mxu0 0
        %3882 = vmatprep.subr.bf16.mxu0 0
        %3883 = vmatpush2.bf16.msra.mxu0 0
        %3884 = vmatprep.subr.bf16.mxu0 0
        %3885 = vmatpush2.bf16.msra.mxu0 0
        %3886 = vmatprep.subr.bf16.mxu0 0
        %3887 = vmatpush2.bf16.msra.mxu0 0
        %3888 = vmatprep.subr.bf16.mxu0 0
        %3889 = vmatpush2.bf16.msra.mxu0 0
        %3890 = vmatprep.subr.bf16.mxu0 0
        %3891 = vmatpush2.bf16.msra.mxu0 0
        %3892 = vmatprep.mubr.bf16.mxu0 0
        %3893 = vmatmul.mubr.bf16.gmra.mxu0 %v3791
        %v3894 = vpop.f32.mrf.mxu0
        %v3895 = vadd.f32 0.0, %v3894
        %v3896 = vpop.f32.mrf.mxu0
        %v3897 = vpop.f32.mrf.mxu0
        %v3898 = vadd.f32 0.0, %v3897
        %v3899 = vpop.f32.mrf.mxu0
        %3900 = vmatprep.mubr.bf16.mxu0 0
        %3901 = vmatmul.mubr.bf16.gmra.mxu0 %v3792
        %v3902 = vpop.f32.mrf.mxu0
        %v3903 = vadd.f32 0.0, %v3902
        %v3904 = vpop.f32.mrf.mxu0
        %v3905 = vpop.f32.mrf.mxu0
        %v3906 = vadd.f32 0.0, %v3905
        %v3907 = vpop.f32.mrf.mxu0
        %3908 = vmatprep.mubr.bf16.mxu0 0
        %3909 = vmatmul.mubr.bf16.gmra.mxu0 %v3793
        %v3910 = vpop.f32.mrf.mxu0
        %v3911 = vadd.f32 0.0, %v3910
        %v3912 = vpop.f32.mrf.mxu0
        %v3913 = vpop.f32.mrf.mxu0
        %v3914 = vadd.f32 0.0, %v3913
        %v3915 = vpop.f32.mrf.mxu0
        %3916 = vmatprep.mubr.bf16.mxu0 0
        %3917 = vmatmul.mubr.bf16.gmra.mxu0 %v3794
        %v3918 = vpop.f32.mrf.mxu0
        %v3919 = vadd.f32 0.0, %v3918
        %v3920 = vpop.f32.mrf.mxu0
        %v3921 = vpop.f32.mrf.mxu0
        %v3922 = vadd.f32 0.0, %v3921
        %v3923 = vpop.f32.mrf.mxu0
        %3924 = vdwg.mxu0
        %v3925 = vadd.f32 %v3753, %v3895
        %v3926 = vadd.f32 %v3756, %v3898
        %v3927 = vadd.f32 %v3761, %v3903
        %v3928 = vadd.f32 %v3764, %v3906
        %v3929 = vadd.f32 %v3769, %v3911
        %v3930 = vadd.f32 %v3772, %v3914
        %v3931 = vadd.f32 %v3777, %v3919
        %v3932 = vadd.f32 %v3780, %v3922
        %v3933 = vld [vmem:[%s670] sm:$0xff]
        %v3934 = vld [vmem:[%s670 + $0x10] sm:$0xff]
        %v3935 = vld [vmem:[%s670 + $0x20] sm:$0xff]
        %v3936 = vld [vmem:[%s670 + $0x30] sm:$0xff]
        %v3937 = vld [vmem:[%s670 + $0x40] sm:$0xff]
        %v3938 = vld [vmem:[%s670 + $0x50] sm:$0xff]
        %v3939 = vld [vmem:[%s670 + $0x60] sm:$0xff]
        %v3940 = vld [vmem:[%s670 + $0x70] sm:$0xff]
        %v3941 = vpack.c.bf16 %v3934, %v3933
        %v3942 = vpack.c.bf16 %v3936, %v3935
        %v3943 = vpack.c.bf16 %v3938, %v3937
        %v3944 = vpack.c.bf16 %v3940, %v3939
        %s3945 = scalar_lea.vmem [#allocation11], 1344
        %v3946 = vld [vmem:[%s3945] sm:$0xf]
        %v3947 = vld [vmem:[%s3945 + $0x4] sm:$0xf]
        %v3948 = vld [vmem:[%s3945 + $0x8] sm:$0xf]
        %v3949 = vld [vmem:[%s3945 + $0xc] sm:$0xf]
        %v3950 = vld [vmem:[%s3945 + $0x10] sm:$0xf]
        %v3951 = vld [vmem:[%s3945 + $0x14] sm:$0xf]
        %v3952 = vld [vmem:[%s3945 + $0x18] sm:$0xf]
        %v3953 = vld [vmem:[%s3945 + $0x1c] sm:$0xf]
        %v3954 = vld [vmem:[%s3945 + $0x20] sm:$0xf]
        %v3955 = vld [vmem:[%s3945 + $0x24] sm:$0xf]
        %v3956 = vld [vmem:[%s3945 + $0x28] sm:$0xf]
        %v3957 = vld [vmem:[%s3945 + $0x2c] sm:$0xf]
        %v3958 = vld [vmem:[%s3945 + $0x30] sm:$0xf]
        %v3959 = vld [vmem:[%s3945 + $0x34] sm:$0xf]
        %v3960 = vld [vmem:[%s3945 + $0x38] sm:$0xf]
        %v3961 = vld [vmem:[%s3945 + $0x3c] sm:$0xf]
        %v3978 = vunpack.c.l.b16 %v3946
        %v3979 = vunpack.c.l.b16 %v3947
        %v3980 = vunpack.c.l.b16 %v3948
        %v3981 = vunpack.c.l.b16 %v3949
        %v3982 = vunpack.c.l.b16 %v3950
        %v3983 = vunpack.c.l.b16 %v3951
        %v3984 = vunpack.c.l.b16 %v3952
        %v3985 = vunpack.c.l.b16 %v3953
        %v3986 = vunpack.c.l.b16 %v3954
        %v3987 = vunpack.c.l.b16 %v3955
        %v3988 = vunpack.c.l.b16 %v3956
        %v3989 = vunpack.c.l.b16 %v3957
        %v3990 = vunpack.c.l.b16 %v3958
        %v3991 = vunpack.c.l.b16 %v3959
        %v3992 = vunpack.c.l.b16 %v3960
        %v3993 = vunpack.c.l.b16 %v3961
        %v3994 = vpack.c.b16 %v3979, %v3978
        %v3995 = vpack.c.b16 %v3981, %v3980
        %v3996 = vpack.c.b16 %v3983, %v3982
        %v3997 = vpack.c.b16 %v3985, %v3984
        %v3998 = vpack.c.b16 %v3987, %v3986
        %v3999 = vpack.c.b16 %v3989, %v3988
        %v4000 = vpack.c.b16 %v3991, %v3990
        %v4001 = vpack.c.b16 %v3993, %v3992
        %4010 = vmatprep.subr.bf16.mxu0 0
        %4011 = vmatpush1.bf16.msra.mxu0 %v4001
        %4012 = vmatprep.subr.bf16.mxu0 0
        %4013 = vmatpush1.bf16.msra.mxu0 %v4000
        %4014 = vmatprep.subr.bf16.mxu0 0
        %4015 = vmatpush1.bf16.msra.mxu0 %v3999
        %4016 = vmatprep.subr.bf16.mxu0 0
        %4017 = vmatpush1.bf16.msra.mxu0 %v3998
        %4018 = vmatprep.subr.bf16.mxu0 0
        %4019 = vmatpush1.bf16.msra.mxu0 %v3997
        %4020 = vmatprep.subr.bf16.mxu0 0
        %4021 = vmatpush1.bf16.msra.mxu0 %v3996
        %4022 = vmatprep.subr.bf16.mxu0 0
        %4023 = vmatpush1.bf16.msra.mxu0 %v3995
        %4024 = vmatprep.subr.bf16.mxu0 0
        %4025 = vmatpush1.bf16.msra.mxu0 %v3994
        %4026 = vmatprep.subr.bf16.mxu0 0
        %4027 = vmatpush2.bf16.msra.mxu0 0
        %4028 = vmatprep.subr.bf16.mxu0 0
        %4029 = vmatpush2.bf16.msra.mxu0 0
        %4030 = vmatprep.subr.bf16.mxu0 0
        %4031 = vmatpush2.bf16.msra.mxu0 0
        %4032 = vmatprep.subr.bf16.mxu0 0
        %4033 = vmatpush2.bf16.msra.mxu0 0
        %4034 = vmatprep.subr.bf16.mxu0 0
        %4035 = vmatpush2.bf16.msra.mxu0 0
        %4036 = vmatprep.subr.bf16.mxu0 0
        %4037 = vmatpush2.bf16.msra.mxu0 0
        %4038 = vmatprep.subr.bf16.mxu0 0
        %4039 = vmatpush2.bf16.msra.mxu0 0
        %4040 = vmatprep.subr.bf16.mxu0 0
        %4041 = vmatpush2.bf16.msra.mxu0 0
        %4042 = vmatprep.mubr.bf16.mxu0 0
        %4043 = vmatmul.mubr.bf16.gmra.mxu0 %v3941
        %v4044 = vpop.f32.mrf.mxu0
        %v4045 = vadd.f32 0.0, %v4044
        %v4046 = vpop.f32.mrf.mxu0
        %v4047 = vpop.f32.mrf.mxu0
        %v4048 = vadd.f32 0.0, %v4047
        %v4049 = vpop.f32.mrf.mxu0
        %4050 = vmatprep.mubr.bf16.mxu0 0
        %4051 = vmatmul.mubr.bf16.gmra.mxu0 %v3942
        %v4052 = vpop.f32.mrf.mxu0
        %v4053 = vadd.f32 0.0, %v4052
        %v4054 = vpop.f32.mrf.mxu0
        %v4055 = vpop.f32.mrf.mxu0
        %v4056 = vadd.f32 0.0, %v4055
        %v4057 = vpop.f32.mrf.mxu0
        %4058 = vmatprep.mubr.bf16.mxu0 0
        %4059 = vmatmul.mubr.bf16.gmra.mxu0 %v3943
        %v4060 = vpop.f32.mrf.mxu0
        %v4061 = vadd.f32 0.0, %v4060
        %v4062 = vpop.f32.mrf.mxu0
        %v4063 = vpop.f32.mrf.mxu0
        %v4064 = vadd.f32 0.0, %v4063
        %v4065 = vpop.f32.mrf.mxu0
        %4066 = vmatprep.mubr.bf16.mxu0 0
        %4067 = vmatmul.mubr.bf16.gmra.mxu0 %v3944
        %v4068 = vpop.f32.mrf.mxu0
        %v4069 = vadd.f32 0.0, %v4068
        %v4070 = vpop.f32.mrf.mxu0
        %v4071 = vpop.f32.mrf.mxu0
        %v4072 = vadd.f32 0.0, %v4071
        %v4073 = vpop.f32.mrf.mxu0
        %4074 = vdwg.mxu0
        %v4075 = vadd.f32 %v3925, %v4045
        %v4076 = vadd.f32 %v3926, %v4048
        %v4077 = vadd.f32 %v3927, %v4053
        %v4078 = vadd.f32 %v3928, %v4056
        %v4079 = vadd.f32 %v3929, %v4061
        %v4080 = vadd.f32 %v3930, %v4064
        %v4081 = vadd.f32 %v3931, %v4069
        %v4082 = vadd.f32 %v3932, %v4072
        %v4083 = vld [vmem:[%s670 + $0x1] sm:$0xff]
        %v4084 = vld [vmem:[%s670 + $0x11] sm:$0xff]
        %v4085 = vld [vmem:[%s670 + $0x21] sm:$0xff]
        %v4086 = vld [vmem:[%s670 + $0x31] sm:$0xff]
        %v4087 = vld [vmem:[%s670 + $0x41] sm:$0xff]
        %v4088 = vld [vmem:[%s670 + $0x51] sm:$0xff]
        %v4089 = vld [vmem:[%s670 + $0x61] sm:$0xff]
        %v4090 = vld [vmem:[%s670 + $0x71] sm:$0xff]
        %v4091 = vpack.c.bf16 %v4084, %v4083
        %v4092 = vpack.c.bf16 %v4086, %v4085
        %v4093 = vpack.c.bf16 %v4088, %v4087
        %v4094 = vpack.c.bf16 %v4090, %v4089
        %s4095 = scalar_lea.vmem [#allocation11], 1408
        %v4096 = vld [vmem:[%s4095] sm:$0xf]
        %v4097 = vld [vmem:[%s4095 + $0x4] sm:$0xf]
        %v4098 = vld [vmem:[%s4095 + $0x8] sm:$0xf]
        %v4099 = vld [vmem:[%s4095 + $0xc] sm:$0xf]
        %v4100 = vld [vmem:[%s4095 + $0x10] sm:$0xf]
        %v4101 = vld [vmem:[%s4095 + $0x14] sm:$0xf]
        %v4102 = vld [vmem:[%s4095 + $0x18] sm:$0xf]
        %v4103 = vld [vmem:[%s4095 + $0x1c] sm:$0xf]
        %v4104 = vld [vmem:[%s4095 + $0x20] sm:$0xf]
        %v4105 = vld [vmem:[%s4095 + $0x24] sm:$0xf]
        %v4106 = vld [vmem:[%s4095 + $0x28] sm:$0xf]
        %v4107 = vld [vmem:[%s4095 + $0x2c] sm:$0xf]
        %v4108 = vld [vmem:[%s4095 + $0x30] sm:$0xf]
        %v4109 = vld [vmem:[%s4095 + $0x34] sm:$0xf]
        %v4110 = vld [vmem:[%s4095 + $0x38] sm:$0xf]
        %v4111 = vld [vmem:[%s4095 + $0x3c] sm:$0xf]
        %v4128 = vunpack.c.l.b16 %v4096
        %v4129 = vunpack.c.l.b16 %v4097
        %v4130 = vunpack.c.l.b16 %v4098
        %v4131 = vunpack.c.l.b16 %v4099
        %v4132 = vunpack.c.l.b16 %v4100
        %v4133 = vunpack.c.l.b16 %v4101
        %v4134 = vunpack.c.l.b16 %v4102
        %v4135 = vunpack.c.l.b16 %v4103
        %v4136 = vunpack.c.l.b16 %v4104
        %v4137 = vunpack.c.l.b16 %v4105
        %v4138 = vunpack.c.l.b16 %v4106
        %v4139 = vunpack.c.l.b16 %v4107
        %v4140 = vunpack.c.l.b16 %v4108
        %v4141 = vunpack.c.l.b16 %v4109
        %v4142 = vunpack.c.l.b16 %v4110
        %v4143 = vunpack.c.l.b16 %v4111
        %v4144 = vpack.c.b16 %v4129, %v4128
        %v4145 = vpack.c.b16 %v4131, %v4130
        %v4146 = vpack.c.b16 %v4133, %v4132
        %v4147 = vpack.c.b16 %v4135, %v4134
        %v4148 = vpack.c.b16 %v4137, %v4136
        %v4149 = vpack.c.b16 %v4139, %v4138
        %v4150 = vpack.c.b16 %v4141, %v4140
        %v4151 = vpack.c.b16 %v4143, %v4142
        %4160 = vmatprep.subr.bf16.mxu0 0
        %4161 = vmatpush1.bf16.msra.mxu0 %v4151
        %4162 = vmatprep.subr.bf16.mxu0 0
        %4163 = vmatpush1.bf16.msra.mxu0 %v4150
        %4164 = vmatprep.subr.bf16.mxu0 0
        %4165 = vmatpush1.bf16.msra.mxu0 %v4149
        %4166 = vmatprep.subr.bf16.mxu0 0
        %4167 = vmatpush1.bf16.msra.mxu0 %v4148
        %4168 = vmatprep.subr.bf16.mxu0 0
        %4169 = vmatpush1.bf16.msra.mxu0 %v4147
        %4170 = vmatprep.subr.bf16.mxu0 0
        %4171 = vmatpush1.bf16.msra.mxu0 %v4146
        %4172 = vmatprep.subr.bf16.mxu0 0
        %4173 = vmatpush1.bf16.msra.mxu0 %v4145
        %4174 = vmatprep.subr.bf16.mxu0 0
        %4175 = vmatpush1.bf16.msra.mxu0 %v4144
        %4176 = vmatprep.subr.bf16.mxu0 0
        %4177 = vmatpush2.bf16.msra.mxu0 0
        %4178 = vmatprep.subr.bf16.mxu0 0
        %4179 = vmatpush2.bf16.msra.mxu0 0
        %4180 = vmatprep.subr.bf16.mxu0 0
        %4181 = vmatpush2.bf16.msra.mxu0 0
        %4182 = vmatprep.subr.bf16.mxu0 0
        %4183 = vmatpush2.bf16.msra.mxu0 0
        %4184 = vmatprep.subr.bf16.mxu0 0
        %4185 = vmatpush2.bf16.msra.mxu0 0
        %4186 = vmatprep.subr.bf16.mxu0 0
        %4187 = vmatpush2.bf16.msra.mxu0 0
        %4188 = vmatprep.subr.bf16.mxu0 0
        %4189 = vmatpush2.bf16.msra.mxu0 0
        %4190 = vmatprep.subr.bf16.mxu0 0
        %4191 = vmatpush2.bf16.msra.mxu0 0
        %4192 = vmatprep.mubr.bf16.mxu0 0
        %4193 = vmatmul.mubr.bf16.gmra.mxu0 %v4091
        %v4194 = vpop.f32.mrf.mxu0
        %v4195 = vadd.f32 0.0, %v4194
        %v4196 = vpop.f32.mrf.mxu0
        %v4197 = vpop.f32.mrf.mxu0
        %v4198 = vadd.f32 0.0, %v4197
        %v4199 = vpop.f32.mrf.mxu0
        %4200 = vmatprep.mubr.bf16.mxu0 0
        %4201 = vmatmul.mubr.bf16.gmra.mxu0 %v4092
        %v4202 = vpop.f32.mrf.mxu0
        %v4203 = vadd.f32 0.0, %v4202
        %v4204 = vpop.f32.mrf.mxu0
        %v4205 = vpop.f32.mrf.mxu0
        %v4206 = vadd.f32 0.0, %v4205
        %v4207 = vpop.f32.mrf.mxu0
        %4208 = vmatprep.mubr.bf16.mxu0 0
        %4209 = vmatmul.mubr.bf16.gmra.mxu0 %v4093
        %v4210 = vpop.f32.mrf.mxu0
        %v4211 = vadd.f32 0.0, %v4210
        %v4212 = vpop.f32.mrf.mxu0
        %v4213 = vpop.f32.mrf.mxu0
        %v4214 = vadd.f32 0.0, %v4213
        %v4215 = vpop.f32.mrf.mxu0
        %4216 = vmatprep.mubr.bf16.mxu0 0
        %4217 = vmatmul.mubr.bf16.gmra.mxu0 %v4094
        %v4218 = vpop.f32.mrf.mxu0
        %v4219 = vadd.f32 0.0, %v4218
        %v4220 = vpop.f32.mrf.mxu0
        %v4221 = vpop.f32.mrf.mxu0
        %v4222 = vadd.f32 0.0, %v4221
        %v4223 = vpop.f32.mrf.mxu0
        %4224 = vdwg.mxu0
        %v4225 = vadd.f32 %v4075, %v4195
        %v4226 = vadd.f32 %v4076, %v4198
        %v4227 = vadd.f32 %v4077, %v4203
        %v4228 = vadd.f32 %v4078, %v4206
        %v4229 = vadd.f32 %v4079, %v4211
        %v4230 = vadd.f32 %v4080, %v4214
        %v4231 = vadd.f32 %v4081, %v4219
        %v4232 = vadd.f32 %v4082, %v4222
        %v4233 = vld [vmem:[%s670 + $0x2] sm:$0xff]
        %v4234 = vld [vmem:[%s670 + $0x12] sm:$0xff]
        %v4235 = vld [vmem:[%s670 + $0x22] sm:$0xff]
        %v4236 = vld [vmem:[%s670 + $0x32] sm:$0xff]
        %v4237 = vld [vmem:[%s670 + $0x42] sm:$0xff]
        %v4238 = vld [vmem:[%s670 + $0x52] sm:$0xff]
        %v4239 = vld [vmem:[%s670 + $0x62] sm:$0xff]
        %v4240 = vld [vmem:[%s670 + $0x72] sm:$0xff]
        %v4241 = vpack.c.bf16 %v4234, %v4233
        %v4242 = vpack.c.bf16 %v4236, %v4235
        %v4243 = vpack.c.bf16 %v4238, %v4237
        %v4244 = vpack.c.bf16 %v4240, %v4239
        %s4245 = scalar_lea.vmem [#allocation11], 1472
        %v4246 = vld [vmem:[%s4245] sm:$0xf]
        %v4247 = vld [vmem:[%s4245 + $0x4] sm:$0xf]
        %v4248 = vld [vmem:[%s4245 + $0x8] sm:$0xf]
        %v4249 = vld [vmem:[%s4245 + $0xc] sm:$0xf]
        %v4250 = vld [vmem:[%s4245 + $0x10] sm:$0xf]
        %v4251 = vld [vmem:[%s4245 + $0x14] sm:$0xf]
        %v4252 = vld [vmem:[%s4245 + $0x18] sm:$0xf]
        %v4253 = vld [vmem:[%s4245 + $0x1c] sm:$0xf]
        %v4254 = vld [vmem:[%s4245 + $0x20] sm:$0xf]
        %v4255 = vld [vmem:[%s4245 + $0x24] sm:$0xf]
        %v4256 = vld [vmem:[%s4245 + $0x28] sm:$0xf]
        %v4257 = vld [vmem:[%s4245 + $0x2c] sm:$0xf]
        %v4258 = vld [vmem:[%s4245 + $0x30] sm:$0xf]
        %v4259 = vld [vmem:[%s4245 + $0x34] sm:$0xf]
        %v4260 = vld [vmem:[%s4245 + $0x38] sm:$0xf]
        %v4261 = vld [vmem:[%s4245 + $0x3c] sm:$0xf]
        %v4278 = vunpack.c.l.b16 %v4246
        %v4279 = vunpack.c.l.b16 %v4247
        %v4280 = vunpack.c.l.b16 %v4248
        %v4281 = vunpack.c.l.b16 %v4249
        %v4282 = vunpack.c.l.b16 %v4250
        %v4283 = vunpack.c.l.b16 %v4251
        %v4284 = vunpack.c.l.b16 %v4252
        %v4285 = vunpack.c.l.b16 %v4253
        %v4286 = vunpack.c.l.b16 %v4254
        %v4287 = vunpack.c.l.b16 %v4255
        %v4288 = vunpack.c.l.b16 %v4256
        %v4289 = vunpack.c.l.b16 %v4257
        %v4290 = vunpack.c.l.b16 %v4258
        %v4291 = vunpack.c.l.b16 %v4259
        %v4292 = vunpack.c.l.b16 %v4260
        %v4293 = vunpack.c.l.b16 %v4261
        %v4294 = vpack.c.b16 %v4279, %v4278
        %v4295 = vpack.c.b16 %v4281, %v4280
        %v4296 = vpack.c.b16 %v4283, %v4282
        %v4297 = vpack.c.b16 %v4285, %v4284
        %v4298 = vpack.c.b16 %v4287, %v4286
        %v4299 = vpack.c.b16 %v4289, %v4288
        %v4300 = vpack.c.b16 %v4291, %v4290
        %v4301 = vpack.c.b16 %v4293, %v4292
        %4310 = vmatprep.subr.bf16.mxu0 0
        %4311 = vmatpush1.bf16.msra.mxu0 %v4301
        %4312 = vmatprep.subr.bf16.mxu0 0
        %4313 = vmatpush1.bf16.msra.mxu0 %v4300
        %4314 = vmatprep.subr.bf16.mxu0 0
        %4315 = vmatpush1.bf16.msra.mxu0 %v4299
        %4316 = vmatprep.subr.bf16.mxu0 0
        %4317 = vmatpush1.bf16.msra.mxu0 %v4298
        %4318 = vmatprep.subr.bf16.mxu0 0
        %4319 = vmatpush1.bf16.msra.mxu0 %v4297
        %4320 = vmatprep.subr.bf16.mxu0 0
        %4321 = vmatpush1.bf16.msra.mxu0 %v4296
        %4322 = vmatprep.subr.bf16.mxu0 0
        %4323 = vmatpush1.bf16.msra.mxu0 %v4295
        %4324 = vmatprep.subr.bf16.mxu0 0
        %4325 = vmatpush1.bf16.msra.mxu0 %v4294
        %4326 = vmatprep.subr.bf16.mxu0 0
        %4327 = vmatpush2.bf16.msra.mxu0 0
        %4328 = vmatprep.subr.bf16.mxu0 0
        %4329 = vmatpush2.bf16.msra.mxu0 0
        %4330 = vmatprep.subr.bf16.mxu0 0
        %4331 = vmatpush2.bf16.msra.mxu0 0
        %4332 = vmatprep.subr.bf16.mxu0 0
        %4333 = vmatpush2.bf16.msra.mxu0 0
        %4334 = vmatprep.subr.bf16.mxu0 0
        %4335 = vmatpush2.bf16.msra.mxu0 0
        %4336 = vmatprep.subr.bf16.mxu0 0
        %4337 = vmatpush2.bf16.msra.mxu0 0
        %4338 = vmatprep.subr.bf16.mxu0 0
        %4339 = vmatpush2.bf16.msra.mxu0 0
        %4340 = vmatprep.subr.bf16.mxu0 0
        %4341 = vmatpush2.bf16.msra.mxu0 0
        %4342 = vmatprep.mubr.bf16.mxu0 0
        %4343 = vmatmul.mubr.bf16.gmra.mxu0 %v4241
        %v4344 = vpop.f32.mrf.mxu0
        %v4345 = vadd.f32 0.0, %v4344
        %v4346 = vpop.f32.mrf.mxu0
        %v4347 = vpop.f32.mrf.mxu0
        %v4348 = vadd.f32 0.0, %v4347
        %v4349 = vpop.f32.mrf.mxu0
        %4350 = vmatprep.mubr.bf16.mxu0 0
        %4351 = vmatmul.mubr.bf16.gmra.mxu0 %v4242
        %v4352 = vpop.f32.mrf.mxu0
        %v4353 = vadd.f32 0.0, %v4352
        %v4354 = vpop.f32.mrf.mxu0
        %v4355 = vpop.f32.mrf.mxu0
        %v4356 = vadd.f32 0.0, %v4355
        %v4357 = vpop.f32.mrf.mxu0
        %4358 = vmatprep.mubr.bf16.mxu0 0
        %4359 = vmatmul.mubr.bf16.gmra.mxu0 %v4243
        %v4360 = vpop.f32.mrf.mxu0
        %v4361 = vadd.f32 0.0, %v4360
        %v4362 = vpop.f32.mrf.mxu0
        %v4363 = vpop.f32.mrf.mxu0
        %v4364 = vadd.f32 0.0, %v4363
        %v4365 = vpop.f32.mrf.mxu0
        %4366 = vmatprep.mubr.bf16.mxu0 0
        %4367 = vmatmul.mubr.bf16.gmra.mxu0 %v4244
        %v4368 = vpop.f32.mrf.mxu0
        %v4369 = vadd.f32 0.0, %v4368
        %v4370 = vpop.f32.mrf.mxu0
        %v4371 = vpop.f32.mrf.mxu0
        %v4372 = vadd.f32 0.0, %v4371
        %v4373 = vpop.f32.mrf.mxu0
        %4374 = vdwg.mxu0
        %v4375 = vadd.f32 %v4225, %v4345
        %v4376 = vadd.f32 %v4226, %v4348
        %v4377 = vadd.f32 %v4227, %v4353
        %v4378 = vadd.f32 %v4228, %v4356
        %v4379 = vadd.f32 %v4229, %v4361
        %v4380 = vadd.f32 %v4230, %v4364
        %v4381 = vadd.f32 %v4231, %v4369
        %v4382 = vadd.f32 %v4232, %v4372
        %v4383 = vld [vmem:[%s1562] sm:$0xff]
        %v4384 = vld [vmem:[%s1562 + $0x10] sm:$0xff]
        %v4385 = vld [vmem:[%s1562 + $0x20] sm:$0xff]
        %v4386 = vld [vmem:[%s1562 + $0x30] sm:$0xff]
        %v4387 = vld [vmem:[%s1562 + $0x40] sm:$0xff]
        %v4388 = vld [vmem:[%s1562 + $0x50] sm:$0xff]
        %v4389 = vld [vmem:[%s1562 + $0x60] sm:$0xff]
        %v4390 = vld [vmem:[%s1562 + $0x70] sm:$0xff]
        %v4391 = vpack.c.bf16 %v4384, %v4383
        %v4392 = vpack.c.bf16 %v4386, %v4385
        %v4393 = vpack.c.bf16 %v4388, %v4387
        %v4394 = vpack.c.bf16 %v4390, %v4389
        %s4395 = scalar_lea.vmem [#allocation11], 1536
        %v4396 = vld [vmem:[%s4395] sm:$0xf]
        %v4397 = vld [vmem:[%s4395 + $0x4] sm:$0xf]
        %v4398 = vld [vmem:[%s4395 + $0x8] sm:$0xf]
        %v4399 = vld [vmem:[%s4395 + $0xc] sm:$0xf]
        %v4400 = vld [vmem:[%s4395 + $0x10] sm:$0xf]
        %v4401 = vld [vmem:[%s4395 + $0x14] sm:$0xf]
        %v4402 = vld [vmem:[%s4395 + $0x18] sm:$0xf]
        %v4403 = vld [vmem:[%s4395 + $0x1c] sm:$0xf]
        %v4404 = vld [vmem:[%s4395 + $0x20] sm:$0xf]
        %v4405 = vld [vmem:[%s4395 + $0x24] sm:$0xf]
        %v4406 = vld [vmem:[%s4395 + $0x28] sm:$0xf]
        %v4407 = vld [vmem:[%s4395 + $0x2c] sm:$0xf]
        %v4408 = vld [vmem:[%s4395 + $0x30] sm:$0xf]
        %v4409 = vld [vmem:[%s4395 + $0x34] sm:$0xf]
        %v4410 = vld [vmem:[%s4395 + $0x38] sm:$0xf]
        %v4411 = vld [vmem:[%s4395 + $0x3c] sm:$0xf]
        %v4428 = vunpack.c.l.b16 %v4396
        %v4429 = vunpack.c.l.b16 %v4397
        %v4430 = vunpack.c.l.b16 %v4398
        %v4431 = vunpack.c.l.b16 %v4399
        %v4432 = vunpack.c.l.b16 %v4400
        %v4433 = vunpack.c.l.b16 %v4401
        %v4434 = vunpack.c.l.b16 %v4402
        %v4435 = vunpack.c.l.b16 %v4403
        %v4436 = vunpack.c.l.b16 %v4404
        %v4437 = vunpack.c.l.b16 %v4405
        %v4438 = vunpack.c.l.b16 %v4406
        %v4439 = vunpack.c.l.b16 %v4407
        %v4440 = vunpack.c.l.b16 %v4408
        %v4441 = vunpack.c.l.b16 %v4409
        %v4442 = vunpack.c.l.b16 %v4410
        %v4443 = vunpack.c.l.b16 %v4411
        %v4444 = vpack.c.b16 %v4429, %v4428
        %v4445 = vpack.c.b16 %v4431, %v4430
        %v4446 = vpack.c.b16 %v4433, %v4432
        %v4447 = vpack.c.b16 %v4435, %v4434
        %v4448 = vpack.c.b16 %v4437, %v4436
        %v4449 = vpack.c.b16 %v4439, %v4438
        %v4450 = vpack.c.b16 %v4441, %v4440
        %v4451 = vpack.c.b16 %v4443, %v4442
        %4460 = vmatprep.subr.bf16.mxu0 0
        %4461 = vmatpush1.bf16.msra.mxu0 %v4451
        %4462 = vmatprep.subr.bf16.mxu0 0
        %4463 = vmatpush1.bf16.msra.mxu0 %v4450
        %4464 = vmatprep.subr.bf16.mxu0 0
        %4465 = vmatpush1.bf16.msra.mxu0 %v4449
        %4466 = vmatprep.subr.bf16.mxu0 0
        %4467 = vmatpush1.bf16.msra.mxu0 %v4448
        %4468 = vmatprep.subr.bf16.mxu0 0
        %4469 = vmatpush1.bf16.msra.mxu0 %v4447
        %4470 = vmatprep.subr.bf16.mxu0 0
        %4471 = vmatpush1.bf16.msra.mxu0 %v4446
        %4472 = vmatprep.subr.bf16.mxu0 0
        %4473 = vmatpush1.bf16.msra.mxu0 %v4445
        %4474 = vmatprep.subr.bf16.mxu0 0
        %4475 = vmatpush1.bf16.msra.mxu0 %v4444
        %4476 = vmatprep.subr.bf16.mxu0 0
        %4477 = vmatpush2.bf16.msra.mxu0 0
        %4478 = vmatprep.subr.bf16.mxu0 0
        %4479 = vmatpush2.bf16.msra.mxu0 0
        %4480 = vmatprep.subr.bf16.mxu0 0
        %4481 = vmatpush2.bf16.msra.mxu0 0
        %4482 = vmatprep.subr.bf16.mxu0 0
        %4483 = vmatpush2.bf16.msra.mxu0 0
        %4484 = vmatprep.subr.bf16.mxu0 0
        %4485 = vmatpush2.bf16.msra.mxu0 0
        %4486 = vmatprep.subr.bf16.mxu0 0
        %4487 = vmatpush2.bf16.msra.mxu0 0
        %4488 = vmatprep.subr.bf16.mxu0 0
        %4489 = vmatpush2.bf16.msra.mxu0 0
        %4490 = vmatprep.subr.bf16.mxu0 0
        %4491 = vmatpush2.bf16.msra.mxu0 0
        %4492 = vmatprep.mubr.bf16.mxu0 0
        %4493 = vmatmul.mubr.bf16.gmra.mxu0 %v4391
        %v4494 = vpop.f32.mrf.mxu0
        %v4495 = vadd.f32 0.0, %v4494
        %v4496 = vpop.f32.mrf.mxu0
        %v4497 = vpop.f32.mrf.mxu0
        %v4498 = vadd.f32 0.0, %v4497
        %v4499 = vpop.f32.mrf.mxu0
        %4500 = vmatprep.mubr.bf16.mxu0 0
        %4501 = vmatmul.mubr.bf16.gmra.mxu0 %v4392
        %v4502 = vpop.f32.mrf.mxu0
        %v4503 = vadd.f32 0.0, %v4502
        %v4504 = vpop.f32.mrf.mxu0
        %v4505 = vpop.f32.mrf.mxu0
        %v4506 = vadd.f32 0.0, %v4505
        %v4507 = vpop.f32.mrf.mxu0
        %4508 = vmatprep.mubr.bf16.mxu0 0
        %4509 = vmatmul.mubr.bf16.gmra.mxu0 %v4393
        %v4510 = vpop.f32.mrf.mxu0
        %v4511 = vadd.f32 0.0, %v4510
        %v4512 = vpop.f32.mrf.mxu0
        %v4513 = vpop.f32.mrf.mxu0
        %v4514 = vadd.f32 0.0, %v4513
        %v4515 = vpop.f32.mrf.mxu0
        %4516 = vmatprep.mubr.bf16.mxu0 0
        %4517 = vmatmul.mubr.bf16.gmra.mxu0 %v4394
        %v4518 = vpop.f32.mrf.mxu0
        %v4519 = vadd.f32 0.0, %v4518
        %v4520 = vpop.f32.mrf.mxu0
        %v4521 = vpop.f32.mrf.mxu0
        %v4522 = vadd.f32 0.0, %v4521
        %v4523 = vpop.f32.mrf.mxu0
        %4524 = vdwg.mxu0
        %v4525 = vadd.f32 %v4375, %v4495
        %v4526 = vadd.f32 %v4376, %v4498
        %v4527 = vadd.f32 %v4377, %v4503
        %v4528 = vadd.f32 %v4378, %v4506
        %v4529 = vadd.f32 %v4379, %v4511
        %v4530 = vadd.f32 %v4380, %v4514
        %v4531 = vadd.f32 %v4381, %v4519
        %v4532 = vadd.f32 %v4382, %v4522
        %v4533 = vld [vmem:[%s1562 + $0x1] sm:$0xff]
        %v4534 = vld [vmem:[%s1562 + $0x11] sm:$0xff]
        %v4535 = vld [vmem:[%s1562 + $0x21] sm:$0xff]
        %v4536 = vld [vmem:[%s1562 + $0x31] sm:$0xff]
        %v4537 = vld [vmem:[%s1562 + $0x41] sm:$0xff]
        %v4538 = vld [vmem:[%s1562 + $0x51] sm:$0xff]
        %v4539 = vld [vmem:[%s1562 + $0x61] sm:$0xff]
        %v4540 = vld [vmem:[%s1562 + $0x71] sm:$0xff]
        %v4541 = vpack.c.bf16 %v4534, %v4533
        %v4542 = vpack.c.bf16 %v4536, %v4535
        %v4543 = vpack.c.bf16 %v4538, %v4537
        %v4544 = vpack.c.bf16 %v4540, %v4539
        %s4545 = scalar_lea.vmem [#allocation11], 1600
        %v4546 = vld [vmem:[%s4545] sm:$0xf]
        %v4547 = vld [vmem:[%s4545 + $0x4] sm:$0xf]
        %v4548 = vld [vmem:[%s4545 + $0x8] sm:$0xf]
        %v4549 = vld [vmem:[%s4545 + $0xc] sm:$0xf]
        %v4550 = vld [vmem:[%s4545 + $0x10] sm:$0xf]
        %v4551 = vld [vmem:[%s4545 + $0x14] sm:$0xf]
        %v4552 = vld [vmem:[%s4545 + $0x18] sm:$0xf]
        %v4553 = vld [vmem:[%s4545 + $0x1c] sm:$0xf]
        %v4554 = vld [vmem:[%s4545 + $0x20] sm:$0xf]
        %v4555 = vld [vmem:[%s4545 + $0x24] sm:$0xf]
        %v4556 = vld [vmem:[%s4545 + $0x28] sm:$0xf]
        %v4557 = vld [vmem:[%s4545 + $0x2c] sm:$0xf]
        %v4558 = vld [vmem:[%s4545 + $0x30] sm:$0xf]
        %v4559 = vld [vmem:[%s4545 + $0x34] sm:$0xf]
        %v4560 = vld [vmem:[%s4545 + $0x38] sm:$0xf]
        %v4561 = vld [vmem:[%s4545 + $0x3c] sm:$0xf]
        %v4578 = vunpack.c.l.b16 %v4546
        %v4579 = vunpack.c.l.b16 %v4547
        %v4580 = vunpack.c.l.b16 %v4548
        %v4581 = vunpack.c.l.b16 %v4549
        %v4582 = vunpack.c.l.b16 %v4550
        %v4583 = vunpack.c.l.b16 %v4551
        %v4584 = vunpack.c.l.b16 %v4552
        %v4585 = vunpack.c.l.b16 %v4553
        %v4586 = vunpack.c.l.b16 %v4554
        %v4587 = vunpack.c.l.b16 %v4555
        %v4588 = vunpack.c.l.b16 %v4556
        %v4589 = vunpack.c.l.b16 %v4557
        %v4590 = vunpack.c.l.b16 %v4558
        %v4591 = vunpack.c.l.b16 %v4559
        %v4592 = vunpack.c.l.b16 %v4560
        %v4593 = vunpack.c.l.b16 %v4561
        %v4594 = vpack.c.b16 %v4579, %v4578
        %v4595 = vpack.c.b16 %v4581, %v4580
        %v4596 = vpack.c.b16 %v4583, %v4582
        %v4597 = vpack.c.b16 %v4585, %v4584
        %v4598 = vpack.c.b16 %v4587, %v4586
        %v4599 = vpack.c.b16 %v4589, %v4588
        %v4600 = vpack.c.b16 %v4591, %v4590
        %v4601 = vpack.c.b16 %v4593, %v4592
        %4610 = vmatprep.subr.bf16.mxu0 0
        %4611 = vmatpush1.bf16.msra.mxu0 %v4601
        %4612 = vmatprep.subr.bf16.mxu0 0
        %4613 = vmatpush1.bf16.msra.mxu0 %v4600
        %4614 = vmatprep.subr.bf16.mxu0 0
        %4615 = vmatpush1.bf16.msra.mxu0 %v4599
        %4616 = vmatprep.subr.bf16.mxu0 0
        %4617 = vmatpush1.bf16.msra.mxu0 %v4598
        %4618 = vmatprep.subr.bf16.mxu0 0
        %4619 = vmatpush1.bf16.msra.mxu0 %v4597
        %4620 = vmatprep.subr.bf16.mxu0 0
        %4621 = vmatpush1.bf16.msra.mxu0 %v4596
        %4622 = vmatprep.subr.bf16.mxu0 0
        %4623 = vmatpush1.bf16.msra.mxu0 %v4595
        %4624 = vmatprep.subr.bf16.mxu0 0
        %4625 = vmatpush1.bf16.msra.mxu0 %v4594
        %4626 = vmatprep.subr.bf16.mxu0 0
        %4627 = vmatpush2.bf16.msra.mxu0 0
        %4628 = vmatprep.subr.bf16.mxu0 0
        %4629 = vmatpush2.bf16.msra.mxu0 0
        %4630 = vmatprep.subr.bf16.mxu0 0
        %4631 = vmatpush2.bf16.msra.mxu0 0
        %4632 = vmatprep.subr.bf16.mxu0 0
        %4633 = vmatpush2.bf16.msra.mxu0 0
        %4634 = vmatprep.subr.bf16.mxu0 0
        %4635 = vmatpush2.bf16.msra.mxu0 0
        %4636 = vmatprep.subr.bf16.mxu0 0
        %4637 = vmatpush2.bf16.msra.mxu0 0
        %4638 = vmatprep.subr.bf16.mxu0 0
        %4639 = vmatpush2.bf16.msra.mxu0 0
        %4640 = vmatprep.subr.bf16.mxu0 0
        %4641 = vmatpush2.bf16.msra.mxu0 0
        %4642 = vmatprep.mubr.bf16.mxu0 0
        %4643 = vmatmul.mubr.bf16.gmra.mxu0 %v4541
        %v4644 = vpop.f32.mrf.mxu0
        %v4645 = vadd.f32 0.0, %v4644
        %v4646 = vpop.f32.mrf.mxu0
        %v4647 = vpop.f32.mrf.mxu0
        %v4648 = vadd.f32 0.0, %v4647
        %v4649 = vpop.f32.mrf.mxu0
        %4650 = vmatprep.mubr.bf16.mxu0 0
        %4651 = vmatmul.mubr.bf16.gmra.mxu0 %v4542
        %v4652 = vpop.f32.mrf.mxu0
        %v4653 = vadd.f32 0.0, %v4652
        %v4654 = vpop.f32.mrf.mxu0
        %v4655 = vpop.f32.mrf.mxu0
        %v4656 = vadd.f32 0.0, %v4655
        %v4657 = vpop.f32.mrf.mxu0
        %4658 = vmatprep.mubr.bf16.mxu0 0
        %4659 = vmatmul.mubr.bf16.gmra.mxu0 %v4543
        %v4660 = vpop.f32.mrf.mxu0
        %v4661 = vadd.f32 0.0, %v4660
        %v4662 = vpop.f32.mrf.mxu0
        %v4663 = vpop.f32.mrf.mxu0
        %v4664 = vadd.f32 0.0, %v4663
        %v4665 = vpop.f32.mrf.mxu0
        %4666 = vmatprep.mubr.bf16.mxu0 0
        %4667 = vmatmul.mubr.bf16.gmra.mxu0 %v4544
        %v4668 = vpop.f32.mrf.mxu0
        %v4669 = vadd.f32 0.0, %v4668
        %v4670 = vpop.f32.mrf.mxu0
        %v4671 = vpop.f32.mrf.mxu0
        %v4672 = vadd.f32 0.0, %v4671
        %v4673 = vpop.f32.mrf.mxu0
        %4674 = vdwg.mxu0
        %v4675 = vadd.f32 %v4525, %v4645
        %v4676 = vadd.f32 %v4526, %v4648
        %v4677 = vadd.f32 %v4527, %v4653
        %v4678 = vadd.f32 %v4528, %v4656
        %v4679 = vadd.f32 %v4529, %v4661
        %v4680 = vadd.f32 %v4530, %v4664
        %v4681 = vadd.f32 %v4531, %v4669
        %v4682 = vadd.f32 %v4532, %v4672
        %v4683 = vld [vmem:[%s1562 + $0x2] sm:$0xff]
        %v4684 = vld [vmem:[%s1562 + $0x12] sm:$0xff]
        %v4685 = vld [vmem:[%s1562 + $0x22] sm:$0xff]
        %v4686 = vld [vmem:[%s1562 + $0x32] sm:$0xff]
        %v4687 = vld [vmem:[%s1562 + $0x42] sm:$0xff]
        %v4688 = vld [vmem:[%s1562 + $0x52] sm:$0xff]
        %v4689 = vld [vmem:[%s1562 + $0x62] sm:$0xff]
        %v4690 = vld [vmem:[%s1562 + $0x72] sm:$0xff]
        %v4691 = vpack.c.bf16 %v4684, %v4683
        %v4692 = vpack.c.bf16 %v4686, %v4685
        %v4693 = vpack.c.bf16 %v4688, %v4687
        %v4694 = vpack.c.bf16 %v4690, %v4689
        %s4695 = scalar_lea.vmem [#allocation11], 1664
        %v4696 = vld [vmem:[%s4695] sm:$0xf]
        %v4697 = vld [vmem:[%s4695 + $0x4] sm:$0xf]
        %v4698 = vld [vmem:[%s4695 + $0x8] sm:$0xf]
        %v4699 = vld [vmem:[%s4695 + $0xc] sm:$0xf]
        %v4700 = vld [vmem:[%s4695 + $0x10] sm:$0xf]
        %v4701 = vld [vmem:[%s4695 + $0x14] sm:$0xf]
        %v4702 = vld [vmem:[%s4695 + $0x18] sm:$0xf]
        %v4703 = vld [vmem:[%s4695 + $0x1c] sm:$0xf]
        %v4704 = vld [vmem:[%s4695 + $0x20] sm:$0xf]
        %v4705 = vld [vmem:[%s4695 + $0x24] sm:$0xf]
        %v4706 = vld [vmem:[%s4695 + $0x28] sm:$0xf]
        %v4707 = vld [vmem:[%s4695 + $0x2c] sm:$0xf]
        %v4708 = vld [vmem:[%s4695 + $0x30] sm:$0xf]
        %v4709 = vld [vmem:[%s4695 + $0x34] sm:$0xf]
        %v4710 = vld [vmem:[%s4695 + $0x38] sm:$0xf]
        %v4711 = vld [vmem:[%s4695 + $0x3c] sm:$0xf]
        %v4728 = vunpack.c.l.b16 %v4696
        %v4729 = vunpack.c.l.b16 %v4697
        %v4730 = vunpack.c.l.b16 %v4698
        %v4731 = vunpack.c.l.b16 %v4699
        %v4732 = vunpack.c.l.b16 %v4700
        %v4733 = vunpack.c.l.b16 %v4701
        %v4734 = vunpack.c.l.b16 %v4702
        %v4735 = vunpack.c.l.b16 %v4703
        %v4736 = vunpack.c.l.b16 %v4704
        %v4737 = vunpack.c.l.b16 %v4705
        %v4738 = vunpack.c.l.b16 %v4706
        %v4739 = vunpack.c.l.b16 %v4707
        %v4740 = vunpack.c.l.b16 %v4708
        %v4741 = vunpack.c.l.b16 %v4709
        %v4742 = vunpack.c.l.b16 %v4710
        %v4743 = vunpack.c.l.b16 %v4711
        %v4744 = vpack.c.b16 %v4729, %v4728
        %v4745 = vpack.c.b16 %v4731, %v4730
        %v4746 = vpack.c.b16 %v4733, %v4732
        %v4747 = vpack.c.b16 %v4735, %v4734
        %v4748 = vpack.c.b16 %v4737, %v4736
        %v4749 = vpack.c.b16 %v4739, %v4738
        %v4750 = vpack.c.b16 %v4741, %v4740
        %v4751 = vpack.c.b16 %v4743, %v4742
        %4760 = vmatprep.subr.bf16.mxu0 0
        %4761 = vmatpush1.bf16.msra.mxu0 %v4751
        %4762 = vmatprep.subr.bf16.mxu0 0
        %4763 = vmatpush1.bf16.msra.mxu0 %v4750
        %4764 = vmatprep.subr.bf16.mxu0 0
        %4765 = vmatpush1.bf16.msra.mxu0 %v4749
        %4766 = vmatprep.subr.bf16.mxu0 0
        %4767 = vmatpush1.bf16.msra.mxu0 %v4748
        %4768 = vmatprep.subr.bf16.mxu0 0
        %4769 = vmatpush1.bf16.msra.mxu0 %v4747
        %4770 = vmatprep.subr.bf16.mxu0 0
        %4771 = vmatpush1.bf16.msra.mxu0 %v4746
        %4772 = vmatprep.subr.bf16.mxu0 0
        %4773 = vmatpush1.bf16.msra.mxu0 %v4745
        %4774 = vmatprep.subr.bf16.mxu0 0
        %4775 = vmatpush1.bf16.msra.mxu0 %v4744
        %4776 = vmatprep.subr.bf16.mxu0 0
        %4777 = vmatpush2.bf16.msra.mxu0 0
        %4778 = vmatprep.subr.bf16.mxu0 0
        %4779 = vmatpush2.bf16.msra.mxu0 0
        %4780 = vmatprep.subr.bf16.mxu0 0
        %4781 = vmatpush2.bf16.msra.mxu0 0
        %4782 = vmatprep.subr.bf16.mxu0 0
        %4783 = vmatpush2.bf16.msra.mxu0 0
        %4784 = vmatprep.subr.bf16.mxu0 0
        %4785 = vmatpush2.bf16.msra.mxu0 0
        %4786 = vmatprep.subr.bf16.mxu0 0
        %4787 = vmatpush2.bf16.msra.mxu0 0
        %4788 = vmatprep.subr.bf16.mxu0 0
        %4789 = vmatpush2.bf16.msra.mxu0 0
        %4790 = vmatprep.subr.bf16.mxu0 0
        %4791 = vmatpush2.bf16.msra.mxu0 0
        %4792 = vmatprep.mubr.bf16.mxu0 0
        %4793 = vmatmul.mubr.bf16.gmra.mxu0 %v4691
        %v4794 = vpop.f32.mrf.mxu0
        %v4795 = vadd.f32 0.0, %v4794
        %v4796 = vpop.f32.mrf.mxu0
        %v4797 = vpop.f32.mrf.mxu0
        %v4798 = vadd.f32 0.0, %v4797
        %v4799 = vpop.f32.mrf.mxu0
        %4800 = vmatprep.mubr.bf16.mxu0 0
        %4801 = vmatmul.mubr.bf16.gmra.mxu0 %v4692
        %v4802 = vpop.f32.mrf.mxu0
        %v4803 = vadd.f32 0.0, %v4802
        %v4804 = vpop.f32.mrf.mxu0
        %v4805 = vpop.f32.mrf.mxu0
        %v4806 = vadd.f32 0.0, %v4805
        %v4807 = vpop.f32.mrf.mxu0
        %4808 = vmatprep.mubr.bf16.mxu0 0
        %4809 = vmatmul.mubr.bf16.gmra.mxu0 %v4693
        %v4810 = vpop.f32.mrf.mxu0
        %v4811 = vadd.f32 0.0, %v4810
        %v4812 = vpop.f32.mrf.mxu0
        %v4813 = vpop.f32.mrf.mxu0
        %v4814 = vadd.f32 0.0, %v4813
        %v4815 = vpop.f32.mrf.mxu0
        %4816 = vmatprep.mubr.bf16.mxu0 0
        %4817 = vmatmul.mubr.bf16.gmra.mxu0 %v4694
        %v4818 = vpop.f32.mrf.mxu0
        %v4819 = vadd.f32 0.0, %v4818
        %v4820 = vpop.f32.mrf.mxu0
        %v4821 = vpop.f32.mrf.mxu0
        %v4822 = vadd.f32 0.0, %v4821
        %v4823 = vpop.f32.mrf.mxu0
        %4824 = vdwg.mxu0
        %v4825 = vadd.f32 %v4675, %v4795
        %v4826 = vadd.f32 %v4676, %v4798
        %v4827 = vadd.f32 %v4677, %v4803
        %v4828 = vadd.f32 %v4678, %v4806
        %v4829 = vadd.f32 %v4679, %v4811
        %v4830 = vadd.f32 %v4680, %v4814
        %v4831 = vadd.f32 %v4681, %v4819
        %v4832 = vadd.f32 %v4682, %v4822
        %s4833 = scalar_lea.vmem [#allocation8], 4
        %v4834 = vld [vmem:[%s4833] sm:$0x1]
        %v4836 = vlaneseq
        %v4837 = vshrl.u32 %v4836, 7
        %v4838 = vsub.s32 0, %v4837
        %v4839 = vrot.slane %v4834, %v4838
        %v4841 = vadd.f32 %v4825, %v4839
        %v4842 = vadd.f32 %v4826, %v4839
        %v4843 = vadd.f32 %v4827, %v4839
        %v4844 = vadd.f32 %v4828, %v4839
        %v4845 = vadd.f32 %v4829, %v4839
        %v4846 = vadd.f32 %v4830, %v4839
        %v4847 = vadd.f32 %v4831, %v4839
        %v4848 = vadd.f32 %v4832, %v4839
        %v4849 = vld [vmem:[%s298] sm:$0xff]
        %v4850 = vld [vmem:[%s298 + $0x8] sm:$0xff]
        %v4851 = vld [vmem:[%s298 + $0x10] sm:$0xff]
        %v4852 = vld [vmem:[%s298 + $0x18] sm:$0xff]
        %v4853 = vld [vmem:[%s298 + $0x20] sm:$0xff]
        %v4854 = vld [vmem:[%s298 + $0x28] sm:$0xff]
        %v4855 = vld [vmem:[%s298 + $0x30] sm:$0xff]
        %v4856 = vld [vmem:[%s298 + $0x38] sm:$0xff]
        %v4857 = vmul.f32 %v4841, 0.5
        %v4858 = vmul.f32 %v4842, 0.5
        %v4859 = vmul.f32 %v4843, 0.5
        %v4860 = vmul.f32 %v4844, 0.5
        %v4861 = vmul.f32 %v4845, 0.5
        %v4862 = vmul.f32 %v4846, 0.5
        %v4863 = vmul.f32 %v4847, 0.5
        %v4864 = vmul.f32 %v4848, 0.5
        %v4865 = vadd.f32 %v4849, %v4857
        %v4866 = vadd.f32 %v4850, %v4858
        %v4867 = vadd.f32 %v4851, %v4859
        %v4868 = vadd.f32 %v4852, %v4860
        %v4869 = vadd.f32 %v4853, %v4861
        %v4870 = vadd.f32 %v4854, %v4862
        %v4871 = vadd.f32 %v4855, %v4863
        %v4872 = vadd.f32 %v4856, %v4864
        %4873 = vst [vmem:[%s298] sm:$0xff] %v4865
        %4874 = vst [vmem:[%s298 + $0x8] sm:$0xff] %v4866
        %4875 = vst [vmem:[%s298 + $0x10] sm:$0xff] %v4867
        %4876 = vst [vmem:[%s298 + $0x18] sm:$0xff] %v4868
        %4877 = vst [vmem:[%s298 + $0x20] sm:$0xff] %v4869
        %4878 = vst [vmem:[%s298 + $0x28] sm:$0xff] %v4870
        %4879 = vst [vmem:[%s298 + $0x30] sm:$0xff] %v4871
        %4880 = vst [vmem:[%s298 + $0x38] sm:$0xff] %v4872
        %s4881 = sand.u32 %s143, 1
        %s4882 = scalar_lea.sflag [#allocation5], %s4881
        %s4883 = sand.u32 %s143, 1
        %s4884 = smul.addr %s4883, 64
        %s4885 = scalar_lea.vmem [#allocation13], %s4884
        // Predicated region
        $region61: #{tpu_custom_call.1} parent=39 // pred_check
          %p4886 = pneg %p153
        $region62: #{tpu_custom_call.1} parent=39 // pred_check_branch
          %4888 = sbr.rel (%p4886) target = $region64
        $region63: #{tpu_custom_call.1} parent=39 // pred_region
          %s4890 = ssub.s32 1024, 1024
          %4891 = vsyncadd %s4882, %s4890
          %s4892 = smul.addr %s25, 8
          %s4893 = smul.addr %s4892, 128
          %s4894 = scalar_lea.hbm %s5, %s4893
          %s4895 = sshll.u32 %s4885, 4
          %s4896 = int_to_ptr.vmem [resolvable:$true] %s4895
          %4901 = dma.vmem_to_hbm [thread:$0]  %s4896, 1024, %s4894, %s4882, 128, 128, 8
        $region64: #{tpu_custom_call.1} parent=39 // pred_fallthru
          _
      $region40: #{tpu_custom_call.1} parent=5 // pred_fallthru
        _
      %p4902 = scmp.le.s32.totalorder 2, %s20
      // Predicated region
      $region65: #{tpu_custom_call.1} parent=5 // pred_check
        %p4903 = pneg %p4902
      $region66: #{tpu_custom_call.1} parent=5 // pred_check_branch
        %4905 = sbr.rel (%p4903) target = $region68
      $region67: #{tpu_custom_call.1} parent=5 // pred_region
        %s4906 = ssub.s32 %s20, 2
        // Predicated region
        $region69: #{tpu_custom_call.1} parent=67 // pred_check
          %p4907 = pneg %p159
        $region70: #{tpu_custom_call.1} parent=67 // pred_check_branch
          %4909 = sbr.rel (%p4907) target = $region72
        $region71: #{tpu_custom_call.1} parent=67 // pred_region
          %s4910 = sand.u32 %s144, 1
          %s4911 = scalar_lea.sflag [#allocation5], %s4910
          %s4912 = sand.u32 %s144, 1
          %s4913 = smul.addr %s4912, 64
          %s4914 = scalar_lea.vmem [#allocation13], %s4913
          %4915 = dma.done %s4911, 1024
        $region72: #{tpu_custom_call.1} parent=67 // pred_fallthru
          _
      $region68: #{tpu_custom_call.1} parent=5 // pred_fallthru
        _
    $region6: #{tpu_custom_call.1} parent=1 // loop_footer
      %s24 = sadd.s32 1, %s20
    $region7: #{tpu_custom_call.1} parent=1 // loop_footer_branch
      %19 = sbr.rel target = $region3
    $region8: #{tpu_custom_call.1} parent=1 // loop_exit
      _
    %4916 = vsyncpa [#allocation4], 1
    %s4917 = scalar_lea.sflag [#allocation4], 1
    %4918 = vsyncpa %s4917, 1
    %4919 = vsyncpa [#allocation9], 1
    %4920 = vsyncpa [#allocation12], 1
    %4921 = vsyncpa [#allocation5], 1
    %s4922 = scalar_lea.sflag [#allocation5], 1
    %4923 = vsyncpa %s4922, 1
    %4924 = vsyncpa [#allocation6], 1
    %s4925 = scalar_lea.sflag [#allocation6], 1
    %4926 = vsyncpa %s4925, 1

</llo_original>
